<compile_context>
chip_gen: v7x
topology: tpu7x:2x2x1
jax: 0.10.0
libtpu: 0.0.40
codegen_flags: <defaults>
</compile_context>

<pallas_src>
import functools

import jax
import jax.numpy as jnp
from jax.experimental import pallas as pl
from jax.experimental.pallas import tpu as pltpu


# --------------------------------------------------------------------------
# BN folding + polyphase weight builders (run in the wrapper, plain XLA ops)
# --------------------------------------------------------------------------
def _fold_bn(gamma, beta, mean, var, eps=1e-5):
    scale = gamma / jnp.sqrt(var + eps)
    bias = beta - mean * scale
    return scale, bias


def _stage1_parity_weight(wf, a, b):
    """Polyphase sub-kernel of a 5x5 conv over the zero-inserted upsample.

    Output parity (a, b) of conv5x5(zero_insert(x), pad=2) equals a small conv
    on pad(x, 1) whose taps live inside the shared 3x3 window {0,1,2}^2 of the
    padded input.  Returns the (9*Cin, C) weight over that shared patch matrix
    (unused taps are zero).
    """
    _, _, Cin, C = wf.shape
    Wp = jnp.zeros((9 * Cin, C), wf.dtype)
    us = range(3) if a == 0 else range(1, 3)
    vs = range(3) if b == 0 else range(1, 3)
    for u in us:
        dy = 2 * u if a == 0 else 2 * u - 1
        for v in vs:
            dx = 2 * v if b == 0 else 2 * v - 1
            r = (u * 3 + v) * Cin
            Wp = Wp.at[r:r + Cin, :].set(wf[dy, dx])
    return Wp


def _build_stage1_weights(w1f, wscf):
    """(9*Cin, 8*C): conv1 parities (ee,eo,oe,oo) then shortcut parities."""
    cols = [_stage1_parity_weight(w1f, a, b) for a in range(2) for b in range(2)]
    cols += [_stage1_parity_weight(wscf, a, b) for a in range(2) for b in range(2)]
    return jnp.concatenate(cols, axis=1)


def _build_stage2_weights(w2f):
    """(16*C, 4*C): the 3x3 conv expressed in the parity domain.

    The shared stage-2 patch matrix B is built (in the kernel) from 16 slices of
    the zero-padded out1 parity planes: source plane q = 2*ar + ac, row-offset
    index rr, col-offset index cc -> column block (q*4 + rr*2 + cc).  For source
    row-parity ar==0 the two padded row offsets are (1, 2); for ar==1 they are
    (0, 1) (same for columns).  Each final-output parity (a, b) gets one
    (16*C, C) weight column block.
    """
    _, _, C, _ = w2f.shape
    cols = []
    for a in range(2):
        for b in range(2):
            Wp = jnp.zeros((16 * C, C), w2f.dtype)
            for ey in range(3):
                ar = (a + ey - 1) % 2
                ro = 1 + (a + ey - 1 - ar) // 2          # padded row offset
                rr = ro - 1 if ar == 0 else ro
                for ex in range(3):
                    ac = (b + ex - 1) % 2
                    co = 1 + (b + ex - 1 - ac) // 2      # padded col offset
                    cc = co - 1 if ac == 0 else co
                    blk = ((2 * ar + ac) * 4 + rr * 2 + cc) * C
                    Wp = Wp.at[blk:blk + C, :].add(w2f[ey, ex])
            cols.append(Wp)
    return jnp.concatenate(cols, axis=1)


# --------------------------------------------------------------------------
# Fused Pallas kernel (one grid step per batch element)
# --------------------------------------------------------------------------
def _upproj_fused_kernel(xpad_ref, w1_ref, b1_ref, w2_ref, b2_ref, o_ref,
                         pad_scratch, *, H, W, Cin, C):
    HW = H * W

    # ---- Stage 1: conv1 (5x5) + shortcut conv (5x5) on the implicit
    # zero-inserted upsample, polyphase-decomposed into ONE matmul over a
    # shared (HW, 9*Cin) patch matrix built from the 1-padded input. ----
    blocks = []
    for u in range(3):
        for v in range(3):
            blocks.append(xpad_ref[0, u:u + H, v:v + W, :].reshape(HW, Cin))
    patches = jnp.concatenate(blocks, axis=1)                      # (HW, 9*Cin)

    y1 = jnp.dot(patches, w1_ref[...],
                 preferred_element_type=jnp.float32) + b1_ref[...]
    out1 = jnp.maximum(y1[:, :4 * C], 0.0)    # relu(bn1(conv1)): 4 parity planes
    short_cut = y1[:, 4 * C:]                 # sc_bn1(sc_conv1): 4 parity planes

    # ---- Stage 2: conv2 (3x3) evaluated in the parity domain. The out1 parity
    # planes stay in VMEM (zero-padded scratch gives the halo for free). ----
    pad_scratch[...] = jnp.zeros_like(pad_scratch)
    for p in range(4):                         # p = 2*row_parity + col_parity
        pad_scratch[p, 1:H + 1, 1:W + 1, :] = (
            out1[:, p * C:(p + 1) * C].reshape(H, W, C))

    blocks2 = []
    for q in range(4):
        ar, ac = q // 2, q % 2
        row_offs = (1, 2) if ar == 0 else (0, 1)
        col_offs = (1, 2) if ac == 0 else (0, 1)
        for ro in row_offs:
            for co in col_offs:
                blocks2.append(
                    pad_scratch[q, ro:ro + H, co:co + W, :].reshape(HW, C))
    patches2 = jnp.concatenate(blocks2, axis=1)                    # (HW, 16*C)

    y2 = jnp.dot(patches2, w2_ref[...],
                 preferred_element_type=jnp.float32) + b2_ref[...]
    o_ref[0] = jnp.maximum(y2 + short_cut, 0.0).astype(o_ref.dtype)


# --------------------------------------------------------------------------
# Wrapper: UpProj_Block forward (NCHW in / NCHW out, like the PyTorch module)
# --------------------------------------------------------------------------
@jax.jit
def upproj_block_forward(x_nchw, params):
    N, Cin, H, W = x_nchw.shape
    C = params["w1"].shape[-1]
    HW = H * W

    x = jnp.transpose(x_nchw, (0, 2, 3, 1)).astype(jnp.float32)    # NHWC
    xpad = jnp.pad(x, ((0, 0), (1, 1), (1, 1), (0, 0)))            # (N,H+2,W+2,Cin)

    s1, b1 = _fold_bn(*params["bn1"])
    s2, b2 = _fold_bn(*params["bn2"])
    ssc, bsc = _fold_bn(*params["sc_bn1"])

    # Fold BN scales into the conv output channels; only biases stay in-kernel.
    w1_big = _build_stage1_weights(params["w1"] * s1, params["w_sc"] * ssc)
    w2_big = _build_stage2_weights(params["w2"] * s2)
    bias1 = jnp.concatenate([jnp.tile(b1, 4), jnp.tile(bsc, 4)]).reshape(1, 8 * C)
    bias2 = jnp.tile(b2, 4).reshape(1, 4 * C)

    flops = 2 * N * HW * (9 * Cin * 8 * C + 16 * C * 4 * C)
    bytes_accessed = 4 * (N * (H + 2) * (W + 2) * Cin + 9 * Cin * 8 * C
                          + 16 * C * 4 * C + 12 * C + N * HW * 4 * C)

    out_flat = pl.pallas_call(
        functools.partial(_upproj_fused_kernel, H=H, W=W, Cin=Cin, C=C),
        out_shape=jax.ShapeDtypeStruct((N, HW, 4 * C), jnp.float32),
        grid_spec=pltpu.PrefetchScalarGridSpec(
            num_scalar_prefetch=0,
            grid=(N,),
            in_specs=[
                pl.BlockSpec((1, H + 2, W + 2, Cin), lambda b: (b, 0, 0, 0)),
                pl.BlockSpec((9 * Cin, 8 * C), lambda b: (0, 0)),
                pl.BlockSpec((1, 8 * C), lambda b: (0, 0)),
                pl.BlockSpec((16 * C, 4 * C), lambda b: (0, 0)),
                pl.BlockSpec((1, 4 * C), lambda b: (0, 0)),
            ],
            out_specs=pl.BlockSpec((1, HW, 4 * C), lambda b: (b, 0, 0)),
            scratch_shapes=[pltpu.VMEM((4, H + 2, W + 2, C), jnp.float32)],
        ),
        compiler_params=pltpu.CompilerParams(
            dimension_semantics=("parallel",)),
        cost_estimate=pl.CostEstimate(
            flops=flops, transcendentals=0, bytes_accessed=bytes_accessed),
    )(xpad, w1_big, bias1, w2_big, bias2)

    # Interleave the 4 parity planes back to full (2H, 2W) resolution.
    t = out_flat.reshape(N, H, W, 2, 2, C)           # (n, i, j, a, b, c)
    t = jnp.transpose(t, (0, 1, 3, 2, 4, 5))         # (n, i, a, j, b, c)
    full = t.reshape(N, 2 * H, 2 * W, C)
    return jnp.transpose(full, (0, 3, 1, 2))         # back to NCHW


# ----------------------------- reference (plain JAX) -----------------------------
def unpool2x(x_nhwc):
    """F.conv_transpose2d(x, one-hot 2x2, stride=2, groups=C): zero-insert upsample."""
    N, H, W, C = x_nhwc.shape
    up = jnp.zeros((N, 2 * H, 2 * W, C), x_nhwc.dtype)
    return up.at[:, ::2, ::2, :].set(x_nhwc)


def _ref_conv(x_nhwc, w_hwio):
    return jax.lax.conv_general_dilated(
        x_nhwc, w_hwio, window_strides=(1, 1), padding="SAME",
        dimension_numbers=("NHWC", "HWIO", "NHWC"))


def upproj_block_reference(x_nchw, params):
    x = jnp.transpose(x_nchw, (0, 2, 3, 1))
    x_up = unpool2x(x)
    s1, b1 = _fold_bn(*params["bn1"])
    s2, b2 = _fold_bn(*params["bn2"])
    ssc, bsc = _fold_bn(*params["sc_bn1"])
    out1 = jnp.maximum(_ref_conv(x_up, params["w1"]) * s1 + b1, 0.0)
    sc = _ref_conv(x_up, params["w_sc"]) * ssc + bsc
    out = jnp.maximum(_ref_conv(out1, params["w2"]) * s2 + b2 + sc, 0.0)
    return jnp.transpose(out, (0, 3, 1, 2))


# ----------------------------- param init -----------------------------
def make_params(key, in_channels, out_channels):
    ks = jax.random.split(key, 6)

    def conv_w(k, kh, kw, cin, cout):
        fan_in = cin * kh * kw
        return (jax.random.normal(k, (kh, kw, cin, cout), jnp.float32)
                / jnp.sqrt(float(fan_in)))

    def bn_params(k, c):
        kg, kb, km, kv = jax.random.split(k, 4)
        gamma = 1.0 + 0.1 * jax.random.normal(kg, (c,), jnp.float32)
        beta = 0.1 * jax.random.normal(kb, (c,), jnp.float32)
        mean = 0.1 * jax.random.normal(km, (c,), jnp.float32)
        var = 0.5 + jnp.abs(jax.random.normal(kv, (c,), jnp.float32))
        return gamma, beta, mean, var

    return {
        "w1": conv_w(ks[0], 5, 5, in_channels, out_channels),
        "w2": conv_w(ks[1], 3, 3, out_channels, out_channels),
        "w_sc": conv_w(ks[2], 5, 5, in_channels, out_channels),
        "bn1": bn_params(ks[3], out_channels),
        "bn2": bn_params(ks[4], out_channels),
        "sc_bn1": bn_params(ks[5], out_channels),
    }


if __name__ == "__main__":
    key = jax.random.PRNGKey(0)
    k_x, k_p = jax.random.split(key)

    N, Cin, H, W = 2, 4, 16, 16
    Cout = 8

    x = jax.random.normal(k_x, (N, Cin, H, W), jnp.float32)   # NCHW, like PyTorch
    params = make_params(k_p, Cin, Cout)

    out = jax.block_until_ready(upproj_block_forward(x, params))
    ref = jax.block_until_ready(upproj_block_reference(x, params))

    assert out.shape == (N, Cout, 2 * H, 2 * W), out.shape
    if not jnp.allclose(out, ref, atol=1e-4, rtol=1e-4):
        err = float(jnp.max(jnp.abs(out - ref)))
        raise AssertionError(
            f"Pallas output mismatches JAX reference (max abs err = {err})")

    print("KERNEL_OK")
</pallas_src>

<mosaic_0001>
module attributes {stable_mosaic.version = 11 : i64} {
  func.func @_upproj_fused_kernel(%arg0: i32, %arg1: memref<1x18x18x4xf32, #tpu.memory_space<vmem>>, %arg2: memref<36x64xf32, #tpu.memory_space<vmem>>, %arg3: memref<1x64xf32, #tpu.memory_space<vmem>>, %arg4: memref<128x32xf32, #tpu.memory_space<vmem>>, %arg5: memref<1x32xf32, #tpu.memory_space<vmem>>, %arg6: memref<1x256x32xf32, #tpu.memory_space<vmem>>, %arg7: memref<4x18x18x8xf32, #tpu.memory_space<vmem>>) attributes {dimension_semantics = [#tpu.dimension_semantics<parallel>], iteration_bounds = array<i64: 2>, scalar_prefetch = 0 : i64, scratch_operands = 1 : i64, tpu.core_type = #tpu.core_type<tc>, window_params = [{transform_indices = @transform_0, window_bounds = array<i64: 1, 18, 18, 4>}, {pipeline_mode = #tpu.pipeline_mode<synchronous>, transform_indices = @transform_1, window_bounds = array<i64: 36, 64>}, {pipeline_mode = #tpu.pipeline_mode<synchronous>, transform_indices = @transform_2, window_bounds = array<i64: 1, 64>}, {pipeline_mode = #tpu.pipeline_mode<synchronous>, transform_indices = @transform_3, window_bounds = array<i64: 128, 32>}, {pipeline_mode = #tpu.pipeline_mode<synchronous>, transform_indices = @transform_4, window_bounds = array<i64: 1, 32>}, {transform_indices = @transform_5, window_bounds = array<i64: 1, 256, 32>}]} {
    %c0 = arith.constant 0 : index
    %c0_0 = arith.constant 0 : index
    %c0_1 = arith.constant 0 : index
    %c0_2 = arith.constant 0 : index
    %0 = vector.load %arg1[%c0, %c0_0, %c0_1, %c0_2] : memref<1x18x18x4xf32, #tpu.memory_space<vmem>>, vector<1x16x16x4xf32>
    %1 = vector.shape_cast %0 : vector<1x16x16x4xf32> to vector<16x16x4xf32>
    %2 = vector.shape_cast %1 : vector<16x16x4xf32> to vector<256x4xf32>
    %c0_3 = arith.constant 0 : index
    %c0_4 = arith.constant 0 : index
    %c1 = arith.constant 1 : index
    %c0_5 = arith.constant 0 : index
    %3 = vector.load %arg1[%c0_3, %c0_4, %c1, %c0_5] : memref<1x18x18x4xf32, #tpu.memory_space<vmem>>, vector<1x16x16x4xf32>
    %4 = vector.shape_cast %3 : vector<1x16x16x4xf32> to vector<16x16x4xf32>
    %5 = vector.shape_cast %4 : vector<16x16x4xf32> to vector<256x4xf32>
    %c0_6 = arith.constant 0 : index
    %c0_7 = arith.constant 0 : index
    %c2 = arith.constant 2 : index
    %c0_8 = arith.constant 0 : index
    %6 = vector.load %arg1[%c0_6, %c0_7, %c2, %c0_8] : memref<1x18x18x4xf32, #tpu.memory_space<vmem>>, vector<1x16x16x4xf32>
    %7 = vector.shape_cast %6 : vector<1x16x16x4xf32> to vector<16x16x4xf32>
    %8 = vector.shape_cast %7 : vector<16x16x4xf32> to vector<256x4xf32>
    %c0_9 = arith.constant 0 : index
    %c1_10 = arith.constant 1 : index
    %c0_11 = arith.constant 0 : index
    %c0_12 = arith.constant 0 : index
    %9 = vector.load %arg1[%c0_9, %c1_10, %c0_11, %c0_12] : memref<1x18x18x4xf32, #tpu.memory_space<vmem>>, vector<1x16x16x4xf32>
    %10 = vector.shape_cast %9 : vector<1x16x16x4xf32> to vector<16x16x4xf32>
    %11 = vector.shape_cast %10 : vector<16x16x4xf32> to vector<256x4xf32>
    %c0_13 = arith.constant 0 : index
    %c1_14 = arith.constant 1 : index
    %c1_15 = arith.constant 1 : index
    %c0_16 = arith.constant 0 : index
    %12 = vector.load %arg1[%c0_13, %c1_14, %c1_15, %c0_16] : memref<1x18x18x4xf32, #tpu.memory_space<vmem>>, vector<1x16x16x4xf32>
    %13 = vector.shape_cast %12 : vector<1x16x16x4xf32> to vector<16x16x4xf32>
    %14 = vector.shape_cast %13 : vector<16x16x4xf32> to vector<256x4xf32>
    %c0_17 = arith.constant 0 : index
    %c1_18 = arith.constant 1 : index
    %c2_19 = arith.constant 2 : index
    %c0_20 = arith.constant 0 : index
    %15 = vector.load %arg1[%c0_17, %c1_18, %c2_19, %c0_20] : memref<1x18x18x4xf32, #tpu.memory_space<vmem>>, vector<1x16x16x4xf32>
    %16 = vector.shape_cast %15 : vector<1x16x16x4xf32> to vector<16x16x4xf32>
    %17 = vector.shape_cast %16 : vector<16x16x4xf32> to vector<256x4xf32>
    %c0_21 = arith.constant 0 : index
    %c2_22 = arith.constant 2 : index
    %c0_23 = arith.constant 0 : index
    %c0_24 = arith.constant 0 : index
    %18 = vector.load %arg1[%c0_21, %c2_22, %c0_23, %c0_24] : memref<1x18x18x4xf32, #tpu.memory_space<vmem>>, vector<1x16x16x4xf32>
    %19 = vector.shape_cast %18 : vector<1x16x16x4xf32> to vector<16x16x4xf32>
    %20 = vector.shape_cast %19 : vector<16x16x4xf32> to vector<256x4xf32>
    %c0_25 = arith.constant 0 : index
    %c2_26 = arith.constant 2 : index
    %c1_27 = arith.constant 1 : index
    %c0_28 = arith.constant 0 : index
    %21 = vector.load %arg1[%c0_25, %c2_26, %c1_27, %c0_28] : memref<1x18x18x4xf32, #tpu.memory_space<vmem>>, vector<1x16x16x4xf32>
    %22 = vector.shape_cast %21 : vector<1x16x16x4xf32> to vector<16x16x4xf32>
    %23 = vector.shape_cast %22 : vector<16x16x4xf32> to vector<256x4xf32>
    %c0_29 = arith.constant 0 : index
    %c2_30 = arith.constant 2 : index
    %c2_31 = arith.constant 2 : index
    %c0_32 = arith.constant 0 : index
    %24 = vector.load %arg1[%c0_29, %c2_30, %c2_31, %c0_32] : memref<1x18x18x4xf32, #tpu.memory_space<vmem>>, vector<1x16x16x4xf32>
    %25 = vector.shape_cast %24 : vector<1x16x16x4xf32> to vector<16x16x4xf32>
    %26 = vector.shape_cast %25 : vector<16x16x4xf32> to vector<256x4xf32>
    %27 = tpu.concatenate %2, %5, %8, %11, %14, %17, %20, %23, %26 in 1 : vector<256x4xf32>, vector<256x4xf32>, vector<256x4xf32>, vector<256x4xf32>, vector<256x4xf32>, vector<256x4xf32>, vector<256x4xf32>, vector<256x4xf32>, vector<256x4xf32> -> vector<256x36xf32>
    %c0_33 = arith.constant 0 : index
    %c0_34 = arith.constant 0 : index
    %28 = vector.load %arg2[%c0_33, %c0_34] : memref<36x64xf32, #tpu.memory_space<vmem>>, vector<36x64xf32>
    %cst = arith.constant dense<0.000000e+00> : vector<256x64xf32>
    %29 = tpu.matmul %27, %28, %cst {dimension_numbers = #tpu.dot_dimension_numbers<[1], [0], [0], [1], [0, 0, 1, 1], [], []>} : vector<256x36xf32>, vector<36x64xf32>, vector<256x64xf32> -> vector<256x64xf32>
    %c0_35 = arith.constant 0 : index
    %c0_36 = arith.constant 0 : index
    %30 = vector.load %arg3[%c0_35, %c0_36] : memref<1x64xf32, #tpu.memory_space<vmem>>, vector<1x64xf32>
    %31 = vector.broadcast %30 : vector<1x64xf32> to vector<256x64xf32>
    %32 = arith.addf %29, %31 : vector<256x64xf32>
    %33 = vector.extract_strided_slice %32 {offsets = [0, 0], sizes = [256, 32], strides = [1, 1]} : vector<256x64xf32> to vector<256x32xf32>
    %cst_37 = arith.constant 0.000000e+00 : f32
    %34 = vector.broadcast %cst_37 : f32 to vector<256x32xf32>
    %35 = arith.maximumf %33, %34 : vector<256x32xf32>
    %36 = vector.extract_strided_slice %32 {offsets = [0, 32], sizes = [256, 32], strides = [1, 1]} : vector<256x64xf32> to vector<256x32xf32>
    %cst_38 = arith.constant 0.000000e+00 : f32
    %37 = vector.broadcast %cst_38 : f32 to vector<4x18x18x8xf32>
    %c0_39 = arith.constant 0 : index
    %c0_40 = arith.constant 0 : index
    %c0_41 = arith.constant 0 : index
    %c0_42 = arith.constant 0 : index
    %38 = vector.load %arg7[%c0_39, %c0_40, %c0_41, %c0_42] : memref<4x18x18x8xf32, #tpu.memory_space<vmem>>, vector<4x18x18x8xf32>
    tpu.vector_store %arg7[%c0_39, %c0_40, %c0_41, %c0_42], %37 {strides = array<i32>} : memref<4x18x18x8xf32, #tpu.memory_space<vmem>>, vector<4x18x18x8xf32>,
    %39 = vector.extract_strided_slice %35 {offsets = [0, 0], sizes = [256, 8], strides = [1, 1]} : vector<256x32xf32> to vector<256x8xf32>
    %40 = vector.shape_cast %39 : vector<256x8xf32> to vector<16x16x8xf32>
    %c0_43 = arith.constant 0 : index
    %c1_44 = arith.constant 1 : index
    %c1_45 = arith.constant 1 : index
    %c0_46 = arith.constant 0 : index
    %41 = vector.load %arg7[%c0_43, %c1_44, %c1_45, %c0_46] : memref<4x18x18x8xf32, #tpu.memory_space<vmem>>, vector<1x16x16x8xf32>
    %42 = vector.shape_cast %41 : vector<1x16x16x8xf32> to vector<16x16x8xf32>
    %43 = vector.shape_cast %40 : vector<16x16x8xf32> to vector<1x16x16x8xf32>
    tpu.vector_store %arg7[%c0_43, %c1_44, %c1_45, %c0_46], %43 {strides = array<i32>} : memref<4x18x18x8xf32, #tpu.memory_space<vmem>>, vector<1x16x16x8xf32>,
    %44 = vector.extract_strided_slice %35 {offsets = [0, 8], sizes = [256, 8], strides = [1, 1]} : vector<256x32xf32> to vector<256x8xf32>
    %45 = vector.shape_cast %44 : vector<256x8xf32> to vector<16x16x8xf32>
    %c1_47 = arith.constant 1 : index
    %c1_48 = arith.constant 1 : index
    %c1_49 = arith.constant 1 : index
    %c0_50 = arith.constant 0 : index
    %46 = vector.load %arg7[%c1_47, %c1_48, %c1_49, %c0_50] : memref<4x18x18x8xf32, #tpu.memory_space<vmem>>, vector<1x16x16x8xf32>
    %47 = vector.shape_cast %46 : vector<1x16x16x8xf32> to vector<16x16x8xf32>
    %48 = vector.shape_cast %45 : vector<16x16x8xf32> to vector<1x16x16x8xf32>
    tpu.vector_store %arg7[%c1_47, %c1_48, %c1_49, %c0_50], %48 {strides = array<i32>} : memref<4x18x18x8xf32, #tpu.memory_space<vmem>>, vector<1x16x16x8xf32>,
    %49 = vector.extract_strided_slice %35 {offsets = [0, 16], sizes = [256, 8], strides = [1, 1]} : vector<256x32xf32> to vector<256x8xf32>
    %50 = vector.shape_cast %49 : vector<256x8xf32> to vector<16x16x8xf32>
    %c2_51 = arith.constant 2 : index
    %c1_52 = arith.constant 1 : index
    %c1_53 = arith.constant 1 : index
    %c0_54 = arith.constant 0 : index
    %51 = vector.load %arg7[%c2_51, %c1_52, %c1_53, %c0_54] : memref<4x18x18x8xf32, #tpu.memory_space<vmem>>, vector<1x16x16x8xf32>
    %52 = vector.shape_cast %51 : vector<1x16x16x8xf32> to vector<16x16x8xf32>
    %53 = vector.shape_cast %50 : vector<16x16x8xf32> to vector<1x16x16x8xf32>
    tpu.vector_store %arg7[%c2_51, %c1_52, %c1_53, %c0_54], %53 {strides = array<i32>} : memref<4x18x18x8xf32, #tpu.memory_space<vmem>>, vector<1x16x16x8xf32>,
    %54 = vector.extract_strided_slice %35 {offsets = [0, 24], sizes = [256, 8], strides = [1, 1]} : vector<256x32xf32> to vector<256x8xf32>
    %55 = vector.shape_cast %54 : vector<256x8xf32> to vector<16x16x8xf32>
    %c3 = arith.constant 3 : index
    %c1_55 = arith.constant 1 : index
    %c1_56 = arith.constant 1 : index
    %c0_57 = arith.constant 0 : index
    %56 = vector.load %arg7[%c3, %c1_55, %c1_56, %c0_57] : memref<4x18x18x8xf32, #tpu.memory_space<vmem>>, vector<1x16x16x8xf32>
    %57 = vector.shape_cast %56 : vector<1x16x16x8xf32> to vector<16x16x8xf32>
    %58 = vector.shape_cast %55 : vector<16x16x8xf32> to vector<1x16x16x8xf32>
    tpu.vector_store %arg7[%c3, %c1_55, %c1_56, %c0_57], %58 {strides = array<i32>} : memref<4x18x18x8xf32, #tpu.memory_space<vmem>>, vector<1x16x16x8xf32>,
    %c0_58 = arith.constant 0 : index
    %c1_59 = arith.constant 1 : index
    %c1_60 = arith.constant 1 : index
    %c0_61 = arith.constant 0 : index
    %59 = vector.load %arg7[%c0_58, %c1_59, %c1_60, %c0_61] : memref<4x18x18x8xf32, #tpu.memory_space<vmem>>, vector<1x16x16x8xf32>
    %60 = vector.shape_cast %59 : vector<1x16x16x8xf32> to vector<16x16x8xf32>
    %61 = vector.shape_cast %60 : vector<16x16x8xf32> to vector<256x8xf32>
    %c0_62 = arith.constant 0 : index
    %c1_63 = arith.constant 1 : index
    %c2_64 = arith.constant 2 : index
    %c0_65 = arith.constant 0 : index
    %62 = vector.load %arg7[%c0_62, %c1_63, %c2_64, %c0_65] : memref<4x18x18x8xf32, #tpu.memory_space<vmem>>, vector<1x16x16x8xf32>
    %63 = vector.shape_cast %62 : vector<1x16x16x8xf32> to vector<16x16x8xf32>
    %64 = vector.shape_cast %63 : vector<16x16x8xf32> to vector<256x8xf32>
    %c0_66 = arith.constant 0 : index
    %c2_67 = arith.constant 2 : index
    %c1_68 = arith.constant 1 : index
    %c0_69 = arith.constant 0 : index
    %65 = vector.load %arg7[%c0_66, %c2_67, %c1_68, %c0_69] : memref<4x18x18x8xf32, #tpu.memory_space<vmem>>, vector<1x16x16x8xf32>
    %66 = vector.shape_cast %65 : vector<1x16x16x8xf32> to vector<16x16x8xf32>
    %67 = vector.shape_cast %66 : vector<16x16x8xf32> to vector<256x8xf32>
    %c0_70 = arith.constant 0 : index
    %c2_71 = arith.constant 2 : index
    %c2_72 = arith.constant 2 : index
    %c0_73 = arith.constant 0 : index
    %68 = vector.load %arg7[%c0_70, %c2_71, %c2_72, %c0_73] : memref<4x18x18x8xf32, #tpu.memory_space<vmem>>, vector<1x16x16x8xf32>
    %69 = vector.shape_cast %68 : vector<1x16x16x8xf32> to vector<16x16x8xf32>
    %70 = vector.shape_cast %69 : vector<16x16x8xf32> to vector<256x8xf32>
    %c1_74 = arith.constant 1 : index
    %c1_75 = arith.constant 1 : index
    %c0_76 = arith.constant 0 : index
    %c0_77 = arith.constant 0 : index
    %71 = vector.load %arg7[%c1_74, %c1_75, %c0_76, %c0_77] : memref<4x18x18x8xf32, #tpu.memory_space<vmem>>, vector<1x16x16x8xf32>
    %72 = vector.shape_cast %71 : vector<1x16x16x8xf32> to vector<16x16x8xf32>
    %73 = vector.shape_cast %72 : vector<16x16x8xf32> to vector<256x8xf32>
    %c1_78 = arith.constant 1 : index
    %c1_79 = arith.constant 1 : index
    %c1_80 = arith.constant 1 : index
    %c0_81 = arith.constant 0 : index
    %74 = vector.load %arg7[%c1_78, %c1_79, %c1_80, %c0_81] : memref<4x18x18x8xf32, #tpu.memory_space<vmem>>, vector<1x16x16x8xf32>
    %75 = vector.shape_cast %74 : vector<1x16x16x8xf32> to vector<16x16x8xf32>
    %76 = vector.shape_cast %75 : vector<16x16x8xf32> to vector<256x8xf32>
    %c1_82 = arith.constant 1 : index
    %c2_83 = arith.constant 2 : index
    %c0_84 = arith.constant 0 : index
    %c0_85 = arith.constant 0 : index
    %77 = vector.load %arg7[%c1_82, %c2_83, %c0_84, %c0_85] : memref<4x18x18x8xf32, #tpu.memory_space<vmem>>, vector<1x16x16x8xf32>
    %78 = vector.shape_cast %77 : vector<1x16x16x8xf32> to vector<16x16x8xf32>
    %79 = vector.shape_cast %78 : vector<16x16x8xf32> to vector<256x8xf32>
    %c1_86 = arith.constant 1 : index
    %c2_87 = arith.constant 2 : index
    %c1_88 = arith.constant 1 : index
    %c0_89 = arith.constant 0 : index
    %80 = vector.load %arg7[%c1_86, %c2_87, %c1_88, %c0_89] : memref<4x18x18x8xf32, #tpu.memory_space<vmem>>, vector<1x16x16x8xf32>
    %81 = vector.shape_cast %80 : vector<1x16x16x8xf32> to vector<16x16x8xf32>
    %82 = vector.shape_cast %81 : vector<16x16x8xf32> to vector<256x8xf32>
    %c2_90 = arith.constant 2 : index
    %c0_91 = arith.constant 0 : index
    %c1_92 = arith.constant 1 : index
    %c0_93 = arith.constant 0 : index
    %83 = vector.load %arg7[%c2_90, %c0_91, %c1_92, %c0_93] : memref<4x18x18x8xf32, #tpu.memory_space<vmem>>, vector<1x16x16x8xf32>
    %84 = vector.shape_cast %83 : vector<1x16x16x8xf32> to vector<16x16x8xf32>
    %85 = vector.shape_cast %84 : vector<16x16x8xf32> to vector<256x8xf32>
    %c2_94 = arith.constant 2 : index
    %c0_95 = arith.constant 0 : index
    %c2_96 = arith.constant 2 : index
    %c0_97 = arith.constant 0 : index
    %86 = vector.load %arg7[%c2_94, %c0_95, %c2_96, %c0_97] : memref<4x18x18x8xf32, #tpu.memory_space<vmem>>, vector<1x16x16x8xf32>
    %87 = vector.shape_cast %86 : vector<1x16x16x8xf32> to vector<16x16x8xf32>
    %88 = vector.shape_cast %87 : vector<16x16x8xf32> to vector<256x8xf32>
    %c2_98 = arith.constant 2 : index
    %c1_99 = arith.constant 1 : index
    %c1_100 = arith.constant 1 : index
    %c0_101 = arith.constant 0 : index
    %89 = vector.load %arg7[%c2_98, %c1_99, %c1_100, %c0_101] : memref<4x18x18x8xf32, #tpu.memory_space<vmem>>, vector<1x16x16x8xf32>
    %90 = vector.shape_cast %89 : vector<1x16x16x8xf32> to vector<16x16x8xf32>
    %91 = vector.shape_cast %90 : vector<16x16x8xf32> to vector<256x8xf32>
    %c2_102 = arith.constant 2 : index
    %c1_103 = arith.constant 1 : index
    %c2_104 = arith.constant 2 : index
    %c0_105 = arith.constant 0 : index
    %92 = vector.load %arg7[%c2_102, %c1_103, %c2_104, %c0_105] : memref<4x18x18x8xf32, #tpu.memory_space<vmem>>, vector<1x16x16x8xf32>
    %93 = vector.shape_cast %92 : vector<1x16x16x8xf32> to vector<16x16x8xf32>
    %94 = vector.shape_cast %93 : vector<16x16x8xf32> to vector<256x8xf32>
    %c3_106 = arith.constant 3 : index
    %c0_107 = arith.constant 0 : index
    %c0_108 = arith.constant 0 : index
    %c0_109 = arith.constant 0 : index
    %95 = vector.load %arg7[%c3_106, %c0_107, %c0_108, %c0_109] : memref<4x18x18x8xf32, #tpu.memory_space<vmem>>, vector<1x16x16x8xf32>
    %96 = vector.shape_cast %95 : vector<1x16x16x8xf32> to vector<16x16x8xf32>
    %97 = vector.shape_cast %96 : vector<16x16x8xf32> to vector<256x8xf32>
    %c3_110 = arith.constant 3 : index
    %c0_111 = arith.constant 0 : index
    %c1_112 = arith.constant 1 : index
    %c0_113 = arith.constant 0 : index
    %98 = vector.load %arg7[%c3_110, %c0_111, %c1_112, %c0_113] : memref<4x18x18x8xf32, #tpu.memory_space<vmem>>, vector<1x16x16x8xf32>
    %99 = vector.shape_cast %98 : vector<1x16x16x8xf32> to vector<16x16x8xf32>
    %100 = vector.shape_cast %99 : vector<16x16x8xf32> to vector<256x8xf32>
    %c3_114 = arith.constant 3 : index
    %c1_115 = arith.constant 1 : index
    %c0_116 = arith.constant 0 : index
    %c0_117 = arith.constant 0 : index
    %101 = vector.load %arg7[%c3_114, %c1_115, %c0_116, %c0_117] : memref<4x18x18x8xf32, #tpu.memory_space<vmem>>, vector<1x16x16x8xf32>
    %102 = vector.shape_cast %101 : vector<1x16x16x8xf32> to vector<16x16x8xf32>
    %103 = vector.shape_cast %102 : vector<16x16x8xf32> to vector<256x8xf32>
    %c3_118 = arith.constant 3 : index
    %c1_119 = arith.constant 1 : index
    %c1_120 = arith.constant 1 : index
    %c0_121 = arith.constant 0 : index
    %104 = vector.load %arg7[%c3_118, %c1_119, %c1_120, %c0_121] : memref<4x18x18x8xf32, #tpu.memory_space<vmem>>, vector<1x16x16x8xf32>
    %105 = vector.shape_cast %104 : vector<1x16x16x8xf32> to vector<16x16x8xf32>
    %106 = vector.shape_cast %105 : vector<16x16x8xf32> to vector<256x8xf32>
    %107 = tpu.concatenate %61, %64, %67, %70, %73, %76, %79, %82, %85, %88, %91, %94, %97, %100, %103, %106 in 1 : vector<256x8xf32>, vector<256x8xf32>, vector<256x8xf32>, vector<256x8xf32>, vector<256x8xf32>, vector<256x8xf32>, vector<256x8xf32>, vector<256x8xf32>, vector<256x8xf32>, vector<256x8xf32>, vector<256x8xf32>, vector<256x8xf32>, vector<256x8xf32>, vector<256x8xf32>, vector<256x8xf32>, vector<256x8xf32> -> vector<256x128xf32>
    %c0_122 = arith.constant 0 : index
    %c0_123 = arith.constant 0 : index
    %108 = vector.load %arg4[%c0_122, %c0_123] : memref<128x32xf32, #tpu.memory_space<vmem>>, vector<128x32xf32>
    %cst_124 = arith.constant dense<0.000000e+00> : vector<256x32xf32>
    %109 = tpu.matmul %107, %108, %cst_124 {dimension_numbers = #tpu.dot_dimension_numbers<[1], [0], [0], [1], [0, 0, 1, 1], [], []>} : vector<256x128xf32>, vector<128x32xf32>, vector<256x32xf32> -> vector<256x32xf32>
    %c0_125 = arith.constant 0 : index
    %c0_126 = arith.constant 0 : index
    %110 = vector.load %arg5[%c0_125, %c0_126] : memref<1x32xf32, #tpu.memory_space<vmem>>, vector<1x32xf32>
    %111 = vector.broadcast %110 : vector<1x32xf32> to vector<256x32xf32>
    %112 = arith.addf %109, %111 : vector<256x32xf32>
    %113 = arith.addf %112, %36 : vector<256x32xf32>
    %cst_127 = arith.constant 0.000000e+00 : f32
    %114 = vector.broadcast %cst_127 : f32 to vector<256x32xf32>
    %115 = arith.maximumf %113, %114 : vector<256x32xf32>
    %c0_128 = arith.constant 0 : index
    %c0_129 = arith.constant 0 : index
    %c0_130 = arith.constant 0 : index
    %116 = vector.load %arg6[%c0_128, %c0_129, %c0_130] : memref<1x256x32xf32, #tpu.memory_space<vmem>>, vector<1x256x32xf32>
    %117 = vector.shape_cast %116 : vector<1x256x32xf32> to vector<256x32xf32>
    %118 = vector.shape_cast %115 : vector<256x32xf32> to vector<1x256x32xf32>
    tpu.vector_store %arg6[%c0_128, %c0_129, %c0_130], %118 {strides = array<i32>} : memref<1x256x32xf32, #tpu.memory_space<vmem>>, vector<1x256x32xf32>,
    return
  }
  func.func @transform_0(%arg0: i32) -> (i32, i32, i32, i32) {
    %c0_i32 = arith.constant 0 : i32
    %c0_i32_0 = arith.constant 0 : i32
    %c0_i32_1 = arith.constant 0 : i32
    %c0_i32_2 = arith.constant 0 : i32
    return %arg0, %c0_i32, %c0_i32_0, %c0_i32_1 : i32, i32, i32, i32
  }
  func.func @transform_1(%arg0: i32) -> (i32, i32) {
    %c0_i32 = arith.constant 0 : i32
    %c0_i32_0 = arith.constant 0 : i32
    %c0_i32_1 = arith.constant 0 : i32
    return %c0_i32, %c0_i32_0 : i32, i32
  }
  func.func @transform_2(%arg0: i32) -> (i32, i32) {
    %c0_i32 = arith.constant 0 : i32
    %c0_i32_0 = arith.constant 0 : i32
    %c0_i32_1 = arith.constant 0 : i32
    return %c0_i32, %c0_i32_0 : i32, i32
  }
  func.func @transform_3(%arg0: i32) -> (i32, i32) {
    %c0_i32 = arith.constant 0 : i32
    %c0_i32_0 = arith.constant 0 : i32
    %c0_i32_1 = arith.constant 0 : i32
    return %c0_i32, %c0_i32_0 : i32, i32
  }
  func.func @transform_4(%arg0: i32) -> (i32, i32) {
    %c0_i32 = arith.constant 0 : i32
    %c0_i32_0 = arith.constant 0 : i32
    %c0_i32_1 = arith.constant 0 : i32
    return %c0_i32, %c0_i32_0 : i32, i32
  }
  func.func @transform_5(%arg0: i32) -> (i32, i32, i32) {
    %c0_i32 = arith.constant 0 : i32
    %c0_i32_0 = arith.constant 0 : i32
    %c0_i32_1 = arith.constant 0 : i32
    return %arg0, %c0_i32, %c0_i32_0 : i32, i32, i32
  }
}

</mosaic_0001>

<llo_original>
// kernel: tile.24
$region0: #{tile.24}
  %s0 = inlined_call_operand.vmem [shape: f32[4,8], index: 0, kind: input, shape index: {}]
  %s1 = inlined_call_operand.vmem [shape: f32[32], index: 1, kind: output, shape index: {}]
  $region1: #{tile.24} parent=0
    #allocation0 [shape = 'u8[4096]{0}', space=vmem, size = 0x1000, scoped, tag = 'scoped mem for output reshape']
    #allocation1 [shape = 'u8[4096]{0}', space=vmem, size = 0x1000, scoped, tag = 'scoped mem for input reshape']
    %s3 = sshllo.u32 0, 4
    %v4 = vld [vmem:[%s0] sm:%s3]
    %5 = vst [vmem:[#allocation1] sm:%s3] %v4
    %v6 = vld [vmem:[#allocation1] sm:$0x1]
    %vm7 = vcmask 64512
    %8 = vst.msk [vmem:[#allocation0] sm:$0x1] %vm7, %v6
    %s9 = scalar_lea.vmem [#allocation1], 3
    %v10 = vld [vmem:[%s9] sm:$0x1]
    %11 = vrot.lane.b32.xlu0 %v10, 24
    %v12 = vpop.permute.xlu0 %11
    %vm13 = vcmask 261312
    %14 = vst.msk [vmem:[#allocation0] sm:$0x1] %vm13, %v12
    %s15 = scalar_lea.vmem [#allocation1], 2
    %v16 = vld [vmem:[%s15] sm:$0x1]
    %17 = vrot.lane.b32.xlu0 %v16, 16
    %v18 = vpop.permute.xlu0 %17
    %vm19 = vcmask 195712
    %20 = vst.msk [vmem:[#allocation0] sm:$0x1] %vm19, %v18
    %s21 = scalar_lea.vmem [#allocation1], 1
    %v22 = vld [vmem:[%s21] sm:$0x1]
    %23 = vrot.lane.b32.xlu0 %v22, 8
    %v24 = vpop.permute.xlu0 %23
    %vm25 = vcmask 130112
    %26 = vst.msk [vmem:[#allocation0] sm:$0x1] %vm25, %v24
    %s28 = sshllo.u32 0, 1
    %v30 = vld [vmem:[#allocation0] sm:%s28]
    %s31 = sshllo.u32 0, 1
    %32 = vst [vmem:[%s1] sm:%s31] %v30

// kernel: tile.23
$region0: #{tile.23}
  #allocation0 [shape = 's32[1]{0}', space=sflag, size = 0x4, scoped, tag = 'scoped memory for tile.23']
  %s0 = inlined_call_operand.vmem [shape: f32[8], index: 0, kind: input, shape index: {}]
  %s1 = inlined_call_operand.vmem [shape: f32[4,8], index: 1, kind: output, shape index: {}]
  // Predicated region
  $region2: #{tile.23} parent=0 // pred_check
    _
  $region3: #{tile.23} parent=0 // pred_check_branch
    %3 = sbr.rel (0) target = $region5
  $region4: #{tile.23} parent=0 // pred_region
    _
  $region5: #{tile.23} parent=0 // pred_fallthru
    _
  %v4 = vld [vmem:[%s0] ss:$0 sm:$0xff]
  %5 = vst [vmem:[%s1] sm:$0xf] %v4

// kernel: tile.29
$region0: #{tile.29}
  %s0 = inlined_call_operand.vmem [shape: f32[4,8], index: 0, kind: input, shape index: {}]
  %s1 = inlined_call_operand.vmem [shape: f32[1,32], index: 1, kind: output, shape index: {}]
  $region1: #{tile.29} parent=0
    #allocation0 [shape = 'u8[4096]{0}', space=vmem, size = 0x1000, scoped, tag = 'scoped mem for output reshape']
    #allocation1 [shape = 'u8[4096]{0}', space=vmem, size = 0x1000, scoped, tag = 'scoped mem for input reshape']
    %s3 = sshllo.u32 0, 4
    %v4 = vld [vmem:[%s0] sm:%s3]
    %5 = vst [vmem:[#allocation1] sm:%s3] %v4
    %v6 = vld [vmem:[#allocation1] sm:$0x1]
    %vm7 = vcmask 64512
    %8 = vst.msk [vmem:[#allocation0] sm:$0x1] %vm7, %v6
    %s9 = scalar_lea.vmem [#allocation1], 3
    %v10 = vld [vmem:[%s9] sm:$0x1]
    %11 = vrot.lane.b32.xlu0 %v10, 24
    %v12 = vpop.permute.xlu0 %11
    %vm13 = vcmask 261312
    %14 = vst.msk [vmem:[#allocation0] sm:$0x1] %vm13, %v12
    %s15 = scalar_lea.vmem [#allocation1], 2
    %v16 = vld [vmem:[%s15] sm:$0x1]
    %17 = vrot.lane.b32.xlu0 %v16, 16
    %v18 = vpop.permute.xlu0 %17
    %vm19 = vcmask 195712
    %20 = vst.msk [vmem:[#allocation0] sm:$0x1] %vm19, %v18
    %s21 = scalar_lea.vmem [#allocation1], 1
    %v22 = vld [vmem:[%s21] sm:$0x1]
    %23 = vrot.lane.b32.xlu0 %v22, 8
    %v24 = vpop.permute.xlu0 %23
    %vm25 = vcmask 130112
    %26 = vst.msk [vmem:[#allocation0] sm:$0x1] %vm25, %v24
    %s28 = sshllo.u32 0, 1
    %v30 = vld [vmem:[#allocation0] sm:%s28]
    %s31 = sshllo.u32 0, 1
    %32 = vst [vmem:[%s1] sm:%s31] %v30

// kernel: upproj_block_forward.1
$region0: #{upproj_block_forward.1}
  #allocation0 [shape = 'u32[]', space=smem, size = 0x4, offset = 0x4, fixed_abs, tag = 'smem constant byte address 0x4 - core index']
  #allocation1 [shape = 'u32[144,128]{1,0:T(1,128)}', space=vmem, size = 0x12000, scoped, tag = 'internal scratch']
  #allocation2 [shape = 'f32[4,18,18,8]{3,2,1,0:T(8,128)}', space=vmem, size = 0xd8000, scoped, tag = 'scratch operand']
  %s0 = inlined_call_operand.vmem [shape: f32[2,18,18,4], index: 0, kind: input, shape index: {}]
  %s1 = inlined_call_operand.vmem [shape: f32[36,64], index: 1, kind: input, shape index: {}]
  %s2 = inlined_call_operand.vmem [shape: f32[1,64], index: 2, kind: input, shape index: {}]
  %s3 = inlined_call_operand.vmem [shape: f32[128,32], index: 3, kind: input, shape index: {}]
  %s4 = inlined_call_operand.vmem [shape: f32[1,32], index: 4, kind: input, shape index: {}]
  %s5 = inlined_call_operand.vmem [shape: f32[2,256,32], index: 5, kind: output, shape index: {}]
  %s6 = sld [smem:[#allocation0]]
  $region53: #{upproj_block_forward.1} parent=0
    _
  %s8 = ssub.s32 1, %s6
  %s9 = scalar_select 0, %s8, %s6
  loop: start=0, step=1, limit=4
  $region2: #{upproj_block_forward.1} parent=0 // loop_pre_header
    _
  $region3: #{upproj_block_forward.1} parent=0 // loop_header
    %s11 = sphi 0, %s15
    %p12 = scmp.ge.s32.totalorder %s11, 4
    %s21 = sphi 0, %s23
    %s24 = sphi 0, %s21
    %s25 = sphi 0, %s24
    %s41 = sphi 0, %s25
    %s45 = sphi 0, %s45
    %s47 = sphi 0, %s45
    %s48 = sphi 0, %s47
    %s62 = sphi 0, %s48
    %s66 = sphi 0, %s66
    %s68 = sphi 0, %s66
    %s69 = sphi 0, %s68
    %s83 = sphi 0, %s69
    %s87 = sphi 0, %s87
    %s89 = sphi 0, %s87
    %s90 = sphi 0, %s89
    %s104 = sphi 0, %s90
    %s108 = sphi 0, %s108
    %s110 = sphi 0, %s108
    %s111 = sphi 0, %s110
    %s125 = sphi 0, %s111
    %s131 = sphi 0, %s133
    %s134 = sphi 0, %s131
    %s135 = sphi 0, %s134
    %s151 = sphi 0, %s135
  $region4: #{upproj_block_forward.1} parent=0 // loop_header_branch
    %14 = sbr.rel (%p12) target = $region8
  $region5: #{upproj_block_forward.1} parent=0 // loop_body
    %s16 = ssub.s32 %s11, 1
    %s17 = ssub.s32 %s11, 2
    %s18 = sadd.s32 %s11, 1
    %s19 = ssub.s32 %s11, %s18
    %p20 = scmp.eq.s32.totalorder %s19, 0
    %s22 = sadd.s32 %s21, 1
    %s23 = scalar_select %p20, %s21, %s22
    %p26 = pneg %p20
    %p27 = scmp.eq.s32.totalorder %s11, 1
    %p28 = por %p26, %p27
    %p29 = scmp.ne.s32.totalorder %s21, %s24
    %p30 = scmp.eq.s32.totalorder %s11, 0
    %p31 = por %p29, %p30
    %p32 = scmp.ne.s32.totalorder %s21, %s24
    %p33 = scmp.eq.s32.totalorder %s16, 1
    %p34 = por %p32, %p33
    %p35 = scmp.ne.s32.totalorder %s24, %s25
    %p36 = scmp.eq.s32.totalorder %s16, 0
    %p37 = por %p35, %p36
    %p38 = scmp.ne.s32.totalorder %s24, %s25
    %p39 = scmp.eq.s32.totalorder %s17, 1
    %p40 = por %p38, %p39
    %p42 = scmp.ne.s32.totalorder %s25, %s41
    %p43 = scmp.eq.s32.totalorder %s17, 0
    %p44 = por %p42, %p43
    %s46 = sadd.s32 %s45, 1
    %p49 = scmp.eq.s32.totalorder %s11, 1
    %p50 = scmp.ne.s32.totalorder %s45, %s47
    %p51 = scmp.eq.s32.totalorder %s11, 0
    %p52 = por %p50, %p51
    %p53 = scmp.ne.s32.totalorder %s45, %s47
    %p54 = scmp.eq.s32.totalorder %s16, 1
    %p55 = por %p53, %p54
    %p56 = scmp.ne.s32.totalorder %s47, %s48
    %p57 = scmp.eq.s32.totalorder %s16, 0
    %p58 = por %p56, %p57
    %p59 = scmp.ne.s32.totalorder %s47, %s48
    %p60 = scmp.eq.s32.totalorder %s17, 1
    %p61 = por %p59, %p60
    %p63 = scmp.ne.s32.totalorder %s48, %s62
    %p64 = scmp.eq.s32.totalorder %s17, 0
    %p65 = por %p63, %p64
    %s67 = sadd.s32 %s66, 1
    %p70 = scmp.eq.s32.totalorder %s11, 1
    %p71 = scmp.ne.s32.totalorder %s66, %s68
    %p72 = scmp.eq.s32.totalorder %s11, 0
    %p73 = por %p71, %p72
    %p74 = scmp.ne.s32.totalorder %s66, %s68
    %p75 = scmp.eq.s32.totalorder %s16, 1
    %p76 = por %p74, %p75
    %p77 = scmp.ne.s32.totalorder %s68, %s69
    %p78 = scmp.eq.s32.totalorder %s16, 0
    %p79 = por %p77, %p78
    %p80 = scmp.ne.s32.totalorder %s68, %s69
    %p81 = scmp.eq.s32.totalorder %s17, 1
    %p82 = por %p80, %p81
    %p84 = scmp.ne.s32.totalorder %s69, %s83
    %p85 = scmp.eq.s32.totalorder %s17, 0
    %p86 = por %p84, %p85
    %s88 = sadd.s32 %s87, 1
    %p91 = scmp.eq.s32.totalorder %s11, 1
    %p92 = scmp.ne.s32.totalorder %s87, %s89
    %p93 = scmp.eq.s32.totalorder %s11, 0
    %p94 = por %p92, %p93
    %p95 = scmp.ne.s32.totalorder %s87, %s89
    %p96 = scmp.eq.s32.totalorder %s16, 1
    %p97 = por %p95, %p96
    %p98 = scmp.ne.s32.totalorder %s89, %s90
    %p99 = scmp.eq.s32.totalorder %s16, 0
    %p100 = por %p98, %p99
    %p101 = scmp.ne.s32.totalorder %s89, %s90
    %p102 = scmp.eq.s32.totalorder %s17, 1
    %p103 = por %p101, %p102
    %p105 = scmp.ne.s32.totalorder %s90, %s104
    %p106 = scmp.eq.s32.totalorder %s17, 0
    %p107 = por %p105, %p106
    %s109 = sadd.s32 %s108, 1
    %p112 = scmp.eq.s32.totalorder %s11, 1
    %p113 = scmp.ne.s32.totalorder %s108, %s110
    %p114 = scmp.eq.s32.totalorder %s11, 0
    %p115 = por %p113, %p114
    %p116 = scmp.ne.s32.totalorder %s108, %s110
    %p117 = scmp.eq.s32.totalorder %s16, 1
    %p118 = por %p116, %p117
    %p119 = scmp.ne.s32.totalorder %s110, %s111
    %p120 = scmp.eq.s32.totalorder %s16, 0
    %p121 = por %p119, %p120
    %p122 = scmp.ne.s32.totalorder %s110, %s111
    %p123 = scmp.eq.s32.totalorder %s17, 1
    %p124 = por %p122, %p123
    %p126 = scmp.ne.s32.totalorder %s111, %s125
    %p127 = scmp.eq.s32.totalorder %s17, 0
    %p128 = por %p126, %p127
    %s129 = ssub.s32 %s11, %s18
    %p130 = scmp.eq.s32.totalorder %s129, 0
    %s132 = sadd.s32 %s131, 1
    %s133 = scalar_select %p130, %s131, %s132
    %p136 = pneg %p130
    %p137 = scmp.eq.s32.totalorder %s11, 1
    %p138 = por %p136, %p137
    %p139 = scmp.ne.s32.totalorder %s131, %s134
    %p140 = scmp.eq.s32.totalorder %s11, 0
    %p141 = por %p139, %p140
    %p142 = scmp.ne.s32.totalorder %s131, %s134
    %p143 = scmp.eq.s32.totalorder %s16, 1
    %p144 = por %p142, %p143
    %p145 = scmp.ne.s32.totalorder %s134, %s135
    %p146 = scmp.eq.s32.totalorder %s16, 0
    %p147 = por %p145, %p146
    %p148 = scmp.ne.s32.totalorder %s134, %s135
    %p149 = scmp.eq.s32.totalorder %s17, 1
    %p150 = por %p148, %p149
    %p152 = scmp.ne.s32.totalorder %s135, %s151
    %p153 = scmp.eq.s32.totalorder %s17, 0
    %p154 = por %p152, %p153
    %p155 = scmp.le.s32.totalorder 1, %s11
    %p156 = scmp.lt.s32.totalorder %s11, 3
    %p157 = pnand %p155, %p156
    %p158 = pneg %p157
    // Predicated region
    $region9: #{upproj_block_forward.1} parent=5 // pred_check
      _
    $region10: #{upproj_block_forward.1} parent=5 // pred_check_branch
      %160 = sbr.rel (%p157) target = $region12
    $region11: #{upproj_block_forward.1} parent=5 // pred_region
      %s161 = ssub.s32 %s11, 1
      // Predicated region
      $region13: #{upproj_block_forward.1} parent=11 // pred_check
        %p162 = pneg %p58
      $region14: #{upproj_block_forward.1} parent=11 // pred_check_branch
        %164 = sbr.rel (%p162) target = $region16
      $region15: #{upproj_block_forward.1} parent=11 // pred_region
        _
      $region16: #{upproj_block_forward.1} parent=11 // pred_fallthru
        _
      // Predicated region
      $region17: #{upproj_block_forward.1} parent=11 // pred_check
        %p165 = pneg %p79
      $region18: #{upproj_block_forward.1} parent=11 // pred_check_branch
        %167 = sbr.rel (%p165) target = $region20
      $region19: #{upproj_block_forward.1} parent=11 // pred_region
        _
      $region20: #{upproj_block_forward.1} parent=11 // pred_fallthru
        _
      // Predicated region
      $region21: #{upproj_block_forward.1} parent=11 // pred_check
        %p168 = pneg %p100
      $region22: #{upproj_block_forward.1} parent=11 // pred_check_branch
        %170 = sbr.rel (%p168) target = $region24
      $region23: #{upproj_block_forward.1} parent=11 // pred_region
        _
      $region24: #{upproj_block_forward.1} parent=11 // pred_fallthru
        _
      // Predicated region
      $region25: #{upproj_block_forward.1} parent=11 // pred_check
        %p171 = pneg %p121
      $region26: #{upproj_block_forward.1} parent=11 // pred_check_branch
        %173 = sbr.rel (%p171) target = $region28
      $region27: #{upproj_block_forward.1} parent=11 // pred_region
        _
      $region28: #{upproj_block_forward.1} parent=11 // pred_fallthru
        _
    $region12: #{upproj_block_forward.1} parent=5 // pred_fallthru
      _
    %p174 = scmp.lt.s32.totalorder %s11, 2
    // Predicated region
    $region29: #{upproj_block_forward.1} parent=5 // pred_check
      %p175 = pneg %p174
    $region30: #{upproj_block_forward.1} parent=5 // pred_check_branch
      %177 = sbr.rel (%p175) target = $region32
    $region31: #{upproj_block_forward.1} parent=5 // pred_region
      // Predicated region
      $region33: #{upproj_block_forward.1} parent=31 // pred_check
        %p178 = pneg %p31
      $region34: #{upproj_block_forward.1} parent=31 // pred_check_branch
        %180 = sbr.rel (%p178) target = $region36
      $region35: #{upproj_block_forward.1} parent=31 // pred_region
        %p181 = scmp.lt.s32.totalorder %s11, 1
        %s182 = scalar_select %p181, %s11, 1
        %s183 = smul.addr %s182, 54
        %s184 = smul.addr %s183, 8
        %s185 = scalar_lea.vmem %s0, %s184
      $region36: #{upproj_block_forward.1} parent=31 // pred_fallthru
        _
    $region32: #{upproj_block_forward.1} parent=5 // pred_fallthru
      _
    %p186 = scmp.le.s32.totalorder 1, %s11
    %p187 = scmp.lt.s32.totalorder %s11, 3
    %p188 = pnand %p186, %p187
    %p189 = pneg %p188
    // Predicated region
    $region37: #{upproj_block_forward.1} parent=5 // pred_check
      _
    $region38: #{upproj_block_forward.1} parent=5 // pred_check_branch
      %191 = sbr.rel (%p188) target = $region40
    $region39: #{upproj_block_forward.1} parent=5 // pred_region
      %s192 = ssub.s32 %s11, 1
      %p193 = scmp.lt.s32.totalorder %s16, 1
      %s194 = scalar_select %p193, %s16, 1
      %s195 = smul.addr %s194, 54
      %s196 = smul.addr %s195, 8
      %s197 = scalar_lea.vmem %s0, %s196
      %p198 = pneg %p37
      %p199 = pneg %p34
      %p200 = pneg %p58
      %p201 = pneg %p55
      %p202 = pneg %p79
      %p203 = pneg %p76
      %p204 = pneg %p100
      %p205 = pneg %p97
      %p206 = pneg %p121
      %p207 = pneg %p118
      %p208 = pneg %p147
      %p209 = pneg %p144
      %p210 = scmp.lt.s32.totalorder %s16, 1
      %s211 = scalar_select %p210, %s16, 1
      %s212 = smul.addr %s211, 32
      %s213 = smul.addr %s212, 8
      %s214 = scalar_lea.vmem %s5, %s213
      %p215 = scmp.lt.s32.totalorder %s16, 1
      %s216 = scalar_select %p215, %s16, 1
      %s217 = smul.addr %s216, 54
      %s218 = smul.addr %s217, 8
      %s219 = scalar_lea.vmem %s0, %s218
      %p220 = scmp.lt.s32.totalorder %s16, 1
      %s221 = scalar_select %p220, %s16, 1
      %s222 = smul.addr %s221, 32
      %s223 = smul.addr %s222, 8
      %s224 = scalar_lea.vmem %s5, %s223
      %v225 = vld [vmem:[%s219] sm:$0xff]
      %v226 = vld [vmem:[%s219 + $0x8] sm:$0xff]
      %v227 = vld [vmem:[%s219 + $0x18] sm:$0xff]
      %v228 = vld [vmem:[%s219 + $0x20] sm:$0xff]
      %v229 = vld [vmem:[%s219 + $0x30] sm:$0xff]
      %v230 = vld [vmem:[%s219 + $0x38] sm:$0xff]
      %v231 = vld [vmem:[%s219 + $0x48] sm:$0xff]
      %v232 = vld [vmem:[%s219 + $0x50] sm:$0xff]
      %v233 = vld [vmem:[%s219 + $0x60] sm:$0xff]
      %v234 = vld [vmem:[%s219 + $0x68] sm:$0xff]
      %v235 = vld [vmem:[%s219 + $0x78] sm:$0xff]
      %v236 = vld [vmem:[%s219 + $0x80] sm:$0xff]
      %v237 = vld [vmem:[%s219 + $0x90] sm:$0xff]
      %v238 = vld [vmem:[%s219 + $0x98] sm:$0xff]
      %v239 = vld [vmem:[%s219 + $0xa8] sm:$0xff]
      %v240 = vld [vmem:[%s219 + $0xb0] sm:$0xff]
      %v241 = vld [vmem:[%s219 + $0xc0] sm:$0xff]
      %v242 = vld [vmem:[%s219 + $0xc8] sm:$0xff]
      %v243 = vld [vmem:[%s219 + $0xd8] sm:$0xff]
      %v244 = vld [vmem:[%s219 + $0xe0] sm:$0xff]
      %v245 = vld [vmem:[%s219 + $0xf0] sm:$0xff]
      %v246 = vld [vmem:[%s219 + $0xf8] sm:$0xff]
      %v247 = vld [vmem:[%s219 + $0x108] sm:$0xff]
      %v248 = vld [vmem:[%s219 + $0x110] sm:$0xff]
      %v249 = vld [vmem:[%s219 + $0x120] sm:$0xff]
      %v250 = vld [vmem:[%s219 + $0x128] sm:$0xff]
      %v251 = vld [vmem:[%s219 + $0x138] sm:$0xff]
      %v252 = vld [vmem:[%s219 + $0x140] sm:$0xff]
      %v253 = vld [vmem:[%s219 + $0x150] sm:$0xff]
      %v254 = vld [vmem:[%s219 + $0x158] sm:$0xff]
      %v255 = vld [vmem:[%s219 + $0x168] sm:$0xff]
      %v256 = vld [vmem:[%s219 + $0x170] sm:$0xff]
      %v257 = vld [vmem:[%s219 + $0x1] sm:$0xff]
      %v258 = vld [vmem:[%s219 + $0x9] sm:$0xff]
      %v259 = vld [vmem:[%s219 + $0x19] sm:$0xff]
      %v260 = vld [vmem:[%s219 + $0x21] sm:$0xff]
      %v261 = vld [vmem:[%s219 + $0x31] sm:$0xff]
      %v262 = vld [vmem:[%s219 + $0x39] sm:$0xff]
      %v263 = vld [vmem:[%s219 + $0x49] sm:$0xff]
      %v264 = vld [vmem:[%s219 + $0x51] sm:$0xff]
      %v265 = vld [vmem:[%s219 + $0x61] sm:$0xff]
      %v266 = vld [vmem:[%s219 + $0x69] sm:$0xff]
      %v267 = vld [vmem:[%s219 + $0x79] sm:$0xff]
      %v268 = vld [vmem:[%s219 + $0x81] sm:$0xff]
      %v269 = vld [vmem:[%s219 + $0x91] sm:$0xff]
      %v270 = vld [vmem:[%s219 + $0x99] sm:$0xff]
      %v271 = vld [vmem:[%s219 + $0xa9] sm:$0xff]
      %v272 = vld [vmem:[%s219 + $0xb1] sm:$0xff]
      %v273 = vld [vmem:[%s219 + $0xc1] sm:$0xff]
      %v274 = vld [vmem:[%s219 + $0xc9] sm:$0xff]
      %v275 = vld [vmem:[%s219 + $0xd9] sm:$0xff]
      %v276 = vld [vmem:[%s219 + $0xe1] sm:$0xff]
      %v277 = vld [vmem:[%s219 + $0xf1] sm:$0xff]
      %v278 = vld [vmem:[%s219 + $0xf9] sm:$0xff]
      %v279 = vld [vmem:[%s219 + $0x109] sm:$0xff]
      %v280 = vld [vmem:[%s219 + $0x111] sm:$0xff]
      %v281 = vld [vmem:[%s219 + $0x121] sm:$0xff]
      %v282 = vld [vmem:[%s219 + $0x129] sm:$0xff]
      %v283 = vld [vmem:[%s219 + $0x139] sm:$0xff]
      %v284 = vld [vmem:[%s219 + $0x141] sm:$0xff]
      %v285 = vld [vmem:[%s219 + $0x151] sm:$0xff]
      %v286 = vld [vmem:[%s219 + $0x159] sm:$0xff]
      %v287 = vld [vmem:[%s219 + $0x169] sm:$0xff]
      %v288 = vld [vmem:[%s219 + $0x171] sm:$0xff]
      %v289 = vld [vmem:[%s219 + $0x2] sm:$0xff]
      %v290 = vld [vmem:[%s219 + $0xa] sm:$0xff]
      %v291 = vld [vmem:[%s219 + $0x1a] sm:$0xff]
      %v292 = vld [vmem:[%s219 + $0x22] sm:$0xff]
      %v293 = vld [vmem:[%s219 + $0x32] sm:$0xff]
      %v294 = vld [vmem:[%s219 + $0x3a] sm:$0xff]
      %v295 = vld [vmem:[%s219 + $0x4a] sm:$0xff]
      %v296 = vld [vmem:[%s219 + $0x52] sm:$0xff]
      %v297 = vld [vmem:[%s219 + $0x62] sm:$0xff]
      %v298 = vld [vmem:[%s219 + $0x6a] sm:$0xff]
      %v299 = vld [vmem:[%s219 + $0x7a] sm:$0xff]
      %v300 = vld [vmem:[%s219 + $0x82] sm:$0xff]
      %v301 = vld [vmem:[%s219 + $0x92] sm:$0xff]
      %v302 = vld [vmem:[%s219 + $0x9a] sm:$0xff]
      %v303 = vld [vmem:[%s219 + $0xaa] sm:$0xff]
      %v304 = vld [vmem:[%s219 + $0xb2] sm:$0xff]
      %v305 = vld [vmem:[%s219 + $0xc2] sm:$0xff]
      %v306 = vld [vmem:[%s219 + $0xca] sm:$0xff]
      %v307 = vld [vmem:[%s219 + $0xda] sm:$0xff]
      %v308 = vld [vmem:[%s219 + $0xe2] sm:$0xff]
      %v309 = vld [vmem:[%s219 + $0xf2] sm:$0xff]
      %v310 = vld [vmem:[%s219 + $0xfa] sm:$0xff]
      %v311 = vld [vmem:[%s219 + $0x10a] sm:$0xff]
      %v312 = vld [vmem:[%s219 + $0x112] sm:$0xff]
      %v313 = vld [vmem:[%s219 + $0x122] sm:$0xff]
      %v314 = vld [vmem:[%s219 + $0x12a] sm:$0xff]
      %v315 = vld [vmem:[%s219 + $0x13a] sm:$0xff]
      %v316 = vld [vmem:[%s219 + $0x142] sm:$0xff]
      %v317 = vld [vmem:[%s219 + $0x152] sm:$0xff]
      %v318 = vld [vmem:[%s219 + $0x15a] sm:$0xff]
      %v319 = vld [vmem:[%s219 + $0x16a] sm:$0xff]
      %v320 = vld [vmem:[%s219 + $0x172] sm:$0xff]
      %s321 = scalar_lea.vmem %s219, 24
      %v322 = vld [vmem:[%s321] sm:$0xff]
      %v323 = vld [vmem:[%s321 + $0x8] sm:$0xff]
      %v324 = vld [vmem:[%s321 + $0x18] sm:$0xff]
      %v325 = vld [vmem:[%s321 + $0x20] sm:$0xff]
      %v326 = vld [vmem:[%s321 + $0x30] sm:$0xff]
      %v327 = vld [vmem:[%s321 + $0x38] sm:$0xff]
      %v328 = vld [vmem:[%s321 + $0x48] sm:$0xff]
      %v329 = vld [vmem:[%s321 + $0x50] sm:$0xff]
      %v330 = vld [vmem:[%s321 + $0x60] sm:$0xff]
      %v331 = vld [vmem:[%s321 + $0x68] sm:$0xff]
      %v332 = vld [vmem:[%s321 + $0x78] sm:$0xff]
      %v333 = vld [vmem:[%s321 + $0x80] sm:$0xff]
      %v334 = vld [vmem:[%s321 + $0x90] sm:$0xff]
      %v335 = vld [vmem:[%s321 + $0x98] sm:$0xff]
      %v336 = vld [vmem:[%s321 + $0xa8] sm:$0xff]
      %v337 = vld [vmem:[%s321 + $0xb0] sm:$0xff]
      %v338 = vld [vmem:[%s321 + $0xc0] sm:$0xff]
      %v339 = vld [vmem:[%s321 + $0xc8] sm:$0xff]
      %v340 = vld [vmem:[%s321 + $0xd8] sm:$0xff]
      %v341 = vld [vmem:[%s321 + $0xe0] sm:$0xff]
      %v342 = vld [vmem:[%s321 + $0xf0] sm:$0xff]
      %v343 = vld [vmem:[%s321 + $0xf8] sm:$0xff]
      %v344 = vld [vmem:[%s321 + $0x108] sm:$0xff]
      %v345 = vld [vmem:[%s321 + $0x110] sm:$0xff]
      %v346 = vld [vmem:[%s321 + $0x120] sm:$0xff]
      %v347 = vld [vmem:[%s321 + $0x128] sm:$0xff]
      %v348 = vld [vmem:[%s321 + $0x138] sm:$0xff]
      %v349 = vld [vmem:[%s321 + $0x140] sm:$0xff]
      %v350 = vld [vmem:[%s321 + $0x150] sm:$0xff]
      %v351 = vld [vmem:[%s321 + $0x158] sm:$0xff]
      %v352 = vld [vmem:[%s321 + $0x168] sm:$0xff]
      %v353 = vld [vmem:[%s321 + $0x170] sm:$0xff]
      %v354 = vld [vmem:[%s321 + $0x1] sm:$0xff]
      %v355 = vld [vmem:[%s321 + $0x9] sm:$0xff]
      %v356 = vld [vmem:[%s321 + $0x19] sm:$0xff]
      %v357 = vld [vmem:[%s321 + $0x21] sm:$0xff]
      %v358 = vld [vmem:[%s321 + $0x31] sm:$0xff]
      %v359 = vld [vmem:[%s321 + $0x39] sm:$0xff]
      %v360 = vld [vmem:[%s321 + $0x49] sm:$0xff]
      %v361 = vld [vmem:[%s321 + $0x51] sm:$0xff]
      %v362 = vld [vmem:[%s321 + $0x61] sm:$0xff]
      %v363 = vld [vmem:[%s321 + $0x69] sm:$0xff]
      %v364 = vld [vmem:[%s321 + $0x79] sm:$0xff]
      %v365 = vld [vmem:[%s321 + $0x81] sm:$0xff]
      %v366 = vld [vmem:[%s321 + $0x91] sm:$0xff]
      %v367 = vld [vmem:[%s321 + $0x99] sm:$0xff]
      %v368 = vld [vmem:[%s321 + $0xa9] sm:$0xff]
      %v369 = vld [vmem:[%s321 + $0xb1] sm:$0xff]
      %v370 = vld [vmem:[%s321 + $0xc1] sm:$0xff]
      %v371 = vld [vmem:[%s321 + $0xc9] sm:$0xff]
      %v372 = vld [vmem:[%s321 + $0xd9] sm:$0xff]
      %v373 = vld [vmem:[%s321 + $0xe1] sm:$0xff]
      %v374 = vld [vmem:[%s321 + $0xf1] sm:$0xff]
      %v375 = vld [vmem:[%s321 + $0xf9] sm:$0xff]
      %v376 = vld [vmem:[%s321 + $0x109] sm:$0xff]
      %v377 = vld [vmem:[%s321 + $0x111] sm:$0xff]
      %v378 = vld [vmem:[%s321 + $0x121] sm:$0xff]
      %v379 = vld [vmem:[%s321 + $0x129] sm:$0xff]
      %v380 = vld [vmem:[%s321 + $0x139] sm:$0xff]
      %v381 = vld [vmem:[%s321 + $0x141] sm:$0xff]
      %v382 = vld [vmem:[%s321 + $0x151] sm:$0xff]
      %v383 = vld [vmem:[%s321 + $0x159] sm:$0xff]
      %v384 = vld [vmem:[%s321 + $0x169] sm:$0xff]
      %v385 = vld [vmem:[%s321 + $0x171] sm:$0xff]
      %v386 = vld [vmem:[%s321 + $0x2] sm:$0xff]
      %v387 = vld [vmem:[%s321 + $0xa] sm:$0xff]
      %v388 = vld [vmem:[%s321 + $0x1a] sm:$0xff]
      %v389 = vld [vmem:[%s321 + $0x22] sm:$0xff]
      %v390 = vld [vmem:[%s321 + $0x32] sm:$0xff]
      %v391 = vld [vmem:[%s321 + $0x3a] sm:$0xff]
      %v392 = vld [vmem:[%s321 + $0x4a] sm:$0xff]
      %v393 = vld [vmem:[%s321 + $0x52] sm:$0xff]
      %v394 = vld [vmem:[%s321 + $0x62] sm:$0xff]
      %v395 = vld [vmem:[%s321 + $0x6a] sm:$0xff]
      %v396 = vld [vmem:[%s321 + $0x7a] sm:$0xff]
      %v397 = vld [vmem:[%s321 + $0x82] sm:$0xff]
      %v398 = vld [vmem:[%s321 + $0x92] sm:$0xff]
      %v399 = vld [vmem:[%s321 + $0x9a] sm:$0xff]
      %v400 = vld [vmem:[%s321 + $0xaa] sm:$0xff]
      %v401 = vld [vmem:[%s321 + $0xb2] sm:$0xff]
      %v402 = vld [vmem:[%s321 + $0xc2] sm:$0xff]
      %v403 = vld [vmem:[%s321 + $0xca] sm:$0xff]
      %v404 = vld [vmem:[%s321 + $0xda] sm:$0xff]
      %v405 = vld [vmem:[%s321 + $0xe2] sm:$0xff]
      %v406 = vld [vmem:[%s321 + $0xf2] sm:$0xff]
      %v407 = vld [vmem:[%s321 + $0xfa] sm:$0xff]
      %v408 = vld [vmem:[%s321 + $0x10a] sm:$0xff]
      %v409 = vld [vmem:[%s321 + $0x112] sm:$0xff]
      %v410 = vld [vmem:[%s321 + $0x122] sm:$0xff]
      %v411 = vld [vmem:[%s321 + $0x12a] sm:$0xff]
      %v412 = vld [vmem:[%s321 + $0x13a] sm:$0xff]
      %v413 = vld [vmem:[%s321 + $0x142] sm:$0xff]
      %v414 = vld [vmem:[%s321 + $0x152] sm:$0xff]
      %v415 = vld [vmem:[%s321 + $0x15a] sm:$0xff]
      %v416 = vld [vmem:[%s321 + $0x16a] sm:$0xff]
      %v417 = vld [vmem:[%s321 + $0x172] sm:$0xff]
      %s418 = scalar_lea.vmem %s219, 48
      %v419 = vld [vmem:[%s418] sm:$0xff]
      %v420 = vld [vmem:[%s418 + $0x8] sm:$0xff]
      %v421 = vld [vmem:[%s418 + $0x18] sm:$0xff]
      %v422 = vld [vmem:[%s418 + $0x20] sm:$0xff]
      %v423 = vld [vmem:[%s418 + $0x30] sm:$0xff]
      %v424 = vld [vmem:[%s418 + $0x38] sm:$0xff]
      %v425 = vld [vmem:[%s418 + $0x48] sm:$0xff]
      %v426 = vld [vmem:[%s418 + $0x50] sm:$0xff]
      %v427 = vld [vmem:[%s418 + $0x60] sm:$0xff]
      %v428 = vld [vmem:[%s418 + $0x68] sm:$0xff]
      %v429 = vld [vmem:[%s418 + $0x78] sm:$0xff]
      %v430 = vld [vmem:[%s418 + $0x80] sm:$0xff]
      %v431 = vld [vmem:[%s418 + $0x90] sm:$0xff]
      %v432 = vld [vmem:[%s418 + $0x98] sm:$0xff]
      %v433 = vld [vmem:[%s418 + $0xa8] sm:$0xff]
      %v434 = vld [vmem:[%s418 + $0xb0] sm:$0xff]
      %v435 = vld [vmem:[%s418 + $0xc0] sm:$0xff]
      %v436 = vld [vmem:[%s418 + $0xc8] sm:$0xff]
      %v437 = vld [vmem:[%s418 + $0xd8] sm:$0xff]
      %v438 = vld [vmem:[%s418 + $0xe0] sm:$0xff]
      %v439 = vld [vmem:[%s418 + $0xf0] sm:$0xff]
      %v440 = vld [vmem:[%s418 + $0xf8] sm:$0xff]
      %v441 = vld [vmem:[%s418 + $0x108] sm:$0xff]
      %v442 = vld [vmem:[%s418 + $0x110] sm:$0xff]
      %v443 = vld [vmem:[%s418 + $0x120] sm:$0xff]
      %v444 = vld [vmem:[%s418 + $0x128] sm:$0xff]
      %v445 = vld [vmem:[%s418 + $0x138] sm:$0xff]
      %v446 = vld [vmem:[%s418 + $0x140] sm:$0xff]
      %v447 = vld [vmem:[%s418 + $0x150] sm:$0xff]
      %v448 = vld [vmem:[%s418 + $0x158] sm:$0xff]
      %v449 = vld [vmem:[%s418 + $0x168] sm:$0xff]
      %v450 = vld [vmem:[%s418 + $0x170] sm:$0xff]
      %v451 = vld [vmem:[%s418 + $0x1] sm:$0xff]
      %v452 = vld [vmem:[%s418 + $0x9] sm:$0xff]
      %v453 = vld [vmem:[%s418 + $0x19] sm:$0xff]
      %v454 = vld [vmem:[%s418 + $0x21] sm:$0xff]
      %v455 = vld [vmem:[%s418 + $0x31] sm:$0xff]
      %v456 = vld [vmem:[%s418 + $0x39] sm:$0xff]
      %v457 = vld [vmem:[%s418 + $0x49] sm:$0xff]
      %v458 = vld [vmem:[%s418 + $0x51] sm:$0xff]
      %v459 = vld [vmem:[%s418 + $0x61] sm:$0xff]
      %v460 = vld [vmem:[%s418 + $0x69] sm:$0xff]
      %v461 = vld [vmem:[%s418 + $0x79] sm:$0xff]
      %v462 = vld [vmem:[%s418 + $0x81] sm:$0xff]
      %v463 = vld [vmem:[%s418 + $0x91] sm:$0xff]
      %v464 = vld [vmem:[%s418 + $0x99] sm:$0xff]
      %v465 = vld [vmem:[%s418 + $0xa9] sm:$0xff]
      %v466 = vld [vmem:[%s418 + $0xb1] sm:$0xff]
      %v467 = vld [vmem:[%s418 + $0xc1] sm:$0xff]
      %v468 = vld [vmem:[%s418 + $0xc9] sm:$0xff]
      %v469 = vld [vmem:[%s418 + $0xd9] sm:$0xff]
      %v470 = vld [vmem:[%s418 + $0xe1] sm:$0xff]
      %v471 = vld [vmem:[%s418 + $0xf1] sm:$0xff]
      %v472 = vld [vmem:[%s418 + $0xf9] sm:$0xff]
      %v473 = vld [vmem:[%s418 + $0x109] sm:$0xff]
      %v474 = vld [vmem:[%s418 + $0x111] sm:$0xff]
      %v475 = vld [vmem:[%s418 + $0x121] sm:$0xff]
      %v476 = vld [vmem:[%s418 + $0x129] sm:$0xff]
      %v477 = vld [vmem:[%s418 + $0x139] sm:$0xff]
      %v478 = vld [vmem:[%s418 + $0x141] sm:$0xff]
      %v479 = vld [vmem:[%s418 + $0x151] sm:$0xff]
      %v480 = vld [vmem:[%s418 + $0x159] sm:$0xff]
      %v481 = vld [vmem:[%s418 + $0x169] sm:$0xff]
      %v482 = vld [vmem:[%s418 + $0x171] sm:$0xff]
      %v483 = vld [vmem:[%s418 + $0x2] sm:$0xff]
      %v484 = vld [vmem:[%s418 + $0xa] sm:$0xff]
      %v485 = vld [vmem:[%s418 + $0x1a] sm:$0xff]
      %v486 = vld [vmem:[%s418 + $0x22] sm:$0xff]
      %v487 = vld [vmem:[%s418 + $0x32] sm:$0xff]
      %v488 = vld [vmem:[%s418 + $0x3a] sm:$0xff]
      %v489 = vld [vmem:[%s418 + $0x4a] sm:$0xff]
      %v490 = vld [vmem:[%s418 + $0x52] sm:$0xff]
      %v491 = vld [vmem:[%s418 + $0x62] sm:$0xff]
      %v492 = vld [vmem:[%s418 + $0x6a] sm:$0xff]
      %v493 = vld [vmem:[%s418 + $0x7a] sm:$0xff]
      %v494 = vld [vmem:[%s418 + $0x82] sm:$0xff]
      %v495 = vld [vmem:[%s418 + $0x92] sm:$0xff]
      %v496 = vld [vmem:[%s418 + $0x9a] sm:$0xff]
      %v497 = vld [vmem:[%s418 + $0xaa] sm:$0xff]
      %v498 = vld [vmem:[%s418 + $0xb2] sm:$0xff]
      %v499 = vld [vmem:[%s418 + $0xc2] sm:$0xff]
      %v500 = vld [vmem:[%s418 + $0xca] sm:$0xff]
      %v501 = vld [vmem:[%s418 + $0xda] sm:$0xff]
      %v502 = vld [vmem:[%s418 + $0xe2] sm:$0xff]
      %v503 = vld [vmem:[%s418 + $0xf2] sm:$0xff]
      %v504 = vld [vmem:[%s418 + $0xfa] sm:$0xff]
      %v505 = vld [vmem:[%s418 + $0x10a] sm:$0xff]
      %v506 = vld [vmem:[%s418 + $0x112] sm:$0xff]
      %v507 = vld [vmem:[%s418 + $0x122] sm:$0xff]
      %v508 = vld [vmem:[%s418 + $0x12a] sm:$0xff]
      %v509 = vld [vmem:[%s418 + $0x13a] sm:$0xff]
      %v510 = vld [vmem:[%s418 + $0x142] sm:$0xff]
      %v511 = vld [vmem:[%s418 + $0x152] sm:$0xff]
      %v512 = vld [vmem:[%s418 + $0x15a] sm:$0xff]
      %v513 = vld [vmem:[%s418 + $0x16a] sm:$0xff]
      %v514 = vld [vmem:[%s418 + $0x172] sm:$0xff]
      %547 = vrot.lane.b32.xlu0 %v257, 4
      %v548 = vpop.permute.xlu0 %547
      %549 = vrot.lane.b32.xlu0 %v258, 4
      %v550 = vpop.permute.xlu0 %549
      %551 = vrot.lane.b32.xlu0 %v259, 4
      %v552 = vpop.permute.xlu0 %551
      %553 = vrot.lane.b32.xlu0 %v260, 4
      %v554 = vpop.permute.xlu0 %553
      %555 = vrot.lane.b32.xlu0 %v261, 4
      %v556 = vpop.permute.xlu0 %555
      %557 = vrot.lane.b32.xlu0 %v262, 4
      %v558 = vpop.permute.xlu0 %557
      %559 = vrot.lane.b32.xlu0 %v263, 4
      %v560 = vpop.permute.xlu0 %559
      %561 = vrot.lane.b32.xlu0 %v264, 4
      %v562 = vpop.permute.xlu0 %561
      %563 = vrot.lane.b32.xlu0 %v265, 4
      %v564 = vpop.permute.xlu0 %563
      %565 = vrot.lane.b32.xlu0 %v266, 4
      %v566 = vpop.permute.xlu0 %565
      %567 = vrot.lane.b32.xlu0 %v267, 4
      %v568 = vpop.permute.xlu0 %567
      %569 = vrot.lane.b32.xlu0 %v268, 4
      %v570 = vpop.permute.xlu0 %569
      %571 = vrot.lane.b32.xlu0 %v269, 4
      %v572 = vpop.permute.xlu0 %571
      %573 = vrot.lane.b32.xlu0 %v270, 4
      %v574 = vpop.permute.xlu0 %573
      %575 = vrot.lane.b32.xlu0 %v271, 4
      %v576 = vpop.permute.xlu0 %575
      %577 = vrot.lane.b32.xlu0 %v272, 4
      %v578 = vpop.permute.xlu0 %577
      %579 = vrot.lane.b32.xlu0 %v273, 4
      %v580 = vpop.permute.xlu0 %579
      %581 = vrot.lane.b32.xlu0 %v274, 4
      %v582 = vpop.permute.xlu0 %581
      %583 = vrot.lane.b32.xlu0 %v275, 4
      %v584 = vpop.permute.xlu0 %583
      %585 = vrot.lane.b32.xlu0 %v276, 4
      %v586 = vpop.permute.xlu0 %585
      %587 = vrot.lane.b32.xlu0 %v277, 4
      %v588 = vpop.permute.xlu0 %587
      %589 = vrot.lane.b32.xlu0 %v278, 4
      %v590 = vpop.permute.xlu0 %589
      %591 = vrot.lane.b32.xlu0 %v279, 4
      %v592 = vpop.permute.xlu0 %591
      %593 = vrot.lane.b32.xlu0 %v280, 4
      %v594 = vpop.permute.xlu0 %593
      %595 = vrot.lane.b32.xlu0 %v281, 4
      %v596 = vpop.permute.xlu0 %595
      %597 = vrot.lane.b32.xlu0 %v282, 4
      %v598 = vpop.permute.xlu0 %597
      %599 = vrot.lane.b32.xlu0 %v283, 4
      %v600 = vpop.permute.xlu0 %599
      %601 = vrot.lane.b32.xlu0 %v284, 4
      %v602 = vpop.permute.xlu0 %601
      %603 = vrot.lane.b32.xlu0 %v285, 4
      %v604 = vpop.permute.xlu0 %603
      %605 = vrot.lane.b32.xlu0 %v286, 4
      %v606 = vpop.permute.xlu0 %605
      %607 = vrot.lane.b32.xlu0 %v287, 4
      %v608 = vpop.permute.xlu0 %607
      %609 = vrot.lane.b32.xlu0 %v288, 4
      %v610 = vpop.permute.xlu0 %609
      %675 = vrot.lane.b32.xlu0 %v289, 8
      %v676 = vpop.permute.xlu0 %675
      %677 = vrot.lane.b32.xlu0 %v290, 8
      %v678 = vpop.permute.xlu0 %677
      %679 = vrot.lane.b32.xlu0 %v291, 8
      %v680 = vpop.permute.xlu0 %679
      %681 = vrot.lane.b32.xlu0 %v292, 8
      %v682 = vpop.permute.xlu0 %681
      %683 = vrot.lane.b32.xlu0 %v293, 8
      %v684 = vpop.permute.xlu0 %683
      %685 = vrot.lane.b32.xlu0 %v294, 8
      %v686 = vpop.permute.xlu0 %685
      %687 = vrot.lane.b32.xlu0 %v295, 8
      %v688 = vpop.permute.xlu0 %687
      %689 = vrot.lane.b32.xlu0 %v296, 8
      %v690 = vpop.permute.xlu0 %689
      %691 = vrot.lane.b32.xlu0 %v297, 8
      %v692 = vpop.permute.xlu0 %691
      %693 = vrot.lane.b32.xlu0 %v298, 8
      %v694 = vpop.permute.xlu0 %693
      %695 = vrot.lane.b32.xlu0 %v299, 8
      %v696 = vpop.permute.xlu0 %695
      %697 = vrot.lane.b32.xlu0 %v300, 8
      %v698 = vpop.permute.xlu0 %697
      %699 = vrot.lane.b32.xlu0 %v301, 8
      %v700 = vpop.permute.xlu0 %699
      %701 = vrot.lane.b32.xlu0 %v302, 8
      %v702 = vpop.permute.xlu0 %701
      %703 = vrot.lane.b32.xlu0 %v303, 8
      %v704 = vpop.permute.xlu0 %703
      %705 = vrot.lane.b32.xlu0 %v304, 8
      %v706 = vpop.permute.xlu0 %705
      %707 = vrot.lane.b32.xlu0 %v305, 8
      %v708 = vpop.permute.xlu0 %707
      %709 = vrot.lane.b32.xlu0 %v306, 8
      %v710 = vpop.permute.xlu0 %709
      %711 = vrot.lane.b32.xlu0 %v307, 8
      %v712 = vpop.permute.xlu0 %711
      %713 = vrot.lane.b32.xlu0 %v308, 8
      %v714 = vpop.permute.xlu0 %713
      %715 = vrot.lane.b32.xlu0 %v309, 8
      %v716 = vpop.permute.xlu0 %715
      %717 = vrot.lane.b32.xlu0 %v310, 8
      %v718 = vpop.permute.xlu0 %717
      %719 = vrot.lane.b32.xlu0 %v311, 8
      %v720 = vpop.permute.xlu0 %719
      %721 = vrot.lane.b32.xlu0 %v312, 8
      %v722 = vpop.permute.xlu0 %721
      %723 = vrot.lane.b32.xlu0 %v313, 8
      %v724 = vpop.permute.xlu0 %723
      %725 = vrot.lane.b32.xlu0 %v314, 8
      %v726 = vpop.permute.xlu0 %725
      %727 = vrot.lane.b32.xlu0 %v315, 8
      %v728 = vpop.permute.xlu0 %727
      %729 = vrot.lane.b32.xlu0 %v316, 8
      %v730 = vpop.permute.xlu0 %729
      %731 = vrot.lane.b32.xlu0 %v317, 8
      %v732 = vpop.permute.xlu0 %731
      %733 = vrot.lane.b32.xlu0 %v318, 8
      %v734 = vpop.permute.xlu0 %733
      %735 = vrot.lane.b32.xlu0 %v319, 8
      %v736 = vpop.permute.xlu0 %735
      %737 = vrot.lane.b32.xlu0 %v320, 8
      %v738 = vpop.permute.xlu0 %737
      %803 = vrot.lane.b32.xlu0 %v322, 12
      %v804 = vpop.permute.xlu0 %803
      %805 = vrot.lane.b32.xlu0 %v323, 12
      %v806 = vpop.permute.xlu0 %805
      %807 = vrot.lane.b32.xlu0 %v324, 12
      %v808 = vpop.permute.xlu0 %807
      %809 = vrot.lane.b32.xlu0 %v325, 12
      %v810 = vpop.permute.xlu0 %809
      %811 = vrot.lane.b32.xlu0 %v326, 12
      %v812 = vpop.permute.xlu0 %811
      %813 = vrot.lane.b32.xlu0 %v327, 12
      %v814 = vpop.permute.xlu0 %813
      %815 = vrot.lane.b32.xlu0 %v328, 12
      %v816 = vpop.permute.xlu0 %815
      %817 = vrot.lane.b32.xlu0 %v329, 12
      %v818 = vpop.permute.xlu0 %817
      %819 = vrot.lane.b32.xlu0 %v330, 12
      %v820 = vpop.permute.xlu0 %819
      %821 = vrot.lane.b32.xlu0 %v331, 12
      %v822 = vpop.permute.xlu0 %821
      %823 = vrot.lane.b32.xlu0 %v332, 12
      %v824 = vpop.permute.xlu0 %823
      %825 = vrot.lane.b32.xlu0 %v333, 12
      %v826 = vpop.permute.xlu0 %825
      %827 = vrot.lane.b32.xlu0 %v334, 12
      %v828 = vpop.permute.xlu0 %827
      %829 = vrot.lane.b32.xlu0 %v335, 12
      %v830 = vpop.permute.xlu0 %829
      %831 = vrot.lane.b32.xlu0 %v336, 12
      %v832 = vpop.permute.xlu0 %831
      %833 = vrot.lane.b32.xlu0 %v337, 12
      %v834 = vpop.permute.xlu0 %833
      %835 = vrot.lane.b32.xlu0 %v338, 12
      %v836 = vpop.permute.xlu0 %835
      %837 = vrot.lane.b32.xlu0 %v339, 12
      %v838 = vpop.permute.xlu0 %837
      %839 = vrot.lane.b32.xlu0 %v340, 12
      %v840 = vpop.permute.xlu0 %839
      %841 = vrot.lane.b32.xlu0 %v341, 12
      %v842 = vpop.permute.xlu0 %841
      %843 = vrot.lane.b32.xlu0 %v342, 12
      %v844 = vpop.permute.xlu0 %843
      %845 = vrot.lane.b32.xlu0 %v343, 12
      %v846 = vpop.permute.xlu0 %845
      %847 = vrot.lane.b32.xlu0 %v344, 12
      %v848 = vpop.permute.xlu0 %847
      %849 = vrot.lane.b32.xlu0 %v345, 12
      %v850 = vpop.permute.xlu0 %849
      %851 = vrot.lane.b32.xlu0 %v346, 12
      %v852 = vpop.permute.xlu0 %851
      %853 = vrot.lane.b32.xlu0 %v347, 12
      %v854 = vpop.permute.xlu0 %853
      %855 = vrot.lane.b32.xlu0 %v348, 12
      %v856 = vpop.permute.xlu0 %855
      %857 = vrot.lane.b32.xlu0 %v349, 12
      %v858 = vpop.permute.xlu0 %857
      %859 = vrot.lane.b32.xlu0 %v350, 12
      %v860 = vpop.permute.xlu0 %859
      %861 = vrot.lane.b32.xlu0 %v351, 12
      %v862 = vpop.permute.xlu0 %861
      %863 = vrot.lane.b32.xlu0 %v352, 12
      %v864 = vpop.permute.xlu0 %863
      %865 = vrot.lane.b32.xlu0 %v353, 12
      %v866 = vpop.permute.xlu0 %865
      %931 = vrot.lane.b32.xlu0 %v354, 16
      %v932 = vpop.permute.xlu0 %931
      %933 = vrot.lane.b32.xlu0 %v355, 16
      %v934 = vpop.permute.xlu0 %933
      %935 = vrot.lane.b32.xlu0 %v356, 16
      %v936 = vpop.permute.xlu0 %935
      %937 = vrot.lane.b32.xlu0 %v357, 16
      %v938 = vpop.permute.xlu0 %937
      %939 = vrot.lane.b32.xlu0 %v358, 16
      %v940 = vpop.permute.xlu0 %939
      %941 = vrot.lane.b32.xlu0 %v359, 16
      %v942 = vpop.permute.xlu0 %941
      %943 = vrot.lane.b32.xlu0 %v360, 16
      %v944 = vpop.permute.xlu0 %943
      %945 = vrot.lane.b32.xlu0 %v361, 16
      %v946 = vpop.permute.xlu0 %945
      %947 = vrot.lane.b32.xlu0 %v362, 16
      %v948 = vpop.permute.xlu0 %947
      %949 = vrot.lane.b32.xlu0 %v363, 16
      %v950 = vpop.permute.xlu0 %949
      %951 = vrot.lane.b32.xlu0 %v364, 16
      %v952 = vpop.permute.xlu0 %951
      %953 = vrot.lane.b32.xlu0 %v365, 16
      %v954 = vpop.permute.xlu0 %953
      %955 = vrot.lane.b32.xlu0 %v366, 16
      %v956 = vpop.permute.xlu0 %955
      %957 = vrot.lane.b32.xlu0 %v367, 16
      %v958 = vpop.permute.xlu0 %957
      %959 = vrot.lane.b32.xlu0 %v368, 16
      %v960 = vpop.permute.xlu0 %959
      %961 = vrot.lane.b32.xlu0 %v369, 16
      %v962 = vpop.permute.xlu0 %961
      %963 = vrot.lane.b32.xlu0 %v370, 16
      %v964 = vpop.permute.xlu0 %963
      %965 = vrot.lane.b32.xlu0 %v371, 16
      %v966 = vpop.permute.xlu0 %965
      %967 = vrot.lane.b32.xlu0 %v372, 16
      %v968 = vpop.permute.xlu0 %967
      %969 = vrot.lane.b32.xlu0 %v373, 16
      %v970 = vpop.permute.xlu0 %969
      %971 = vrot.lane.b32.xlu0 %v374, 16
      %v972 = vpop.permute.xlu0 %971
      %973 = vrot.lane.b32.xlu0 %v375, 16
      %v974 = vpop.permute.xlu0 %973
      %975 = vrot.lane.b32.xlu0 %v376, 16
      %v976 = vpop.permute.xlu0 %975
      %977 = vrot.lane.b32.xlu0 %v377, 16
      %v978 = vpop.permute.xlu0 %977
      %979 = vrot.lane.b32.xlu0 %v378, 16
      %v980 = vpop.permute.xlu0 %979
      %981 = vrot.lane.b32.xlu0 %v379, 16
      %v982 = vpop.permute.xlu0 %981
      %983 = vrot.lane.b32.xlu0 %v380, 16
      %v984 = vpop.permute.xlu0 %983
      %985 = vrot.lane.b32.xlu0 %v381, 16
      %v986 = vpop.permute.xlu0 %985
      %987 = vrot.lane.b32.xlu0 %v382, 16
      %v988 = vpop.permute.xlu0 %987
      %989 = vrot.lane.b32.xlu0 %v383, 16
      %v990 = vpop.permute.xlu0 %989
      %991 = vrot.lane.b32.xlu0 %v384, 16
      %v992 = vpop.permute.xlu0 %991
      %993 = vrot.lane.b32.xlu0 %v385, 16
      %v994 = vpop.permute.xlu0 %993
      %1059 = vrot.lane.b32.xlu0 %v386, 20
      %v1060 = vpop.permute.xlu0 %1059
      %1061 = vrot.lane.b32.xlu0 %v387, 20
      %v1062 = vpop.permute.xlu0 %1061
      %1063 = vrot.lane.b32.xlu0 %v388, 20
      %v1064 = vpop.permute.xlu0 %1063
      %1065 = vrot.lane.b32.xlu0 %v389, 20
      %v1066 = vpop.permute.xlu0 %1065
      %1067 = vrot.lane.b32.xlu0 %v390, 20
      %v1068 = vpop.permute.xlu0 %1067
      %1069 = vrot.lane.b32.xlu0 %v391, 20
      %v1070 = vpop.permute.xlu0 %1069
      %1071 = vrot.lane.b32.xlu0 %v392, 20
      %v1072 = vpop.permute.xlu0 %1071
      %1073 = vrot.lane.b32.xlu0 %v393, 20
      %v1074 = vpop.permute.xlu0 %1073
      %1075 = vrot.lane.b32.xlu0 %v394, 20
      %v1076 = vpop.permute.xlu0 %1075
      %1077 = vrot.lane.b32.xlu0 %v395, 20
      %v1078 = vpop.permute.xlu0 %1077
      %1079 = vrot.lane.b32.xlu0 %v396, 20
      %v1080 = vpop.permute.xlu0 %1079
      %1081 = vrot.lane.b32.xlu0 %v397, 20
      %v1082 = vpop.permute.xlu0 %1081
      %1083 = vrot.lane.b32.xlu0 %v398, 20
      %v1084 = vpop.permute.xlu0 %1083
      %1085 = vrot.lane.b32.xlu0 %v399, 20
      %v1086 = vpop.permute.xlu0 %1085
      %1087 = vrot.lane.b32.xlu0 %v400, 20
      %v1088 = vpop.permute.xlu0 %1087
      %1089 = vrot.lane.b32.xlu0 %v401, 20
      %v1090 = vpop.permute.xlu0 %1089
      %1091 = vrot.lane.b32.xlu0 %v402, 20
      %v1092 = vpop.permute.xlu0 %1091
      %1093 = vrot.lane.b32.xlu0 %v403, 20
      %v1094 = vpop.permute.xlu0 %1093
      %1095 = vrot.lane.b32.xlu0 %v404, 20
      %v1096 = vpop.permute.xlu0 %1095
      %1097 = vrot.lane.b32.xlu0 %v405, 20
      %v1098 = vpop.permute.xlu0 %1097
      %1099 = vrot.lane.b32.xlu0 %v406, 20
      %v1100 = vpop.permute.xlu0 %1099
      %1101 = vrot.lane.b32.xlu0 %v407, 20
      %v1102 = vpop.permute.xlu0 %1101
      %1103 = vrot.lane.b32.xlu0 %v408, 20
      %v1104 = vpop.permute.xlu0 %1103
      %1105 = vrot.lane.b32.xlu0 %v409, 20
      %v1106 = vpop.permute.xlu0 %1105
      %1107 = vrot.lane.b32.xlu0 %v410, 20
      %v1108 = vpop.permute.xlu0 %1107
      %1109 = vrot.lane.b32.xlu0 %v411, 20
      %v1110 = vpop.permute.xlu0 %1109
      %1111 = vrot.lane.b32.xlu0 %v412, 20
      %v1112 = vpop.permute.xlu0 %1111
      %1113 = vrot.lane.b32.xlu0 %v413, 20
      %v1114 = vpop.permute.xlu0 %1113
      %1115 = vrot.lane.b32.xlu0 %v414, 20
      %v1116 = vpop.permute.xlu0 %1115
      %1117 = vrot.lane.b32.xlu0 %v415, 20
      %v1118 = vpop.permute.xlu0 %1117
      %1119 = vrot.lane.b32.xlu0 %v416, 20
      %v1120 = vpop.permute.xlu0 %1119
      %1121 = vrot.lane.b32.xlu0 %v417, 20
      %v1122 = vpop.permute.xlu0 %1121
      %1187 = vrot.lane.b32.xlu0 %v419, 24
      %v1188 = vpop.permute.xlu0 %1187
      %1189 = vrot.lane.b32.xlu0 %v420, 24
      %v1190 = vpop.permute.xlu0 %1189
      %1191 = vrot.lane.b32.xlu0 %v421, 24
      %v1192 = vpop.permute.xlu0 %1191
      %1193 = vrot.lane.b32.xlu0 %v422, 24
      %v1194 = vpop.permute.xlu0 %1193
      %1195 = vrot.lane.b32.xlu0 %v423, 24
      %v1196 = vpop.permute.xlu0 %1195
      %1197 = vrot.lane.b32.xlu0 %v424, 24
      %v1198 = vpop.permute.xlu0 %1197
      %1199 = vrot.lane.b32.xlu0 %v425, 24
      %v1200 = vpop.permute.xlu0 %1199
      %1201 = vrot.lane.b32.xlu0 %v426, 24
      %v1202 = vpop.permute.xlu0 %1201
      %1203 = vrot.lane.b32.xlu0 %v427, 24
      %v1204 = vpop.permute.xlu0 %1203
      %1205 = vrot.lane.b32.xlu0 %v428, 24
      %v1206 = vpop.permute.xlu0 %1205
      %1207 = vrot.lane.b32.xlu0 %v429, 24
      %v1208 = vpop.permute.xlu0 %1207
      %1209 = vrot.lane.b32.xlu0 %v430, 24
      %v1210 = vpop.permute.xlu0 %1209
      %1211 = vrot.lane.b32.xlu0 %v431, 24
      %v1212 = vpop.permute.xlu0 %1211
      %1213 = vrot.lane.b32.xlu0 %v432, 24
      %v1214 = vpop.permute.xlu0 %1213
      %1215 = vrot.lane.b32.xlu0 %v433, 24
      %v1216 = vpop.permute.xlu0 %1215
      %1217 = vrot.lane.b32.xlu0 %v434, 24
      %v1218 = vpop.permute.xlu0 %1217
      %1219 = vrot.lane.b32.xlu0 %v435, 24
      %v1220 = vpop.permute.xlu0 %1219
      %1221 = vrot.lane.b32.xlu0 %v436, 24
      %v1222 = vpop.permute.xlu0 %1221
      %1223 = vrot.lane.b32.xlu0 %v437, 24
      %v1224 = vpop.permute.xlu0 %1223
      %1225 = vrot.lane.b32.xlu0 %v438, 24
      %v1226 = vpop.permute.xlu0 %1225
      %1227 = vrot.lane.b32.xlu0 %v439, 24
      %v1228 = vpop.permute.xlu0 %1227
      %1229 = vrot.lane.b32.xlu0 %v440, 24
      %v1230 = vpop.permute.xlu0 %1229
      %1231 = vrot.lane.b32.xlu0 %v441, 24
      %v1232 = vpop.permute.xlu0 %1231
      %1233 = vrot.lane.b32.xlu0 %v442, 24
      %v1234 = vpop.permute.xlu0 %1233
      %1235 = vrot.lane.b32.xlu0 %v443, 24
      %v1236 = vpop.permute.xlu0 %1235
      %1237 = vrot.lane.b32.xlu0 %v444, 24
      %v1238 = vpop.permute.xlu0 %1237
      %1239 = vrot.lane.b32.xlu0 %v445, 24
      %v1240 = vpop.permute.xlu0 %1239
      %1241 = vrot.lane.b32.xlu0 %v446, 24
      %v1242 = vpop.permute.xlu0 %1241
      %1243 = vrot.lane.b32.xlu0 %v447, 24
      %v1244 = vpop.permute.xlu0 %1243
      %1245 = vrot.lane.b32.xlu0 %v448, 24
      %v1246 = vpop.permute.xlu0 %1245
      %1247 = vrot.lane.b32.xlu0 %v449, 24
      %v1248 = vpop.permute.xlu0 %1247
      %1249 = vrot.lane.b32.xlu0 %v450, 24
      %v1250 = vpop.permute.xlu0 %1249
      %1315 = vrot.lane.b32.xlu0 %v451, 28
      %v1316 = vpop.permute.xlu0 %1315
      %1317 = vrot.lane.b32.xlu0 %v452, 28
      %v1318 = vpop.permute.xlu0 %1317
      %1319 = vrot.lane.b32.xlu0 %v453, 28
      %v1320 = vpop.permute.xlu0 %1319
      %1321 = vrot.lane.b32.xlu0 %v454, 28
      %v1322 = vpop.permute.xlu0 %1321
      %1323 = vrot.lane.b32.xlu0 %v455, 28
      %v1324 = vpop.permute.xlu0 %1323
      %1325 = vrot.lane.b32.xlu0 %v456, 28
      %v1326 = vpop.permute.xlu0 %1325
      %1327 = vrot.lane.b32.xlu0 %v457, 28
      %v1328 = vpop.permute.xlu0 %1327
      %1329 = vrot.lane.b32.xlu0 %v458, 28
      %v1330 = vpop.permute.xlu0 %1329
      %1331 = vrot.lane.b32.xlu0 %v459, 28
      %v1332 = vpop.permute.xlu0 %1331
      %1333 = vrot.lane.b32.xlu0 %v460, 28
      %v1334 = vpop.permute.xlu0 %1333
      %1335 = vrot.lane.b32.xlu0 %v461, 28
      %v1336 = vpop.permute.xlu0 %1335
      %1337 = vrot.lane.b32.xlu0 %v462, 28
      %v1338 = vpop.permute.xlu0 %1337
      %1339 = vrot.lane.b32.xlu0 %v463, 28
      %v1340 = vpop.permute.xlu0 %1339
      %1341 = vrot.lane.b32.xlu0 %v464, 28
      %v1342 = vpop.permute.xlu0 %1341
      %1343 = vrot.lane.b32.xlu0 %v465, 28
      %v1344 = vpop.permute.xlu0 %1343
      %1345 = vrot.lane.b32.xlu0 %v466, 28
      %v1346 = vpop.permute.xlu0 %1345
      %1347 = vrot.lane.b32.xlu0 %v467, 28
      %v1348 = vpop.permute.xlu0 %1347
      %1349 = vrot.lane.b32.xlu0 %v468, 28
      %v1350 = vpop.permute.xlu0 %1349
      %1351 = vrot.lane.b32.xlu0 %v469, 28
      %v1352 = vpop.permute.xlu0 %1351
      %1353 = vrot.lane.b32.xlu0 %v470, 28
      %v1354 = vpop.permute.xlu0 %1353
      %1355 = vrot.lane.b32.xlu0 %v471, 28
      %v1356 = vpop.permute.xlu0 %1355
      %1357 = vrot.lane.b32.xlu0 %v472, 28
      %v1358 = vpop.permute.xlu0 %1357
      %1359 = vrot.lane.b32.xlu0 %v473, 28
      %v1360 = vpop.permute.xlu0 %1359
      %1361 = vrot.lane.b32.xlu0 %v474, 28
      %v1362 = vpop.permute.xlu0 %1361
      %1363 = vrot.lane.b32.xlu0 %v475, 28
      %v1364 = vpop.permute.xlu0 %1363
      %1365 = vrot.lane.b32.xlu0 %v476, 28
      %v1366 = vpop.permute.xlu0 %1365
      %1367 = vrot.lane.b32.xlu0 %v477, 28
      %v1368 = vpop.permute.xlu0 %1367
      %1369 = vrot.lane.b32.xlu0 %v478, 28
      %v1370 = vpop.permute.xlu0 %1369
      %1371 = vrot.lane.b32.xlu0 %v479, 28
      %v1372 = vpop.permute.xlu0 %1371
      %1373 = vrot.lane.b32.xlu0 %v480, 28
      %v1374 = vpop.permute.xlu0 %1373
      %1375 = vrot.lane.b32.xlu0 %v481, 28
      %v1376 = vpop.permute.xlu0 %1375
      %1377 = vrot.lane.b32.xlu0 %v482, 28
      %v1378 = vpop.permute.xlu0 %1377
      %1443 = vrot.lane.b32.xlu0 %v483, 32
      %v1444 = vpop.permute.xlu0 %1443
      %1445 = vrot.lane.b32.xlu0 %v484, 32
      %v1446 = vpop.permute.xlu0 %1445
      %1447 = vrot.lane.b32.xlu0 %v485, 32
      %v1448 = vpop.permute.xlu0 %1447
      %1449 = vrot.lane.b32.xlu0 %v486, 32
      %v1450 = vpop.permute.xlu0 %1449
      %1451 = vrot.lane.b32.xlu0 %v487, 32
      %v1452 = vpop.permute.xlu0 %1451
      %1453 = vrot.lane.b32.xlu0 %v488, 32
      %v1454 = vpop.permute.xlu0 %1453
      %1455 = vrot.lane.b32.xlu0 %v489, 32
      %v1456 = vpop.permute.xlu0 %1455
      %1457 = vrot.lane.b32.xlu0 %v490, 32
      %v1458 = vpop.permute.xlu0 %1457
      %1459 = vrot.lane.b32.xlu0 %v491, 32
      %v1460 = vpop.permute.xlu0 %1459
      %1461 = vrot.lane.b32.xlu0 %v492, 32
      %v1462 = vpop.permute.xlu0 %1461
      %1463 = vrot.lane.b32.xlu0 %v493, 32
      %v1464 = vpop.permute.xlu0 %1463
      %1465 = vrot.lane.b32.xlu0 %v494, 32
      %v1466 = vpop.permute.xlu0 %1465
      %1467 = vrot.lane.b32.xlu0 %v495, 32
      %v1468 = vpop.permute.xlu0 %1467
      %1469 = vrot.lane.b32.xlu0 %v496, 32
      %v1470 = vpop.permute.xlu0 %1469
      %1471 = vrot.lane.b32.xlu0 %v497, 32
      %v1472 = vpop.permute.xlu0 %1471
      %1473 = vrot.lane.b32.xlu0 %v498, 32
      %v1474 = vpop.permute.xlu0 %1473
      %1475 = vrot.lane.b32.xlu0 %v499, 32
      %v1476 = vpop.permute.xlu0 %1475
      %1477 = vrot.lane.b32.xlu0 %v500, 32
      %v1478 = vpop.permute.xlu0 %1477
      %1479 = vrot.lane.b32.xlu0 %v501, 32
      %v1480 = vpop.permute.xlu0 %1479
      %1481 = vrot.lane.b32.xlu0 %v502, 32
      %v1482 = vpop.permute.xlu0 %1481
      %1483 = vrot.lane.b32.xlu0 %v503, 32
      %v1484 = vpop.permute.xlu0 %1483
      %1485 = vrot.lane.b32.xlu0 %v504, 32
      %v1486 = vpop.permute.xlu0 %1485
      %1487 = vrot.lane.b32.xlu0 %v505, 32
      %v1488 = vpop.permute.xlu0 %1487
      %1489 = vrot.lane.b32.xlu0 %v506, 32
      %v1490 = vpop.permute.xlu0 %1489
      %1491 = vrot.lane.b32.xlu0 %v507, 32
      %v1492 = vpop.permute.xlu0 %1491
      %1493 = vrot.lane.b32.xlu0 %v508, 32
      %v1494 = vpop.permute.xlu0 %1493
      %1495 = vrot.lane.b32.xlu0 %v509, 32
      %v1496 = vpop.permute.xlu0 %1495
      %1497 = vrot.lane.b32.xlu0 %v510, 32
      %v1498 = vpop.permute.xlu0 %1497
      %1499 = vrot.lane.b32.xlu0 %v511, 32
      %v1500 = vpop.permute.xlu0 %1499
      %1501 = vrot.lane.b32.xlu0 %v512, 32
      %v1502 = vpop.permute.xlu0 %1501
      %1503 = vrot.lane.b32.xlu0 %v513, 32
      %v1504 = vpop.permute.xlu0 %1503
      %1505 = vrot.lane.b32.xlu0 %v514, 32
      %v1506 = vpop.permute.xlu0 %1505
      %vm1539 = vcmask 31744
      %v1540 = vsel %vm1539, %v225, %v548
      %v1541 = vsel %vm1539, %v226, %v550
      %v1542 = vsel %vm1539, %v227, %v552
      %v1543 = vsel %vm1539, %v228, %v554
      %v1544 = vsel %vm1539, %v229, %v556
      %v1545 = vsel %vm1539, %v230, %v558
      %v1546 = vsel %vm1539, %v231, %v560
      %v1547 = vsel %vm1539, %v232, %v562
      %v1548 = vsel %vm1539, %v233, %v564
      %v1549 = vsel %vm1539, %v234, %v566
      %v1550 = vsel %vm1539, %v235, %v568
      %v1551 = vsel %vm1539, %v236, %v570
      %v1552 = vsel %vm1539, %v237, %v572
      %v1553 = vsel %vm1539, %v238, %v574
      %v1554 = vsel %vm1539, %v239, %v576
      %v1555 = vsel %vm1539, %v240, %v578
      %v1556 = vsel %vm1539, %v241, %v580
      %v1557 = vsel %vm1539, %v242, %v582
      %v1558 = vsel %vm1539, %v243, %v584
      %v1559 = vsel %vm1539, %v244, %v586
      %v1560 = vsel %vm1539, %v245, %v588
      %v1561 = vsel %vm1539, %v246, %v590
      %v1562 = vsel %vm1539, %v247, %v592
      %v1563 = vsel %vm1539, %v248, %v594
      %v1564 = vsel %vm1539, %v249, %v596
      %v1565 = vsel %vm1539, %v250, %v598
      %v1566 = vsel %vm1539, %v251, %v600
      %v1567 = vsel %vm1539, %v252, %v602
      %v1568 = vsel %vm1539, %v253, %v604
      %v1569 = vsel %vm1539, %v254, %v606
      %v1570 = vsel %vm1539, %v255, %v608
      %v1571 = vsel %vm1539, %v256, %v610
      %vm1572 = vcmask 64512
      %v1573 = vsel %vm1572, %v1540, %v676
      %v1574 = vsel %vm1572, %v1541, %v678
      %v1575 = vsel %vm1572, %v1542, %v680
      %v1576 = vsel %vm1572, %v1543, %v682
      %v1577 = vsel %vm1572, %v1544, %v684
      %v1578 = vsel %vm1572, %v1545, %v686
      %v1579 = vsel %vm1572, %v1546, %v688
      %v1580 = vsel %vm1572, %v1547, %v690
      %v1581 = vsel %vm1572, %v1548, %v692
      %v1582 = vsel %vm1572, %v1549, %v694
      %v1583 = vsel %vm1572, %v1550, %v696
      %v1584 = vsel %vm1572, %v1551, %v698
      %v1585 = vsel %vm1572, %v1552, %v700
      %v1586 = vsel %vm1572, %v1553, %v702
      %v1587 = vsel %vm1572, %v1554, %v704
      %v1588 = vsel %vm1572, %v1555, %v706
      %v1589 = vsel %vm1572, %v1556, %v708
      %v1590 = vsel %vm1572, %v1557, %v710
      %v1591 = vsel %vm1572, %v1558, %v712
      %v1592 = vsel %vm1572, %v1559, %v714
      %v1593 = vsel %vm1572, %v1560, %v716
      %v1594 = vsel %vm1572, %v1561, %v718
      %v1595 = vsel %vm1572, %v1562, %v720
      %v1596 = vsel %vm1572, %v1563, %v722
      %v1597 = vsel %vm1572, %v1564, %v724
      %v1598 = vsel %vm1572, %v1565, %v726
      %v1599 = vsel %vm1572, %v1566, %v728
      %v1600 = vsel %vm1572, %v1567, %v730
      %v1601 = vsel %vm1572, %v1568, %v732
      %v1602 = vsel %vm1572, %v1569, %v734
      %v1603 = vsel %vm1572, %v1570, %v736
      %v1604 = vsel %vm1572, %v1571, %v738
      %vm1605 = vcmask 97280
      %v1606 = vsel %vm1605, %v1573, %v804
      %v1607 = vsel %vm1605, %v1574, %v806
      %v1608 = vsel %vm1605, %v1575, %v808
      %v1609 = vsel %vm1605, %v1576, %v810
      %v1610 = vsel %vm1605, %v1577, %v812
      %v1611 = vsel %vm1605, %v1578, %v814
      %v1612 = vsel %vm1605, %v1579, %v816
      %v1613 = vsel %vm1605, %v1580, %v818
      %v1614 = vsel %vm1605, %v1581, %v820
      %v1615 = vsel %vm1605, %v1582, %v822
      %v1616 = vsel %vm1605, %v1583, %v824
      %v1617 = vsel %vm1605, %v1584, %v826
      %v1618 = vsel %vm1605, %v1585, %v828
      %v1619 = vsel %vm1605, %v1586, %v830
      %v1620 = vsel %vm1605, %v1587, %v832
      %v1621 = vsel %vm1605, %v1588, %v834
      %v1622 = vsel %vm1605, %v1589, %v836
      %v1623 = vsel %vm1605, %v1590, %v838
      %v1624 = vsel %vm1605, %v1591, %v840
      %v1625 = vsel %vm1605, %v1592, %v842
      %v1626 = vsel %vm1605, %v1593, %v844
      %v1627 = vsel %vm1605, %v1594, %v846
      %v1628 = vsel %vm1605, %v1595, %v848
      %v1629 = vsel %vm1605, %v1596, %v850
      %v1630 = vsel %vm1605, %v1597, %v852
      %v1631 = vsel %vm1605, %v1598, %v854
      %v1632 = vsel %vm1605, %v1599, %v856
      %v1633 = vsel %vm1605, %v1600, %v858
      %v1634 = vsel %vm1605, %v1601, %v860
      %v1635 = vsel %vm1605, %v1602, %v862
      %v1636 = vsel %vm1605, %v1603, %v864
      %v1637 = vsel %vm1605, %v1604, %v866
      %vm1638 = vcmask 130048
      %v1639 = vsel %vm1638, %v1606, %v932
      %v1640 = vsel %vm1638, %v1607, %v934
      %v1641 = vsel %vm1638, %v1608, %v936
      %v1642 = vsel %vm1638, %v1609, %v938
      %v1643 = vsel %vm1638, %v1610, %v940
      %v1644 = vsel %vm1638, %v1611, %v942
      %v1645 = vsel %vm1638, %v1612, %v944
      %v1646 = vsel %vm1638, %v1613, %v946
      %v1647 = vsel %vm1638, %v1614, %v948
      %v1648 = vsel %vm1638, %v1615, %v950
      %v1649 = vsel %vm1638, %v1616, %v952
      %v1650 = vsel %vm1638, %v1617, %v954
      %v1651 = vsel %vm1638, %v1618, %v956
      %v1652 = vsel %vm1638, %v1619, %v958
      %v1653 = vsel %vm1638, %v1620, %v960
      %v1654 = vsel %vm1638, %v1621, %v962
      %v1655 = vsel %vm1638, %v1622, %v964
      %v1656 = vsel %vm1638, %v1623, %v966
      %v1657 = vsel %vm1638, %v1624, %v968
      %v1658 = vsel %vm1638, %v1625, %v970
      %v1659 = vsel %vm1638, %v1626, %v972
      %v1660 = vsel %vm1638, %v1627, %v974
      %v1661 = vsel %vm1638, %v1628, %v976
      %v1662 = vsel %vm1638, %v1629, %v978
      %v1663 = vsel %vm1638, %v1630, %v980
      %v1664 = vsel %vm1638, %v1631, %v982
      %v1665 = vsel %vm1638, %v1632, %v984
      %v1666 = vsel %vm1638, %v1633, %v986
      %v1667 = vsel %vm1638, %v1634, %v988
      %v1668 = vsel %vm1638, %v1635, %v990
      %v1669 = vsel %vm1638, %v1636, %v992
      %v1670 = vsel %vm1638, %v1637, %v994
      %vm1671 = vcmask 162816
      %v1672 = vsel %vm1671, %v1639, %v1060
      %v1673 = vsel %vm1671, %v1640, %v1062
      %v1674 = vsel %vm1671, %v1641, %v1064
      %v1675 = vsel %vm1671, %v1642, %v1066
      %v1676 = vsel %vm1671, %v1643, %v1068
      %v1677 = vsel %vm1671, %v1644, %v1070
      %v1678 = vsel %vm1671, %v1645, %v1072
      %v1679 = vsel %vm1671, %v1646, %v1074
      %v1680 = vsel %vm1671, %v1647, %v1076
      %v1681 = vsel %vm1671, %v1648, %v1078
      %v1682 = vsel %vm1671, %v1649, %v1080
      %v1683 = vsel %vm1671, %v1650, %v1082
      %v1684 = vsel %vm1671, %v1651, %v1084
      %v1685 = vsel %vm1671, %v1652, %v1086
      %v1686 = vsel %vm1671, %v1653, %v1088
      %v1687 = vsel %vm1671, %v1654, %v1090
      %v1688 = vsel %vm1671, %v1655, %v1092
      %v1689 = vsel %vm1671, %v1656, %v1094
      %v1690 = vsel %vm1671, %v1657, %v1096
      %v1691 = vsel %vm1671, %v1658, %v1098
      %v1692 = vsel %vm1671, %v1659, %v1100
      %v1693 = vsel %vm1671, %v1660, %v1102
      %v1694 = vsel %vm1671, %v1661, %v1104
      %v1695 = vsel %vm1671, %v1662, %v1106
      %v1696 = vsel %vm1671, %v1663, %v1108
      %v1697 = vsel %vm1671, %v1664, %v1110
      %v1698 = vsel %vm1671, %v1665, %v1112
      %v1699 = vsel %vm1671, %v1666, %v1114
      %v1700 = vsel %vm1671, %v1667, %v1116
      %v1701 = vsel %vm1671, %v1668, %v1118
      %v1702 = vsel %vm1671, %v1669, %v1120
      %v1703 = vsel %vm1671, %v1670, %v1122
      %vm1704 = vcmask 195584
      %v1705 = vsel %vm1704, %v1672, %v1188
      %v1706 = vsel %vm1704, %v1673, %v1190
      %v1707 = vsel %vm1704, %v1674, %v1192
      %v1708 = vsel %vm1704, %v1675, %v1194
      %v1709 = vsel %vm1704, %v1676, %v1196
      %v1710 = vsel %vm1704, %v1677, %v1198
      %v1711 = vsel %vm1704, %v1678, %v1200
      %v1712 = vsel %vm1704, %v1679, %v1202
      %v1713 = vsel %vm1704, %v1680, %v1204
      %v1714 = vsel %vm1704, %v1681, %v1206
      %v1715 = vsel %vm1704, %v1682, %v1208
      %v1716 = vsel %vm1704, %v1683, %v1210
      %v1717 = vsel %vm1704, %v1684, %v1212
      %v1718 = vsel %vm1704, %v1685, %v1214
      %v1719 = vsel %vm1704, %v1686, %v1216
      %v1720 = vsel %vm1704, %v1687, %v1218
      %v1721 = vsel %vm1704, %v1688, %v1220
      %v1722 = vsel %vm1704, %v1689, %v1222
      %v1723 = vsel %vm1704, %v1690, %v1224
      %v1724 = vsel %vm1704, %v1691, %v1226
      %v1725 = vsel %vm1704, %v1692, %v1228
      %v1726 = vsel %vm1704, %v1693, %v1230
      %v1727 = vsel %vm1704, %v1694, %v1232
      %v1728 = vsel %vm1704, %v1695, %v1234
      %v1729 = vsel %vm1704, %v1696, %v1236
      %v1730 = vsel %vm1704, %v1697, %v1238
      %v1731 = vsel %vm1704, %v1698, %v1240
      %v1732 = vsel %vm1704, %v1699, %v1242
      %v1733 = vsel %vm1704, %v1700, %v1244
      %v1734 = vsel %vm1704, %v1701, %v1246
      %v1735 = vsel %vm1704, %v1702, %v1248
      %v1736 = vsel %vm1704, %v1703, %v1250
      %vm1737 = vcmask 228352
      %v1738 = vsel %vm1737, %v1705, %v1316
      %v1739 = vsel %vm1737, %v1706, %v1318
      %v1740 = vsel %vm1737, %v1707, %v1320
      %v1741 = vsel %vm1737, %v1708, %v1322
      %v1742 = vsel %vm1737, %v1709, %v1324
      %v1743 = vsel %vm1737, %v1710, %v1326
      %v1744 = vsel %vm1737, %v1711, %v1328
      %v1745 = vsel %vm1737, %v1712, %v1330
      %v1746 = vsel %vm1737, %v1713, %v1332
      %v1747 = vsel %vm1737, %v1714, %v1334
      %v1748 = vsel %vm1737, %v1715, %v1336
      %v1749 = vsel %vm1737, %v1716, %v1338
      %v1750 = vsel %vm1737, %v1717, %v1340
      %v1751 = vsel %vm1737, %v1718, %v1342
      %v1752 = vsel %vm1737, %v1719, %v1344
      %v1753 = vsel %vm1737, %v1720, %v1346
      %v1754 = vsel %vm1737, %v1721, %v1348
      %v1755 = vsel %vm1737, %v1722, %v1350
      %v1756 = vsel %vm1737, %v1723, %v1352
      %v1757 = vsel %vm1737, %v1724, %v1354
      %v1758 = vsel %vm1737, %v1725, %v1356
      %v1759 = vsel %vm1737, %v1726, %v1358
      %v1760 = vsel %vm1737, %v1727, %v1360
      %v1761 = vsel %vm1737, %v1728, %v1362
      %v1762 = vsel %vm1737, %v1729, %v1364
      %v1763 = vsel %vm1737, %v1730, %v1366
      %v1764 = vsel %vm1737, %v1731, %v1368
      %v1765 = vsel %vm1737, %v1732, %v1370
      %v1766 = vsel %vm1737, %v1733, %v1372
      %v1767 = vsel %vm1737, %v1734, %v1374
      %v1768 = vsel %vm1737, %v1735, %v1376
      %v1769 = vsel %vm1737, %v1736, %v1378
      %vm1770 = vcmask 261120
      %v1771 = vsel %vm1770, %v1738, %v1444
      %v1772 = vsel %vm1770, %v1739, %v1446
      %v1773 = vsel %vm1770, %v1740, %v1448
      %v1774 = vsel %vm1770, %v1741, %v1450
      %v1775 = vsel %vm1770, %v1742, %v1452
      %v1776 = vsel %vm1770, %v1743, %v1454
      %v1777 = vsel %vm1770, %v1744, %v1456
      %v1778 = vsel %vm1770, %v1745, %v1458
      %v1779 = vsel %vm1770, %v1746, %v1460
      %v1780 = vsel %vm1770, %v1747, %v1462
      %v1781 = vsel %vm1770, %v1748, %v1464
      %v1782 = vsel %vm1770, %v1749, %v1466
      %v1783 = vsel %vm1770, %v1750, %v1468
      %v1784 = vsel %vm1770, %v1751, %v1470
      %v1785 = vsel %vm1770, %v1752, %v1472
      %v1786 = vsel %vm1770, %v1753, %v1474
      %v1787 = vsel %vm1770, %v1754, %v1476
      %v1788 = vsel %vm1770, %v1755, %v1478
      %v1789 = vsel %vm1770, %v1756, %v1480
      %v1790 = vsel %vm1770, %v1757, %v1482
      %v1791 = vsel %vm1770, %v1758, %v1484
      %v1792 = vsel %vm1770, %v1759, %v1486
      %v1793 = vsel %vm1770, %v1760, %v1488
      %v1794 = vsel %vm1770, %v1761, %v1490
      %v1795 = vsel %vm1770, %v1762, %v1492
      %v1796 = vsel %vm1770, %v1763, %v1494
      %v1797 = vsel %vm1770, %v1764, %v1496
      %v1798 = vsel %vm1770, %v1765, %v1498
      %v1799 = vsel %vm1770, %v1766, %v1500
      %v1800 = vsel %vm1770, %v1767, %v1502
      %v1801 = vsel %vm1770, %v1768, %v1504
      %v1802 = vsel %vm1770, %v1769, %v1506
      %v1803 = vld [vmem:[%s1] sm:$0xff]
      %v1804 = vld [vmem:[%s1 + $0x8] sm:$0xff]
      %v1805 = vld [vmem:[%s1 + $0x10] sm:$0xff]
      %v1806 = vld [vmem:[%s1 + $0x18] sm:$0xff]
      %v1807 = vld [vmem:[%s1 + $0x20] sm:$0xf]
      %v1808 = vld [vmem:[%s2] sm:$0x1]
      %v1810 = vlaneseq
      %v1811 = vshrl.u32 %v1810, 7
      %v1812 = vsub.s32 0, %v1811
      %v1813 = vrot.slane %v1808, %v1812
      %vm1815 = vcmask 293888
      %v1817 = vsel %vm1815, %v1771, 0
      %v1820 = vsel %vm1815, %v1772, 0
      %v1823 = vsel %vm1815, %v1773, 0
      %v1826 = vsel %vm1815, %v1774, 0
      %v1829 = vsel %vm1815, %v1775, 0
      %v1832 = vsel %vm1815, %v1776, 0
      %v1835 = vsel %vm1815, %v1777, 0
      %v1838 = vsel %vm1815, %v1778, 0
      %v1841 = vsel %vm1815, %v1779, 0
      %v1844 = vsel %vm1815, %v1780, 0
      %v1847 = vsel %vm1815, %v1781, 0
      %v1850 = vsel %vm1815, %v1782, 0
      %v1853 = vsel %vm1815, %v1783, 0
      %v1856 = vsel %vm1815, %v1784, 0
      %v1859 = vsel %vm1815, %v1785, 0
      %v1862 = vsel %vm1815, %v1786, 0
      %v1865 = vsel %vm1815, %v1787, 0
      %v1868 = vsel %vm1815, %v1788, 0
      %v1871 = vsel %vm1815, %v1789, 0
      %v1874 = vsel %vm1815, %v1790, 0
      %v1877 = vsel %vm1815, %v1791, 0
      %v1880 = vsel %vm1815, %v1792, 0
      %v1883 = vsel %vm1815, %v1793, 0
      %v1886 = vsel %vm1815, %v1794, 0
      %v1889 = vsel %vm1815, %v1795, 0
      %v1892 = vsel %vm1815, %v1796, 0
      %v1895 = vsel %vm1815, %v1797, 0
      %v1898 = vsel %vm1815, %v1798, 0
      %v1901 = vsel %vm1815, %v1799, 0
      %v1904 = vsel %vm1815, %v1800, 0
      %v1907 = vsel %vm1815, %v1801, 0
      %v1910 = vsel %vm1815, %v1802, 0
      %vm1912 = vcmask 1043456
      %v1914 = vsel %vm1912, %v1807, 0
      %1916 = vmatprep.subr.mxu0 0.0
      %1917 = vmatpush1.msra.mxu0 %v1803
      %1918 = vmatprep.subr.mxu0 0.0
      %1919 = vmatpush1.msra.mxu0 %v1804
      %1920 = vmatprep.subr.mxu0 0.0
      %1921 = vmatpush1.msra.mxu0 %v1805
      %1922 = vmatprep.subr.mxu0 0.0
      %1923 = vmatpush1.msra.mxu0 %v1806
      %1924 = vmatprep.subr.mxu0 0.0
      %1925 = vmatpush1.msra.mxu0 %v1914
      %1926 = vmatprep.subr.mxu0 0.0
      %1927 = vmatpush1.msra.mxu0 0.0
      %1928 = vmatprep.subr.mxu0 0.0
      %1929 = vmatpush1.msra.mxu0 0.0
      %1930 = vmatprep.subr.mxu0 0.0
      %1931 = vmatpush1.msra.mxu0 0.0
      %1932 = vmatprep.subr.mxu0 0.0
      %1933 = vmatpush1.msra.mxu0 0.0
      %1934 = vmatprep.subr.mxu0 0.0
      %1935 = vmatpush1.msra.mxu0 0.0
      %1936 = vmatprep.subr.mxu0 0.0
      %1937 = vmatpush1.msra.mxu0 0.0
      %1938 = vmatprep.subr.mxu0 0.0
      %1939 = vmatpush1.msra.mxu0 0.0
      %1940 = vmatprep.subr.mxu0 0.0
      %1941 = vmatpush1.msra.mxu0 0.0
      %1942 = vmatprep.subr.mxu0 0.0
      %1943 = vmatpush1.msra.mxu0 0.0
      %1944 = vmatprep.subr.mxu0 0.0
      %1945 = vmatpush1.msra.mxu0 0.0
      %1946 = vmatprep.subr.mxu0 0.0
      %1947 = vmatpush1.msra.mxu0 0.0
      %1948 = vmatprep.subr.mxu0 0.0
      %1949 = vmatpush1.msra.mxu0 0.0
      %1950 = vmatprep.subr.mxu0 0.0
      %1951 = vmatpush1.msra.mxu0 0.0
      %1952 = vmatprep.subr.mxu0 0.0
      %1953 = vmatpush1.msra.mxu0 0.0
      %1954 = vmatprep.subr.mxu0 0.0
      %1955 = vmatpush1.msra.mxu0 0.0
      %1956 = vmatprep.subr.mxu0 0.0
      %1957 = vmatpush1.msra.mxu0 0.0
      %1958 = vmatprep.subr.mxu0 0.0
      %1959 = vmatpush1.msra.mxu0 0.0
      %1960 = vmatprep.subr.mxu0 0.0
      %1961 = vmatpush1.msra.mxu0 0.0
      %1962 = vmatprep.subr.mxu0 0.0
      %1963 = vmatpush1.msra.mxu0 0.0
      %1964 = vmatprep.subr.mxu0 0.0
      %1965 = vmatpush1.msra.mxu0 0.0
      %1966 = vmatprep.subr.mxu0 0.0
      %1967 = vmatpush1.msra.mxu0 0.0
      %1968 = vmatprep.subr.mxu0 0.0
      %1969 = vmatpush1.msra.mxu0 0.0
      %1970 = vmatprep.subr.mxu0 0.0
      %1971 = vmatpush1.msra.mxu0 0.0
      %1972 = vmatprep.subr.mxu0 0.0
      %1973 = vmatpush1.msra.mxu0 0.0
      %1974 = vmatprep.subr.mxu0 0.0
      %1975 = vmatpush1.msra.mxu0 0.0
      %1976 = vmatprep.subr.mxu0 0.0
      %1977 = vmatpush1.msra.mxu0 0.0
      %1978 = vmatprep.subr.mxu0 0.0
      %1979 = vmatpush1.msra.mxu0 0.0
      %1980 = vmatprep.mubr.f32.mxu0 0.0
      %1981 = vmatmul.mubr.f32.gmra.mrb[0].mxu0 %v1817
      %v1982 = vpop.f32.mrb[0].mxu0
      %v1983 = vadd.f32 %v1813, %v1982
      %v1984 = vpop.f32.mrb[0].mxu0
      %1985 = vmatprep.mubr.f32.mxu0 0.0
      %1986 = vmatmul.mubr.f32.gmra.mrb[0].mxu0 %v1820
      %v1987 = vpop.f32.mrb[0].mxu0
      %v1988 = vadd.f32 %v1813, %v1987
      %v1989 = vpop.f32.mrb[0].mxu0
      %1990 = vmatprep.mubr.f32.mxu0 0.0
      %1991 = vmatmul.mubr.f32.gmra.mrb[0].mxu0 %v1823
      %v1992 = vpop.f32.mrb[0].mxu0
      %v1993 = vadd.f32 %v1813, %v1992
      %v1994 = vpop.f32.mrb[0].mxu0
      %1995 = vmatprep.mubr.f32.mxu0 0.0
      %1996 = vmatmul.mubr.f32.gmra.mrb[0].mxu0 %v1826
      %v1997 = vpop.f32.mrb[0].mxu0
      %v1998 = vadd.f32 %v1813, %v1997
      %v1999 = vpop.f32.mrb[0].mxu0
      %2000 = vmatprep.mubr.f32.mxu0 0.0
      %2001 = vmatmul.mubr.f32.gmra.mrb[0].mxu0 %v1829
      %v2002 = vpop.f32.mrb[0].mxu0
      %v2003 = vadd.f32 %v1813, %v2002
      %v2004 = vpop.f32.mrb[0].mxu0
      %2005 = vmatprep.mubr.f32.mxu0 0.0
      %2006 = vmatmul.mubr.f32.gmra.mrb[0].mxu0 %v1832
      %v2007 = vpop.f32.mrb[0].mxu0
      %v2008 = vadd.f32 %v1813, %v2007
      %v2009 = vpop.f32.mrb[0].mxu0
      %2010 = vmatprep.mubr.f32.mxu0 0.0
      %2011 = vmatmul.mubr.f32.gmra.mrb[0].mxu0 %v1835
      %v2012 = vpop.f32.mrb[0].mxu0
      %v2013 = vadd.f32 %v1813, %v2012
      %v2014 = vpop.f32.mrb[0].mxu0
      %2015 = vmatprep.mubr.f32.mxu0 0.0
      %2016 = vmatmul.mubr.f32.gmra.mrb[0].mxu0 %v1838
      %v2017 = vpop.f32.mrb[0].mxu0
      %v2018 = vadd.f32 %v1813, %v2017
      %v2019 = vpop.f32.mrb[0].mxu0
      %2020 = vmatprep.mubr.f32.mxu0 0.0
      %2021 = vmatmul.mubr.f32.gmra.mrb[0].mxu0 %v1841
      %v2022 = vpop.f32.mrb[0].mxu0
      %v2023 = vadd.f32 %v1813, %v2022
      %v2024 = vpop.f32.mrb[0].mxu0
      %2025 = vmatprep.mubr.f32.mxu0 0.0
      %2026 = vmatmul.mubr.f32.gmra.mrb[0].mxu0 %v1844
      %v2027 = vpop.f32.mrb[0].mxu0
      %v2028 = vadd.f32 %v1813, %v2027
      %v2029 = vpop.f32.mrb[0].mxu0
      %2030 = vmatprep.mubr.f32.mxu0 0.0
      %2031 = vmatmul.mubr.f32.gmra.mrb[0].mxu0 %v1847
      %v2032 = vpop.f32.mrb[0].mxu0
      %v2033 = vadd.f32 %v1813, %v2032
      %v2034 = vpop.f32.mrb[0].mxu0
      %2035 = vmatprep.mubr.f32.mxu0 0.0
      %2036 = vmatmul.mubr.f32.gmra.mrb[0].mxu0 %v1850
      %v2037 = vpop.f32.mrb[0].mxu0
      %v2038 = vadd.f32 %v1813, %v2037
      %v2039 = vpop.f32.mrb[0].mxu0
      %2040 = vmatprep.mubr.f32.mxu0 0.0
      %2041 = vmatmul.mubr.f32.gmra.mrb[0].mxu0 %v1853
      %v2042 = vpop.f32.mrb[0].mxu0
      %v2043 = vadd.f32 %v1813, %v2042
      %v2044 = vpop.f32.mrb[0].mxu0
      %2045 = vmatprep.mubr.f32.mxu0 0.0
      %2046 = vmatmul.mubr.f32.gmra.mrb[0].mxu0 %v1856
      %v2047 = vpop.f32.mrb[0].mxu0
      %v2048 = vadd.f32 %v1813, %v2047
      %v2049 = vpop.f32.mrb[0].mxu0
      %2050 = vmatprep.mubr.f32.mxu0 0.0
      %2051 = vmatmul.mubr.f32.gmra.mrb[0].mxu0 %v1859
      %v2052 = vpop.f32.mrb[0].mxu0
      %v2053 = vadd.f32 %v1813, %v2052
      %v2054 = vpop.f32.mrb[0].mxu0
      %2055 = vmatprep.mubr.f32.mxu0 0.0
      %2056 = vmatmul.mubr.f32.gmra.mrb[0].mxu0 %v1862
      %v2057 = vpop.f32.mrb[0].mxu0
      %v2058 = vadd.f32 %v1813, %v2057
      %v2059 = vpop.f32.mrb[0].mxu0
      %2060 = vmatprep.mubr.f32.mxu0 0.0
      %2061 = vmatmul.mubr.f32.gmra.mrb[0].mxu0 %v1865
      %v2062 = vpop.f32.mrb[0].mxu0
      %v2063 = vadd.f32 %v1813, %v2062
      %v2064 = vpop.f32.mrb[0].mxu0
      %2065 = vmatprep.mubr.f32.mxu0 0.0
      %2066 = vmatmul.mubr.f32.gmra.mrb[0].mxu0 %v1868
      %v2067 = vpop.f32.mrb[0].mxu0
      %v2068 = vadd.f32 %v1813, %v2067
      %v2069 = vpop.f32.mrb[0].mxu0
      %2070 = vmatprep.mubr.f32.mxu0 0.0
      %2071 = vmatmul.mubr.f32.gmra.mrb[0].mxu0 %v1871
      %v2072 = vpop.f32.mrb[0].mxu0
      %v2073 = vadd.f32 %v1813, %v2072
      %v2074 = vpop.f32.mrb[0].mxu0
      %2075 = vmatprep.mubr.f32.mxu0 0.0
      %2076 = vmatmul.mubr.f32.gmra.mrb[0].mxu0 %v1874
      %v2077 = vpop.f32.mrb[0].mxu0
      %v2078 = vadd.f32 %v1813, %v2077
      %v2079 = vpop.f32.mrb[0].mxu0
      %2080 = vmatprep.mubr.f32.mxu0 0.0
      %2081 = vmatmul.mubr.f32.gmra.mrb[0].mxu0 %v1877
      %v2082 = vpop.f32.mrb[0].mxu0
      %v2083 = vadd.f32 %v1813, %v2082
      %v2084 = vpop.f32.mrb[0].mxu0
      %2085 = vmatprep.mubr.f32.mxu0 0.0
      %2086 = vmatmul.mubr.f32.gmra.mrb[0].mxu0 %v1880
      %v2087 = vpop.f32.mrb[0].mxu0
      %v2088 = vadd.f32 %v1813, %v2087
      %v2089 = vpop.f32.mrb[0].mxu0
      %2090 = vmatprep.mubr.f32.mxu0 0.0
      %2091 = vmatmul.mubr.f32.gmra.mrb[0].mxu0 %v1883
      %v2092 = vpop.f32.mrb[0].mxu0
      %v2093 = vadd.f32 %v1813, %v2092
      %v2094 = vpop.f32.mrb[0].mxu0
      %2095 = vmatprep.mubr.f32.mxu0 0.0
      %2096 = vmatmul.mubr.f32.gmra.mrb[0].mxu0 %v1886
      %v2097 = vpop.f32.mrb[0].mxu0
      %v2098 = vadd.f32 %v1813, %v2097
      %v2099 = vpop.f32.mrb[0].mxu0
      %2100 = vmatprep.mubr.f32.mxu0 0.0
      %2101 = vmatmul.mubr.f32.gmra.mrb[0].mxu0 %v1889
      %v2102 = vpop.f32.mrb[0].mxu0
      %v2103 = vadd.f32 %v1813, %v2102
      %v2104 = vpop.f32.mrb[0].mxu0
      %2105 = vmatprep.mubr.f32.mxu0 0.0
      %2106 = vmatmul.mubr.f32.gmra.mrb[0].mxu0 %v1892
      %v2107 = vpop.f32.mrb[0].mxu0
      %v2108 = vadd.f32 %v1813, %v2107
      %v2109 = vpop.f32.mrb[0].mxu0
      %2110 = vmatprep.mubr.f32.mxu0 0.0
      %2111 = vmatmul.mubr.f32.gmra.mrb[0].mxu0 %v1895
      %v2112 = vpop.f32.mrb[0].mxu0
      %v2113 = vadd.f32 %v1813, %v2112
      %v2114 = vpop.f32.mrb[0].mxu0
      %2115 = vmatprep.mubr.f32.mxu0 0.0
      %2116 = vmatmul.mubr.f32.gmra.mrb[0].mxu0 %v1898
      %v2117 = vpop.f32.mrb[0].mxu0
      %v2118 = vadd.f32 %v1813, %v2117
      %v2119 = vpop.f32.mrb[0].mxu0
      %2120 = vmatprep.mubr.f32.mxu0 0.0
      %2121 = vmatmul.mubr.f32.gmra.mrb[0].mxu0 %v1901
      %v2122 = vpop.f32.mrb[0].mxu0
      %v2123 = vadd.f32 %v1813, %v2122
      %v2124 = vpop.f32.mrb[0].mxu0
      %2125 = vmatprep.mubr.f32.mxu0 0.0
      %2126 = vmatmul.mubr.f32.gmra.mrb[0].mxu0 %v1904
      %v2127 = vpop.f32.mrb[0].mxu0
      %v2128 = vadd.f32 %v1813, %v2127
      %v2129 = vpop.f32.mrb[0].mxu0
      %2130 = vmatprep.mubr.f32.mxu0 0.0
      %2131 = vmatmul.mubr.f32.gmra.mrb[0].mxu0 %v1907
      %v2132 = vpop.f32.mrb[0].mxu0
      %v2133 = vadd.f32 %v1813, %v2132
      %v2134 = vpop.f32.mrb[0].mxu0
      %2135 = vmatprep.mubr.f32.mxu0 0.0
      %2136 = vmatmul.mubr.f32.gmra.mrb[0].mxu0 %v1910
      %v2137 = vpop.f32.mrb[0].mxu0
      %v2138 = vadd.f32 %v1813, %v2137
      %v2139 = vpop.f32.mrb[0].mxu0
      %2140 = vdwg.mxu0
      %v2141 = vmax.f32 %v1983, 0.0
      %v2142 = vmax.f32 %v1988, 0.0
      %v2143 = vmax.f32 %v1993, 0.0
      %v2144 = vmax.f32 %v1998, 0.0
      %v2145 = vmax.f32 %v2003, 0.0
      %v2146 = vmax.f32 %v2008, 0.0
      %v2147 = vmax.f32 %v2013, 0.0
      %v2148 = vmax.f32 %v2018, 0.0
      %v2149 = vmax.f32 %v2023, 0.0
      %v2150 = vmax.f32 %v2028, 0.0
      %v2151 = vmax.f32 %v2033, 0.0
      %v2152 = vmax.f32 %v2038, 0.0
      %v2153 = vmax.f32 %v2043, 0.0
      %v2154 = vmax.f32 %v2048, 0.0
      %v2155 = vmax.f32 %v2053, 0.0
      %v2156 = vmax.f32 %v2058, 0.0
      %v2157 = vmax.f32 %v2063, 0.0
      %v2158 = vmax.f32 %v2068, 0.0
      %v2159 = vmax.f32 %v2073, 0.0
      %v2160 = vmax.f32 %v2078, 0.0
      %v2161 = vmax.f32 %v2083, 0.0
      %v2162 = vmax.f32 %v2088, 0.0
      %v2163 = vmax.f32 %v2093, 0.0
      %v2164 = vmax.f32 %v2098, 0.0
      %v2165 = vmax.f32 %v2103, 0.0
      %v2166 = vmax.f32 %v2108, 0.0
      %v2167 = vmax.f32 %v2113, 0.0
      %v2168 = vmax.f32 %v2118, 0.0
      %v2169 = vmax.f32 %v2123, 0.0
      %v2170 = vmax.f32 %v2128, 0.0
      %v2171 = vmax.f32 %v2133, 0.0
      %v2172 = vmax.f32 %v2138, 0.0
      %2173 = vst.msk [vmem:[#allocation2] sm:$0xff] %vm1572, 0.0
      %2174 = vst.msk [vmem:[#allocation2 + $0x8] sm:$0xff] %vm1572, 0.0
      %vm2175 = vcmask 58368
      %2176 = vst.msk [vmem:[#allocation2 + $0x10] sm:$0x3] %vm2175, 0.0
      %2177 = vst.msk [vmem:[#allocation2 + $0x18] sm:$0xff] %vm1572, 0.0
      %2178 = vst.msk [vmem:[#allocation2 + $0x20] sm:$0xff] %vm1572, 0.0
      %2179 = vst.msk [vmem:[#allocation2 + $0x28] sm:$0x3] %vm2175, 0.0
      %2180 = vst.msk [vmem:[#allocation2 + $0x30] sm:$0xff] %vm1572, 0.0
      %2181 = vst.msk [vmem:[#allocation2 + $0x38] sm:$0xff] %vm1572, 0.0
      %2182 = vst.msk [vmem:[#allocation2 + $0x40] sm:$0x3] %vm2175, 0.0
      %2183 = vst.msk [vmem:[#allocation2 + $0x48] sm:$0xff] %vm1572, 0.0
      %2184 = vst.msk [vmem:[#allocation2 + $0x50] sm:$0xff] %vm1572, 0.0
      %2185 = vst.msk [vmem:[#allocation2 + $0x58] sm:$0x3] %vm2175, 0.0
      %2186 = vst.msk [vmem:[#allocation2 + $0x60] sm:$0xff] %vm1572, 0.0
      %2187 = vst.msk [vmem:[#allocation2 + $0x68] sm:$0xff] %vm1572, 0.0
      %2188 = vst.msk [vmem:[#allocation2 + $0x70] sm:$0x3] %vm2175, 0.0
      %2189 = vst.msk [vmem:[#allocation2 + $0x78] sm:$0xff] %vm1572, 0.0
      %2190 = vst.msk [vmem:[#allocation2 + $0x80] sm:$0xff] %vm1572, 0.0
      %2191 = vst.msk [vmem:[#allocation2 + $0x88] sm:$0x3] %vm2175, 0.0
      %2192 = vst.msk [vmem:[#allocation2 + $0x90] sm:$0xff] %vm1572, 0.0
      %2193 = vst.msk [vmem:[#allocation2 + $0x98] sm:$0xff] %vm1572, 0.0
      %2194 = vst.msk [vmem:[#allocation2 + $0xa0] sm:$0x3] %vm2175, 0.0
      %2195 = vst.msk [vmem:[#allocation2 + $0xa8] sm:$0xff] %vm1572, 0.0
      %2196 = vst.msk [vmem:[#allocation2 + $0xb0] sm:$0xff] %vm1572, 0.0
      %2197 = vst.msk [vmem:[#allocation2 + $0xb8] sm:$0x3] %vm2175, 0.0
      %2198 = vst.msk [vmem:[#allocation2 + $0xc0] sm:$0xff] %vm1572, 0.0
      %2199 = vst.msk [vmem:[#allocation2 + $0xc8] sm:$0xff] %vm1572, 0.0
      %2200 = vst.msk [vmem:[#allocation2 + $0xd0] sm:$0x3] %vm2175, 0.0
      %2201 = vst.msk [vmem:[#allocation2 + $0xd8] sm:$0xff] %vm1572, 0.0
      %2202 = vst.msk [vmem:[#allocation2 + $0xe0] sm:$0xff] %vm1572, 0.0
      %2203 = vst.msk [vmem:[#allocation2 + $0xe8] sm:$0x3] %vm2175, 0.0
      %2204 = vst.msk [vmem:[#allocation2 + $0xf0] sm:$0xff] %vm1572, 0.0
      %2205 = vst.msk [vmem:[#allocation2 + $0xf8] sm:$0xff] %vm1572, 0.0
      %2206 = vst.msk [vmem:[#allocation2 + $0x100] sm:$0x3] %vm2175, 0.0
      %2207 = vst.msk [vmem:[#allocation2 + $0x108] sm:$0xff] %vm1572, 0.0
      %2208 = vst.msk [vmem:[#allocation2 + $0x110] sm:$0xff] %vm1572, 0.0
      %2209 = vst.msk [vmem:[#allocation2 + $0x118] sm:$0x3] %vm2175, 0.0
      %2210 = vst.msk [vmem:[#allocation2 + $0x120] sm:$0xff] %vm1572, 0.0
      %2211 = vst.msk [vmem:[#allocation2 + $0x128] sm:$0xff] %vm1572, 0.0
      %2212 = vst.msk [vmem:[#allocation2 + $0x130] sm:$0x3] %vm2175, 0.0
      %2213 = vst.msk [vmem:[#allocation2 + $0x138] sm:$0xff] %vm1572, 0.0
      %2214 = vst.msk [vmem:[#allocation2 + $0x140] sm:$0xff] %vm1572, 0.0
      %2215 = vst.msk [vmem:[#allocation2 + $0x148] sm:$0x3] %vm2175, 0.0
      %2216 = vst.msk [vmem:[#allocation2 + $0x150] sm:$0xff] %vm1572, 0.0
      %2217 = vst.msk [vmem:[#allocation2 + $0x158] sm:$0xff] %vm1572, 0.0
      %2218 = vst.msk [vmem:[#allocation2 + $0x160] sm:$0x3] %vm2175, 0.0
      %2219 = vst.msk [vmem:[#allocation2 + $0x168] sm:$0xff] %vm1572, 0.0
      %2220 = vst.msk [vmem:[#allocation2 + $0x170] sm:$0xff] %vm1572, 0.0
      %2221 = vst.msk [vmem:[#allocation2 + $0x178] sm:$0x3] %vm2175, 0.0
      %2222 = vst.msk [vmem:[#allocation2 + $0x180] sm:$0xff] %vm1572, 0.0
      %2223 = vst.msk [vmem:[#allocation2 + $0x188] sm:$0xff] %vm1572, 0.0
      %2224 = vst.msk [vmem:[#allocation2 + $0x190] sm:$0x3] %vm2175, 0.0
      %2225 = vst.msk [vmem:[#allocation2 + $0x198] sm:$0xff] %vm1572, 0.0
      %2226 = vst.msk [vmem:[#allocation2 + $0x1a0] sm:$0xff] %vm1572, 0.0
      %2227 = vst.msk [vmem:[#allocation2 + $0x1a8] sm:$0x3] %vm2175, 0.0
      %2228 = vst.msk [vmem:[#allocation2 + $0x1b0] sm:$0xff] %vm1572, 0.0
      %2229 = vst.msk [vmem:[#allocation2 + $0x1b8] sm:$0xff] %vm1572, 0.0
      %2230 = vst.msk [vmem:[#allocation2 + $0x1c0] sm:$0x3] %vm2175, 0.0
      %2231 = vst.msk [vmem:[#allocation2 + $0x1c8] sm:$0xff] %vm1572, 0.0
      %2232 = vst.msk [vmem:[#allocation2 + $0x1d0] sm:$0xff] %vm1572, 0.0
      %2233 = vst.msk [vmem:[#allocation2 + $0x1d8] sm:$0x3] %vm2175, 0.0
      %2234 = vst.msk [vmem:[#allocation2 + $0x1e0] sm:$0xff] %vm1572, 0.0
      %2235 = vst.msk [vmem:[#allocation2 + $0x1e8] sm:$0xff] %vm1572, 0.0
      %2236 = vst.msk [vmem:[#allocation2 + $0x1f0] sm:$0x3] %vm2175, 0.0
      %2237 = vst.msk [vmem:[#allocation2 + $0x1f8] sm:$0xff] %vm1572, 0.0
      %2238 = vst.msk [vmem:[#allocation2 + $0x200] sm:$0xff] %vm1572, 0.0
      %2239 = vst.msk [vmem:[#allocation2 + $0x208] sm:$0x3] %vm2175, 0.0
      %2240 = vst.msk [vmem:[#allocation2 + $0x210] sm:$0xff] %vm1572, 0.0
      %2241 = vst.msk [vmem:[#allocation2 + $0x218] sm:$0xff] %vm1572, 0.0
      %2242 = vst.msk [vmem:[#allocation2 + $0x220] sm:$0x3] %vm2175, 0.0
      %2243 = vst.msk [vmem:[#allocation2 + $0x228] sm:$0xff] %vm1572, 0.0
      %2244 = vst.msk [vmem:[#allocation2 + $0x230] sm:$0xff] %vm1572, 0.0
      %2245 = vst.msk [vmem:[#allocation2 + $0x238] sm:$0x3] %vm2175, 0.0
      %2246 = vst.msk [vmem:[#allocation2 + $0x240] sm:$0xff] %vm1572, 0.0
      %2247 = vst.msk [vmem:[#allocation2 + $0x248] sm:$0xff] %vm1572, 0.0
      %2248 = vst.msk [vmem:[#allocation2 + $0x250] sm:$0x3] %vm2175, 0.0
      %2249 = vst.msk [vmem:[#allocation2 + $0x258] sm:$0xff] %vm1572, 0.0
      %2250 = vst.msk [vmem:[#allocation2 + $0x260] sm:$0xff] %vm1572, 0.0
      %2251 = vst.msk [vmem:[#allocation2 + $0x268] sm:$0x3] %vm2175, 0.0
      %2252 = vst.msk [vmem:[#allocation2 + $0x270] sm:$0xff] %vm1572, 0.0
      %2253 = vst.msk [vmem:[#allocation2 + $0x278] sm:$0xff] %vm1572, 0.0
      %2254 = vst.msk [vmem:[#allocation2 + $0x280] sm:$0x3] %vm2175, 0.0
      %2255 = vst.msk [vmem:[#allocation2 + $0x288] sm:$0xff] %vm1572, 0.0
      %2256 = vst.msk [vmem:[#allocation2 + $0x290] sm:$0xff] %vm1572, 0.0
      %2257 = vst.msk [vmem:[#allocation2 + $0x298] sm:$0x3] %vm2175, 0.0
      %2258 = vst.msk [vmem:[#allocation2 + $0x2a0] sm:$0xff] %vm1572, 0.0
      %2259 = vst.msk [vmem:[#allocation2 + $0x2a8] sm:$0xff] %vm1572, 0.0
      %2260 = vst.msk [vmem:[#allocation2 + $0x2b0] sm:$0x3] %vm2175, 0.0
      %2261 = vst.msk [vmem:[#allocation2 + $0x2b8] sm:$0xff] %vm1572, 0.0
      %2262 = vst.msk [vmem:[#allocation2 + $0x2c0] sm:$0xff] %vm1572, 0.0
      %2263 = vst.msk [vmem:[#allocation2 + $0x2c8] sm:$0x3] %vm2175, 0.0
      %2264 = vst.msk [vmem:[#allocation2 + $0x2d0] sm:$0xff] %vm1572, 0.0
      %2265 = vst.msk [vmem:[#allocation2 + $0x2d8] sm:$0xff] %vm1572, 0.0
      %2266 = vst.msk [vmem:[#allocation2 + $0x2e0] sm:$0x3] %vm2175, 0.0
      %2267 = vst.msk [vmem:[#allocation2 + $0x2e8] sm:$0xff] %vm1572, 0.0
      %2268 = vst.msk [vmem:[#allocation2 + $0x2f0] sm:$0xff] %vm1572, 0.0
      %2269 = vst.msk [vmem:[#allocation2 + $0x2f8] sm:$0x3] %vm2175, 0.0
      %2270 = vst.msk [vmem:[#allocation2 + $0x300] sm:$0xff] %vm1572, 0.0
      %2271 = vst.msk [vmem:[#allocation2 + $0x308] sm:$0xff] %vm1572, 0.0
      %2272 = vst.msk [vmem:[#allocation2 + $0x310] sm:$0x3] %vm2175, 0.0
      %2273 = vst.msk [vmem:[#allocation2 + $0x318] sm:$0xff] %vm1572, 0.0
      %2274 = vst.msk [vmem:[#allocation2 + $0x320] sm:$0xff] %vm1572, 0.0
      %2275 = vst.msk [vmem:[#allocation2 + $0x328] sm:$0x3] %vm2175, 0.0
      %2276 = vst.msk [vmem:[#allocation2 + $0x330] sm:$0xff] %vm1572, 0.0
      %2277 = vst.msk [vmem:[#allocation2 + $0x338] sm:$0xff] %vm1572, 0.0
      %2278 = vst.msk [vmem:[#allocation2 + $0x340] sm:$0x3] %vm2175, 0.0
      %2279 = vst.msk [vmem:[#allocation2 + $0x348] sm:$0xff] %vm1572, 0.0
      %2280 = vst.msk [vmem:[#allocation2 + $0x350] sm:$0xff] %vm1572, 0.0
      %2281 = vst.msk [vmem:[#allocation2 + $0x358] sm:$0x3] %vm2175, 0.0
      %2282 = vst.msk [vmem:[#allocation2 + $0x360] sm:$0xff] %vm1572, 0.0
      %2283 = vst.msk [vmem:[#allocation2 + $0x368] sm:$0xff] %vm1572, 0.0
      %2284 = vst.msk [vmem:[#allocation2 + $0x370] sm:$0x3] %vm2175, 0.0
      %2285 = vst.msk [vmem:[#allocation2 + $0x378] sm:$0xff] %vm1572, 0.0
      %2286 = vst.msk [vmem:[#allocation2 + $0x380] sm:$0xff] %vm1572, 0.0
      %2287 = vst.msk [vmem:[#allocation2 + $0x388] sm:$0x3] %vm2175, 0.0
      %2288 = vst.msk [vmem:[#allocation2 + $0x390] sm:$0xff] %vm1572, 0.0
      %2289 = vst.msk [vmem:[#allocation2 + $0x398] sm:$0xff] %vm1572, 0.0
      %2290 = vst.msk [vmem:[#allocation2 + $0x3a0] sm:$0x3] %vm2175, 0.0
      %2291 = vst.msk [vmem:[#allocation2 + $0x3a8] sm:$0xff] %vm1572, 0.0
      %2292 = vst.msk [vmem:[#allocation2 + $0x3b0] sm:$0xff] %vm1572, 0.0
      %2293 = vst.msk [vmem:[#allocation2 + $0x3b8] sm:$0x3] %vm2175, 0.0
      %2294 = vst.msk [vmem:[#allocation2 + $0x3c0] sm:$0xff] %vm1572, 0.0
      %2295 = vst.msk [vmem:[#allocation2 + $0x3c8] sm:$0xff] %vm1572, 0.0
      %2296 = vst.msk [vmem:[#allocation2 + $0x3d0] sm:$0x3] %vm2175, 0.0
      %2297 = vst.msk [vmem:[#allocation2 + $0x3d8] sm:$0xff] %vm1572, 0.0
      %2298 = vst.msk [vmem:[#allocation2 + $0x3e0] sm:$0xff] %vm1572, 0.0
      %2299 = vst.msk [vmem:[#allocation2 + $0x3e8] sm:$0x3] %vm2175, 0.0
      %2300 = vst.msk [vmem:[#allocation2 + $0x3f0] sm:$0xff] %vm1572, 0.0
      %2301 = vst.msk [vmem:[#allocation2 + $0x3f8] sm:$0xff] %vm1572, 0.0
      %2302 = vst.msk [vmem:[#allocation2 + $0x400] sm:$0x3] %vm2175, 0.0
      %2303 = vst.msk [vmem:[#allocation2 + $0x408] sm:$0xff] %vm1572, 0.0
      %2304 = vst.msk [vmem:[#allocation2 + $0x410] sm:$0xff] %vm1572, 0.0
      %2305 = vst.msk [vmem:[#allocation2 + $0x418] sm:$0x3] %vm2175, 0.0
      %2306 = vst.msk [vmem:[#allocation2 + $0x420] sm:$0xff] %vm1572, 0.0
      %2307 = vst.msk [vmem:[#allocation2 + $0x428] sm:$0xff] %vm1572, 0.0
      %2308 = vst.msk [vmem:[#allocation2 + $0x430] sm:$0x3] %vm2175, 0.0
      %2309 = vst.msk [vmem:[#allocation2 + $0x438] sm:$0xff] %vm1572, 0.0
      %2310 = vst.msk [vmem:[#allocation2 + $0x440] sm:$0xff] %vm1572, 0.0
      %2311 = vst.msk [vmem:[#allocation2 + $0x448] sm:$0x3] %vm2175, 0.0
      %2312 = vst.msk [vmem:[#allocation2 + $0x450] sm:$0xff] %vm1572, 0.0
      %2313 = vst.msk [vmem:[#allocation2 + $0x458] sm:$0xff] %vm1572, 0.0
      %2314 = vst.msk [vmem:[#allocation2 + $0x460] sm:$0x3] %vm2175, 0.0
      %2315 = vst.msk [vmem:[#allocation2 + $0x468] sm:$0xff] %vm1572, 0.0
      %2316 = vst.msk [vmem:[#allocation2 + $0x470] sm:$0xff] %vm1572, 0.0
      %2317 = vst.msk [vmem:[#allocation2 + $0x478] sm:$0x3] %vm2175, 0.0
      %2318 = vst.msk [vmem:[#allocation2 + $0x480] sm:$0xff] %vm1572, 0.0
      %2319 = vst.msk [vmem:[#allocation2 + $0x488] sm:$0xff] %vm1572, 0.0
      %2320 = vst.msk [vmem:[#allocation2 + $0x490] sm:$0x3] %vm2175, 0.0
      %2321 = vst.msk [vmem:[#allocation2 + $0x498] sm:$0xff] %vm1572, 0.0
      %2322 = vst.msk [vmem:[#allocation2 + $0x4a0] sm:$0xff] %vm1572, 0.0
      %2323 = vst.msk [vmem:[#allocation2 + $0x4a8] sm:$0x3] %vm2175, 0.0
      %2324 = vst.msk [vmem:[#allocation2 + $0x4b0] sm:$0xff] %vm1572, 0.0
      %2325 = vst.msk [vmem:[#allocation2 + $0x4b8] sm:$0xff] %vm1572, 0.0
      %2326 = vst.msk [vmem:[#allocation2 + $0x4c0] sm:$0x3] %vm2175, 0.0
      %2327 = vst.msk [vmem:[#allocation2 + $0x4c8] sm:$0xff] %vm1572, 0.0
      %2328 = vst.msk [vmem:[#allocation2 + $0x4d0] sm:$0xff] %vm1572, 0.0
      %2329 = vst.msk [vmem:[#allocation2 + $0x4d8] sm:$0x3] %vm2175, 0.0
      %2330 = vst.msk [vmem:[#allocation2 + $0x4e0] sm:$0xff] %vm1572, 0.0
      %2331 = vst.msk [vmem:[#allocation2 + $0x4e8] sm:$0xff] %vm1572, 0.0
      %2332 = vst.msk [vmem:[#allocation2 + $0x4f0] sm:$0x3] %vm2175, 0.0
      %2333 = vst.msk [vmem:[#allocation2 + $0x4f8] sm:$0xff] %vm1572, 0.0
      %2334 = vst.msk [vmem:[#allocation2 + $0x500] sm:$0xff] %vm1572, 0.0
      %2335 = vst.msk [vmem:[#allocation2 + $0x508] sm:$0x3] %vm2175, 0.0
      %2336 = vst.msk [vmem:[#allocation2 + $0x510] sm:$0xff] %vm1572, 0.0
      %2337 = vst.msk [vmem:[#allocation2 + $0x518] sm:$0xff] %vm1572, 0.0
      %2338 = vst.msk [vmem:[#allocation2 + $0x520] sm:$0x3] %vm2175, 0.0
      %2339 = vst.msk [vmem:[#allocation2 + $0x528] sm:$0xff] %vm1572, 0.0
      %2340 = vst.msk [vmem:[#allocation2 + $0x530] sm:$0xff] %vm1572, 0.0
      %2341 = vst.msk [vmem:[#allocation2 + $0x538] sm:$0x3] %vm2175, 0.0
      %2342 = vst.msk [vmem:[#allocation2 + $0x540] sm:$0xff] %vm1572, 0.0
      %2343 = vst.msk [vmem:[#allocation2 + $0x548] sm:$0xff] %vm1572, 0.0
      %2344 = vst.msk [vmem:[#allocation2 + $0x550] sm:$0x3] %vm2175, 0.0
      %2345 = vst.msk [vmem:[#allocation2 + $0x558] sm:$0xff] %vm1572, 0.0
      %2346 = vst.msk [vmem:[#allocation2 + $0x560] sm:$0xff] %vm1572, 0.0
      %2347 = vst.msk [vmem:[#allocation2 + $0x568] sm:$0x3] %vm2175, 0.0
      %2348 = vst.msk [vmem:[#allocation2 + $0x570] sm:$0xff] %vm1572, 0.0
      %2349 = vst.msk [vmem:[#allocation2 + $0x578] sm:$0xff] %vm1572, 0.0
      %2350 = vst.msk [vmem:[#allocation2 + $0x580] sm:$0x3] %vm2175, 0.0
      %2351 = vst.msk [vmem:[#allocation2 + $0x588] sm:$0xff] %vm1572, 0.0
      %2352 = vst.msk [vmem:[#allocation2 + $0x590] sm:$0xff] %vm1572, 0.0
      %2353 = vst.msk [vmem:[#allocation2 + $0x598] sm:$0x3] %vm2175, 0.0
      %2354 = vst.msk [vmem:[#allocation2 + $0x5a0] sm:$0xff] %vm1572, 0.0
      %2355 = vst.msk [vmem:[#allocation2 + $0x5a8] sm:$0xff] %vm1572, 0.0
      %2356 = vst.msk [vmem:[#allocation2 + $0x5b0] sm:$0x3] %vm2175, 0.0
      %2357 = vst.msk [vmem:[#allocation2 + $0x5b8] sm:$0xff] %vm1572, 0.0
      %2358 = vst.msk [vmem:[#allocation2 + $0x5c0] sm:$0xff] %vm1572, 0.0
      %2359 = vst.msk [vmem:[#allocation2 + $0x5c8] sm:$0x3] %vm2175, 0.0
      %2360 = vst.msk [vmem:[#allocation2 + $0x5d0] sm:$0xff] %vm1572, 0.0
      %2361 = vst.msk [vmem:[#allocation2 + $0x5d8] sm:$0xff] %vm1572, 0.0
      %2362 = vst.msk [vmem:[#allocation2 + $0x5e0] sm:$0x3] %vm2175, 0.0
      %2363 = vst.msk [vmem:[#allocation2 + $0x5e8] sm:$0xff] %vm1572, 0.0
      %2364 = vst.msk [vmem:[#allocation2 + $0x5f0] sm:$0xff] %vm1572, 0.0
      %2365 = vst.msk [vmem:[#allocation2 + $0x5f8] sm:$0x3] %vm2175, 0.0
      %2366 = vst.msk [vmem:[#allocation2 + $0x600] sm:$0xff] %vm1572, 0.0
      %2367 = vst.msk [vmem:[#allocation2 + $0x608] sm:$0xff] %vm1572, 0.0
      %2368 = vst.msk [vmem:[#allocation2 + $0x610] sm:$0x3] %vm2175, 0.0
      %2369 = vst.msk [vmem:[#allocation2 + $0x618] sm:$0xff] %vm1572, 0.0
      %2370 = vst.msk [vmem:[#allocation2 + $0x620] sm:$0xff] %vm1572, 0.0
      %2371 = vst.msk [vmem:[#allocation2 + $0x628] sm:$0x3] %vm2175, 0.0
      %2372 = vst.msk [vmem:[#allocation2 + $0x630] sm:$0xff] %vm1572, 0.0
      %2373 = vst.msk [vmem:[#allocation2 + $0x638] sm:$0xff] %vm1572, 0.0
      %2374 = vst.msk [vmem:[#allocation2 + $0x640] sm:$0x3] %vm2175, 0.0
      %2375 = vst.msk [vmem:[#allocation2 + $0x648] sm:$0xff] %vm1572, 0.0
      %2376 = vst.msk [vmem:[#allocation2 + $0x650] sm:$0xff] %vm1572, 0.0
      %2377 = vst.msk [vmem:[#allocation2 + $0x658] sm:$0x3] %vm2175, 0.0
      %2378 = vst.msk [vmem:[#allocation2 + $0x660] sm:$0xff] %vm1572, 0.0
      %2379 = vst.msk [vmem:[#allocation2 + $0x668] sm:$0xff] %vm1572, 0.0
      %2380 = vst.msk [vmem:[#allocation2 + $0x670] sm:$0x3] %vm2175, 0.0
      %2381 = vst.msk [vmem:[#allocation2 + $0x678] sm:$0xff] %vm1572, 0.0
      %2382 = vst.msk [vmem:[#allocation2 + $0x680] sm:$0xff] %vm1572, 0.0
      %2383 = vst.msk [vmem:[#allocation2 + $0x688] sm:$0x3] %vm2175, 0.0
      %2384 = vst.msk [vmem:[#allocation2 + $0x690] sm:$0xff] %vm1572, 0.0
      %2385 = vst.msk [vmem:[#allocation2 + $0x698] sm:$0xff] %vm1572, 0.0
      %2386 = vst.msk [vmem:[#allocation2 + $0x6a0] sm:$0x3] %vm2175, 0.0
      %2387 = vst.msk [vmem:[#allocation2 + $0x6a8] sm:$0xff] %vm1572, 0.0
      %2388 = vst.msk [vmem:[#allocation2 + $0x6b0] sm:$0xff] %vm1572, 0.0
      %2389 = vst.msk [vmem:[#allocation2 + $0x6b8] sm:$0x3] %vm2175, 0.0
      %s2390 = scalar_lea.vmem [#allocation2], 24
      %2391 = vst.msk [vmem:[%s2390 + $0x1] sm:$0xff] %vm1572, %v2141
      %2392 = vst.msk [vmem:[%s2390 + $0x9] sm:$0xff] %vm1572, %v2142
      %2393 = vst.msk [vmem:[%s2390 + $0x19] sm:$0xff] %vm1572, %v2143
      %2394 = vst.msk [vmem:[%s2390 + $0x21] sm:$0xff] %vm1572, %v2144
      %2395 = vst.msk [vmem:[%s2390 + $0x31] sm:$0xff] %vm1572, %v2145
      %2396 = vst.msk [vmem:[%s2390 + $0x39] sm:$0xff] %vm1572, %v2146
      %2397 = vst.msk [vmem:[%s2390 + $0x49] sm:$0xff] %vm1572, %v2147
      %2398 = vst.msk [vmem:[%s2390 + $0x51] sm:$0xff] %vm1572, %v2148
      %2399 = vst.msk [vmem:[%s2390 + $0x61] sm:$0xff] %vm1572, %v2149
      %2400 = vst.msk [vmem:[%s2390 + $0x69] sm:$0xff] %vm1572, %v2150
      %2401 = vst.msk [vmem:[%s2390 + $0x79] sm:$0xff] %vm1572, %v2151
      %2402 = vst.msk [vmem:[%s2390 + $0x81] sm:$0xff] %vm1572, %v2152
      %2403 = vst.msk [vmem:[%s2390 + $0x91] sm:$0xff] %vm1572, %v2153
      %2404 = vst.msk [vmem:[%s2390 + $0x99] sm:$0xff] %vm1572, %v2154
      %2405 = vst.msk [vmem:[%s2390 + $0xa9] sm:$0xff] %vm1572, %v2155
      %2406 = vst.msk [vmem:[%s2390 + $0xb1] sm:$0xff] %vm1572, %v2156
      %2407 = vst.msk [vmem:[%s2390 + $0xc1] sm:$0xff] %vm1572, %v2157
      %2408 = vst.msk [vmem:[%s2390 + $0xc9] sm:$0xff] %vm1572, %v2158
      %2409 = vst.msk [vmem:[%s2390 + $0xd9] sm:$0xff] %vm1572, %v2159
      %2410 = vst.msk [vmem:[%s2390 + $0xe1] sm:$0xff] %vm1572, %v2160
      %2411 = vst.msk [vmem:[%s2390 + $0xf1] sm:$0xff] %vm1572, %v2161
      %2412 = vst.msk [vmem:[%s2390 + $0xf9] sm:$0xff] %vm1572, %v2162
      %2413 = vst.msk [vmem:[%s2390 + $0x109] sm:$0xff] %vm1572, %v2163
      %2414 = vst.msk [vmem:[%s2390 + $0x111] sm:$0xff] %vm1572, %v2164
      %2415 = vst.msk [vmem:[%s2390 + $0x121] sm:$0xff] %vm1572, %v2165
      %2416 = vst.msk [vmem:[%s2390 + $0x129] sm:$0xff] %vm1572, %v2166
      %2417 = vst.msk [vmem:[%s2390 + $0x139] sm:$0xff] %vm1572, %v2167
      %2418 = vst.msk [vmem:[%s2390 + $0x141] sm:$0xff] %vm1572, %v2168
      %2419 = vst.msk [vmem:[%s2390 + $0x151] sm:$0xff] %vm1572, %v2169
      %2420 = vst.msk [vmem:[%s2390 + $0x159] sm:$0xff] %vm1572, %v2170
      %2421 = vst.msk [vmem:[%s2390 + $0x169] sm:$0xff] %vm1572, %v2171
      %2422 = vst.msk [vmem:[%s2390 + $0x171] sm:$0xff] %vm1572, %v2172
      %2455 = vrot.lane.b32.xlu0 %v2141, 120
      %v2456 = vpop.permute.xlu0 %2455
      %2457 = vrot.lane.b32.xlu0 %v2142, 120
      %v2458 = vpop.permute.xlu0 %2457
      %2459 = vrot.lane.b32.xlu0 %v2143, 120
      %v2460 = vpop.permute.xlu0 %2459
      %2461 = vrot.lane.b32.xlu0 %v2144, 120
      %v2462 = vpop.permute.xlu0 %2461
      %2463 = vrot.lane.b32.xlu0 %v2145, 120
      %v2464 = vpop.permute.xlu0 %2463
      %2465 = vrot.lane.b32.xlu0 %v2146, 120
      %v2466 = vpop.permute.xlu0 %2465
      %2467 = vrot.lane.b32.xlu0 %v2147, 120
      %v2468 = vpop.permute.xlu0 %2467
      %2469 = vrot.lane.b32.xlu0 %v2148, 120
      %v2470 = vpop.permute.xlu0 %2469
      %2471 = vrot.lane.b32.xlu0 %v2149, 120
      %v2472 = vpop.permute.xlu0 %2471
      %2473 = vrot.lane.b32.xlu0 %v2150, 120
      %v2474 = vpop.permute.xlu0 %2473
      %2475 = vrot.lane.b32.xlu0 %v2151, 120
      %v2476 = vpop.permute.xlu0 %2475
      %2477 = vrot.lane.b32.xlu0 %v2152, 120
      %v2478 = vpop.permute.xlu0 %2477
      %2479 = vrot.lane.b32.xlu0 %v2153, 120
      %v2480 = vpop.permute.xlu0 %2479
      %2481 = vrot.lane.b32.xlu0 %v2154, 120
      %v2482 = vpop.permute.xlu0 %2481
      %2483 = vrot.lane.b32.xlu0 %v2155, 120
      %v2484 = vpop.permute.xlu0 %2483
      %2485 = vrot.lane.b32.xlu0 %v2156, 120
      %v2486 = vpop.permute.xlu0 %2485
      %2487 = vrot.lane.b32.xlu0 %v2157, 120
      %v2488 = vpop.permute.xlu0 %2487
      %2489 = vrot.lane.b32.xlu0 %v2158, 120
      %v2490 = vpop.permute.xlu0 %2489
      %2491 = vrot.lane.b32.xlu0 %v2159, 120
      %v2492 = vpop.permute.xlu0 %2491
      %2493 = vrot.lane.b32.xlu0 %v2160, 120
      %v2494 = vpop.permute.xlu0 %2493
      %2495 = vrot.lane.b32.xlu0 %v2161, 120
      %v2496 = vpop.permute.xlu0 %2495
      %2497 = vrot.lane.b32.xlu0 %v2162, 120
      %v2498 = vpop.permute.xlu0 %2497
      %2499 = vrot.lane.b32.xlu0 %v2163, 120
      %v2500 = vpop.permute.xlu0 %2499
      %2501 = vrot.lane.b32.xlu0 %v2164, 120
      %v2502 = vpop.permute.xlu0 %2501
      %2503 = vrot.lane.b32.xlu0 %v2165, 120
      %v2504 = vpop.permute.xlu0 %2503
      %2505 = vrot.lane.b32.xlu0 %v2166, 120
      %v2506 = vpop.permute.xlu0 %2505
      %2507 = vrot.lane.b32.xlu0 %v2167, 120
      %v2508 = vpop.permute.xlu0 %2507
      %2509 = vrot.lane.b32.xlu0 %v2168, 120
      %v2510 = vpop.permute.xlu0 %2509
      %2511 = vrot.lane.b32.xlu0 %v2169, 120
      %v2512 = vpop.permute.xlu0 %2511
      %2513 = vrot.lane.b32.xlu0 %v2170, 120
      %v2514 = vpop.permute.xlu0 %2513
      %2515 = vrot.lane.b32.xlu0 %v2171, 120
      %v2516 = vpop.permute.xlu0 %2515
      %2517 = vrot.lane.b32.xlu0 %v2172, 120
      %v2518 = vpop.permute.xlu0 %2517
      %s2551 = scalar_lea.vmem [#allocation2], 456
      %2552 = vst.msk [vmem:[%s2551 + $0x1] sm:$0xff] %vm1572, %v2456
      %2553 = vst.msk [vmem:[%s2551 + $0x9] sm:$0xff] %vm1572, %v2458
      %2554 = vst.msk [vmem:[%s2551 + $0x19] sm:$0xff] %vm1572, %v2460
      %2555 = vst.msk [vmem:[%s2551 + $0x21] sm:$0xff] %vm1572, %v2462
      %2556 = vst.msk [vmem:[%s2551 + $0x31] sm:$0xff] %vm1572, %v2464
      %2557 = vst.msk [vmem:[%s2551 + $0x39] sm:$0xff] %vm1572, %v2466
      %2558 = vst.msk [vmem:[%s2551 + $0x49] sm:$0xff] %vm1572, %v2468
      %2559 = vst.msk [vmem:[%s2551 + $0x51] sm:$0xff] %vm1572, %v2470
      %2560 = vst.msk [vmem:[%s2551 + $0x61] sm:$0xff] %vm1572, %v2472
      %2561 = vst.msk [vmem:[%s2551 + $0x69] sm:$0xff] %vm1572, %v2474
      %2562 = vst.msk [vmem:[%s2551 + $0x79] sm:$0xff] %vm1572, %v2476
      %2563 = vst.msk [vmem:[%s2551 + $0x81] sm:$0xff] %vm1572, %v2478
      %2564 = vst.msk [vmem:[%s2551 + $0x91] sm:$0xff] %vm1572, %v2480
      %2565 = vst.msk [vmem:[%s2551 + $0x99] sm:$0xff] %vm1572, %v2482
      %2566 = vst.msk [vmem:[%s2551 + $0xa9] sm:$0xff] %vm1572, %v2484
      %2567 = vst.msk [vmem:[%s2551 + $0xb1] sm:$0xff] %vm1572, %v2486
      %2568 = vst.msk [vmem:[%s2551 + $0xc1] sm:$0xff] %vm1572, %v2488
      %2569 = vst.msk [vmem:[%s2551 + $0xc9] sm:$0xff] %vm1572, %v2490
      %2570 = vst.msk [vmem:[%s2551 + $0xd9] sm:$0xff] %vm1572, %v2492
      %2571 = vst.msk [vmem:[%s2551 + $0xe1] sm:$0xff] %vm1572, %v2494
      %2572 = vst.msk [vmem:[%s2551 + $0xf1] sm:$0xff] %vm1572, %v2496
      %2573 = vst.msk [vmem:[%s2551 + $0xf9] sm:$0xff] %vm1572, %v2498
      %2574 = vst.msk [vmem:[%s2551 + $0x109] sm:$0xff] %vm1572, %v2500
      %2575 = vst.msk [vmem:[%s2551 + $0x111] sm:$0xff] %vm1572, %v2502
      %2576 = vst.msk [vmem:[%s2551 + $0x121] sm:$0xff] %vm1572, %v2504
      %2577 = vst.msk [vmem:[%s2551 + $0x129] sm:$0xff] %vm1572, %v2506
      %2578 = vst.msk [vmem:[%s2551 + $0x139] sm:$0xff] %vm1572, %v2508
      %2579 = vst.msk [vmem:[%s2551 + $0x141] sm:$0xff] %vm1572, %v2510
      %2580 = vst.msk [vmem:[%s2551 + $0x151] sm:$0xff] %vm1572, %v2512
      %2581 = vst.msk [vmem:[%s2551 + $0x159] sm:$0xff] %vm1572, %v2514
      %2582 = vst.msk [vmem:[%s2551 + $0x169] sm:$0xff] %vm1572, %v2516
      %2583 = vst.msk [vmem:[%s2551 + $0x171] sm:$0xff] %vm1572, %v2518
      %2584 = vrot.lane.b32.xlu0 %v2141, 112
      %v2585 = vpop.permute.xlu0 %2584
      %2586 = vrot.lane.b32.xlu0 %v2142, 112
      %v2587 = vpop.permute.xlu0 %2586
      %2588 = vrot.lane.b32.xlu0 %v2143, 112
      %v2589 = vpop.permute.xlu0 %2588
      %2590 = vrot.lane.b32.xlu0 %v2144, 112
      %v2591 = vpop.permute.xlu0 %2590
      %2592 = vrot.lane.b32.xlu0 %v2145, 112
      %v2593 = vpop.permute.xlu0 %2592
      %2594 = vrot.lane.b32.xlu0 %v2146, 112
      %v2595 = vpop.permute.xlu0 %2594
      %2596 = vrot.lane.b32.xlu0 %v2147, 112
      %v2597 = vpop.permute.xlu0 %2596
      %2598 = vrot.lane.b32.xlu0 %v2148, 112
      %v2599 = vpop.permute.xlu0 %2598
      %2600 = vrot.lane.b32.xlu0 %v2149, 112
      %v2601 = vpop.permute.xlu0 %2600
      %2602 = vrot.lane.b32.xlu0 %v2150, 112
      %v2603 = vpop.permute.xlu0 %2602
      %2604 = vrot.lane.b32.xlu0 %v2151, 112
      %v2605 = vpop.permute.xlu0 %2604
      %2606 = vrot.lane.b32.xlu0 %v2152, 112
      %v2607 = vpop.permute.xlu0 %2606
      %2608 = vrot.lane.b32.xlu0 %v2153, 112
      %v2609 = vpop.permute.xlu0 %2608
      %2610 = vrot.lane.b32.xlu0 %v2154, 112
      %v2611 = vpop.permute.xlu0 %2610
      %2612 = vrot.lane.b32.xlu0 %v2155, 112
      %v2613 = vpop.permute.xlu0 %2612
      %2614 = vrot.lane.b32.xlu0 %v2156, 112
      %v2615 = vpop.permute.xlu0 %2614
      %2616 = vrot.lane.b32.xlu0 %v2157, 112
      %v2617 = vpop.permute.xlu0 %2616
      %2618 = vrot.lane.b32.xlu0 %v2158, 112
      %v2619 = vpop.permute.xlu0 %2618
      %2620 = vrot.lane.b32.xlu0 %v2159, 112
      %v2621 = vpop.permute.xlu0 %2620
      %2622 = vrot.lane.b32.xlu0 %v2160, 112
      %v2623 = vpop.permute.xlu0 %2622
      %2624 = vrot.lane.b32.xlu0 %v2161, 112
      %v2625 = vpop.permute.xlu0 %2624
      %2626 = vrot.lane.b32.xlu0 %v2162, 112
      %v2627 = vpop.permute.xlu0 %2626
      %2628 = vrot.lane.b32.xlu0 %v2163, 112
      %v2629 = vpop.permute.xlu0 %2628
      %2630 = vrot.lane.b32.xlu0 %v2164, 112
      %v2631 = vpop.permute.xlu0 %2630
      %2632 = vrot.lane.b32.xlu0 %v2165, 112
      %v2633 = vpop.permute.xlu0 %2632
      %2634 = vrot.lane.b32.xlu0 %v2166, 112
      %v2635 = vpop.permute.xlu0 %2634
      %2636 = vrot.lane.b32.xlu0 %v2167, 112
      %v2637 = vpop.permute.xlu0 %2636
      %2638 = vrot.lane.b32.xlu0 %v2168, 112
      %v2639 = vpop.permute.xlu0 %2638
      %2640 = vrot.lane.b32.xlu0 %v2169, 112
      %v2641 = vpop.permute.xlu0 %2640
      %2642 = vrot.lane.b32.xlu0 %v2170, 112
      %v2643 = vpop.permute.xlu0 %2642
      %2644 = vrot.lane.b32.xlu0 %v2171, 112
      %v2645 = vpop.permute.xlu0 %2644
      %2646 = vrot.lane.b32.xlu0 %v2172, 112
      %v2647 = vpop.permute.xlu0 %2646
      %s2680 = scalar_lea.vmem [#allocation2], 888
      %2681 = vst.msk [vmem:[%s2680 + $0x1] sm:$0xff] %vm1572, %v2585
      %2682 = vst.msk [vmem:[%s2680 + $0x9] sm:$0xff] %vm1572, %v2587
      %2683 = vst.msk [vmem:[%s2680 + $0x19] sm:$0xff] %vm1572, %v2589
      %2684 = vst.msk [vmem:[%s2680 + $0x21] sm:$0xff] %vm1572, %v2591
      %2685 = vst.msk [vmem:[%s2680 + $0x31] sm:$0xff] %vm1572, %v2593
      %2686 = vst.msk [vmem:[%s2680 + $0x39] sm:$0xff] %vm1572, %v2595
      %2687 = vst.msk [vmem:[%s2680 + $0x49] sm:$0xff] %vm1572, %v2597
      %2688 = vst.msk [vmem:[%s2680 + $0x51] sm:$0xff] %vm1572, %v2599
      %2689 = vst.msk [vmem:[%s2680 + $0x61] sm:$0xff] %vm1572, %v2601
      %2690 = vst.msk [vmem:[%s2680 + $0x69] sm:$0xff] %vm1572, %v2603
      %2691 = vst.msk [vmem:[%s2680 + $0x79] sm:$0xff] %vm1572, %v2605
      %2692 = vst.msk [vmem:[%s2680 + $0x81] sm:$0xff] %vm1572, %v2607
      %2693 = vst.msk [vmem:[%s2680 + $0x91] sm:$0xff] %vm1572, %v2609
      %2694 = vst.msk [vmem:[%s2680 + $0x99] sm:$0xff] %vm1572, %v2611
      %2695 = vst.msk [vmem:[%s2680 + $0xa9] sm:$0xff] %vm1572, %v2613
      %2696 = vst.msk [vmem:[%s2680 + $0xb1] sm:$0xff] %vm1572, %v2615
      %2697 = vst.msk [vmem:[%s2680 + $0xc1] sm:$0xff] %vm1572, %v2617
      %2698 = vst.msk [vmem:[%s2680 + $0xc9] sm:$0xff] %vm1572, %v2619
      %2699 = vst.msk [vmem:[%s2680 + $0xd9] sm:$0xff] %vm1572, %v2621
      %2700 = vst.msk [vmem:[%s2680 + $0xe1] sm:$0xff] %vm1572, %v2623
      %2701 = vst.msk [vmem:[%s2680 + $0xf1] sm:$0xff] %vm1572, %v2625
      %2702 = vst.msk [vmem:[%s2680 + $0xf9] sm:$0xff] %vm1572, %v2627
      %2703 = vst.msk [vmem:[%s2680 + $0x109] sm:$0xff] %vm1572, %v2629
      %2704 = vst.msk [vmem:[%s2680 + $0x111] sm:$0xff] %vm1572, %v2631
      %2705 = vst.msk [vmem:[%s2680 + $0x121] sm:$0xff] %vm1572, %v2633
      %2706 = vst.msk [vmem:[%s2680 + $0x129] sm:$0xff] %vm1572, %v2635
      %2707 = vst.msk [vmem:[%s2680 + $0x139] sm:$0xff] %vm1572, %v2637
      %2708 = vst.msk [vmem:[%s2680 + $0x141] sm:$0xff] %vm1572, %v2639
      %2709 = vst.msk [vmem:[%s2680 + $0x151] sm:$0xff] %vm1572, %v2641
      %2710 = vst.msk [vmem:[%s2680 + $0x159] sm:$0xff] %vm1572, %v2643
      %2711 = vst.msk [vmem:[%s2680 + $0x169] sm:$0xff] %vm1572, %v2645
      %2712 = vst.msk [vmem:[%s2680 + $0x171] sm:$0xff] %vm1572, %v2647
      %2713 = vrot.lane.b32.xlu0 %v2141, 104
      %v2714 = vpop.permute.xlu0 %2713
      %2715 = vrot.lane.b32.xlu0 %v2142, 104
      %v2716 = vpop.permute.xlu0 %2715
      %2717 = vrot.lane.b32.xlu0 %v2143, 104
      %v2718 = vpop.permute.xlu0 %2717
      %2719 = vrot.lane.b32.xlu0 %v2144, 104
      %v2720 = vpop.permute.xlu0 %2719
      %2721 = vrot.lane.b32.xlu0 %v2145, 104
      %v2722 = vpop.permute.xlu0 %2721
      %2723 = vrot.lane.b32.xlu0 %v2146, 104
      %v2724 = vpop.permute.xlu0 %2723
      %2725 = vrot.lane.b32.xlu0 %v2147, 104
      %v2726 = vpop.permute.xlu0 %2725
      %2727 = vrot.lane.b32.xlu0 %v2148, 104
      %v2728 = vpop.permute.xlu0 %2727
      %2729 = vrot.lane.b32.xlu0 %v2149, 104
      %v2730 = vpop.permute.xlu0 %2729
      %2731 = vrot.lane.b32.xlu0 %v2150, 104
      %v2732 = vpop.permute.xlu0 %2731
      %2733 = vrot.lane.b32.xlu0 %v2151, 104
      %v2734 = vpop.permute.xlu0 %2733
      %2735 = vrot.lane.b32.xlu0 %v2152, 104
      %v2736 = vpop.permute.xlu0 %2735
      %2737 = vrot.lane.b32.xlu0 %v2153, 104
      %v2738 = vpop.permute.xlu0 %2737
      %2739 = vrot.lane.b32.xlu0 %v2154, 104
      %v2740 = vpop.permute.xlu0 %2739
      %2741 = vrot.lane.b32.xlu0 %v2155, 104
      %v2742 = vpop.permute.xlu0 %2741
      %2743 = vrot.lane.b32.xlu0 %v2156, 104
      %v2744 = vpop.permute.xlu0 %2743
      %2745 = vrot.lane.b32.xlu0 %v2157, 104
      %v2746 = vpop.permute.xlu0 %2745
      %2747 = vrot.lane.b32.xlu0 %v2158, 104
      %v2748 = vpop.permute.xlu0 %2747
      %2749 = vrot.lane.b32.xlu0 %v2159, 104
      %v2750 = vpop.permute.xlu0 %2749
      %2751 = vrot.lane.b32.xlu0 %v2160, 104
      %v2752 = vpop.permute.xlu0 %2751
      %2753 = vrot.lane.b32.xlu0 %v2161, 104
      %v2754 = vpop.permute.xlu0 %2753
      %2755 = vrot.lane.b32.xlu0 %v2162, 104
      %v2756 = vpop.permute.xlu0 %2755
      %2757 = vrot.lane.b32.xlu0 %v2163, 104
      %v2758 = vpop.permute.xlu0 %2757
      %2759 = vrot.lane.b32.xlu0 %v2164, 104
      %v2760 = vpop.permute.xlu0 %2759
      %2761 = vrot.lane.b32.xlu0 %v2165, 104
      %v2762 = vpop.permute.xlu0 %2761
      %2763 = vrot.lane.b32.xlu0 %v2166, 104
      %v2764 = vpop.permute.xlu0 %2763
      %2765 = vrot.lane.b32.xlu0 %v2167, 104
      %v2766 = vpop.permute.xlu0 %2765
      %2767 = vrot.lane.b32.xlu0 %v2168, 104
      %v2768 = vpop.permute.xlu0 %2767
      %2769 = vrot.lane.b32.xlu0 %v2169, 104
      %v2770 = vpop.permute.xlu0 %2769
      %2771 = vrot.lane.b32.xlu0 %v2170, 104
      %v2772 = vpop.permute.xlu0 %2771
      %2773 = vrot.lane.b32.xlu0 %v2171, 104
      %v2774 = vpop.permute.xlu0 %2773
      %2775 = vrot.lane.b32.xlu0 %v2172, 104
      %v2776 = vpop.permute.xlu0 %2775
      %s2809 = scalar_lea.vmem [#allocation2], 1320
      %2810 = vst.msk [vmem:[%s2809 + $0x1] sm:$0xff] %vm1572, %v2714
      %2811 = vst.msk [vmem:[%s2809 + $0x9] sm:$0xff] %vm1572, %v2716
      %2812 = vst.msk [vmem:[%s2809 + $0x19] sm:$0xff] %vm1572, %v2718
      %2813 = vst.msk [vmem:[%s2809 + $0x21] sm:$0xff] %vm1572, %v2720
      %2814 = vst.msk [vmem:[%s2809 + $0x31] sm:$0xff] %vm1572, %v2722
      %2815 = vst.msk [vmem:[%s2809 + $0x39] sm:$0xff] %vm1572, %v2724
      %2816 = vst.msk [vmem:[%s2809 + $0x49] sm:$0xff] %vm1572, %v2726
      %2817 = vst.msk [vmem:[%s2809 + $0x51] sm:$0xff] %vm1572, %v2728
      %2818 = vst.msk [vmem:[%s2809 + $0x61] sm:$0xff] %vm1572, %v2730
      %2819 = vst.msk [vmem:[%s2809 + $0x69] sm:$0xff] %vm1572, %v2732
      %2820 = vst.msk [vmem:[%s2809 + $0x79] sm:$0xff] %vm1572, %v2734
      %2821 = vst.msk [vmem:[%s2809 + $0x81] sm:$0xff] %vm1572, %v2736
      %2822 = vst.msk [vmem:[%s2809 + $0x91] sm:$0xff] %vm1572, %v2738
      %2823 = vst.msk [vmem:[%s2809 + $0x99] sm:$0xff] %vm1572, %v2740
      %2824 = vst.msk [vmem:[%s2809 + $0xa9] sm:$0xff] %vm1572, %v2742
      %2825 = vst.msk [vmem:[%s2809 + $0xb1] sm:$0xff] %vm1572, %v2744
      %2826 = vst.msk [vmem:[%s2809 + $0xc1] sm:$0xff] %vm1572, %v2746
      %2827 = vst.msk [vmem:[%s2809 + $0xc9] sm:$0xff] %vm1572, %v2748
      %2828 = vst.msk [vmem:[%s2809 + $0xd9] sm:$0xff] %vm1572, %v2750
      %2829 = vst.msk [vmem:[%s2809 + $0xe1] sm:$0xff] %vm1572, %v2752
      %2830 = vst.msk [vmem:[%s2809 + $0xf1] sm:$0xff] %vm1572, %v2754
      %2831 = vst.msk [vmem:[%s2809 + $0xf9] sm:$0xff] %vm1572, %v2756
      %2832 = vst.msk [vmem:[%s2809 + $0x109] sm:$0xff] %vm1572, %v2758
      %2833 = vst.msk [vmem:[%s2809 + $0x111] sm:$0xff] %vm1572, %v2760
      %2834 = vst.msk [vmem:[%s2809 + $0x121] sm:$0xff] %vm1572, %v2762
      %2835 = vst.msk [vmem:[%s2809 + $0x129] sm:$0xff] %vm1572, %v2764
      %2836 = vst.msk [vmem:[%s2809 + $0x139] sm:$0xff] %vm1572, %v2766
      %2837 = vst.msk [vmem:[%s2809 + $0x141] sm:$0xff] %vm1572, %v2768
      %2838 = vst.msk [vmem:[%s2809 + $0x151] sm:$0xff] %vm1572, %v2770
      %2839 = vst.msk [vmem:[%s2809 + $0x159] sm:$0xff] %vm1572, %v2772
      %2840 = vst.msk [vmem:[%s2809 + $0x169] sm:$0xff] %vm1572, %v2774
      %2841 = vst.msk [vmem:[%s2809 + $0x171] sm:$0xff] %vm1572, %v2776
      %v2842 = vld [vmem:[%s2390 + $0x1] sm:$0xff]
      %v2843 = vld [vmem:[%s2390 + $0x9] sm:$0xff]
      %v2844 = vld [vmem:[%s2390 + $0x19] sm:$0xff]
      %v2845 = vld [vmem:[%s2390 + $0x21] sm:$0xff]
      %v2846 = vld [vmem:[%s2390 + $0x31] sm:$0xff]
      %v2847 = vld [vmem:[%s2390 + $0x39] sm:$0xff]
      %v2848 = vld [vmem:[%s2390 + $0x49] sm:$0xff]
      %v2849 = vld [vmem:[%s2390 + $0x51] sm:$0xff]
      %v2850 = vld [vmem:[%s2390 + $0x61] sm:$0xff]
      %v2851 = vld [vmem:[%s2390 + $0x69] sm:$0xff]
      %v2852 = vld [vmem:[%s2390 + $0x79] sm:$0xff]
      %v2853 = vld [vmem:[%s2390 + $0x81] sm:$0xff]
      %v2854 = vld [vmem:[%s2390 + $0x91] sm:$0xff]
      %v2855 = vld [vmem:[%s2390 + $0x99] sm:$0xff]
      %v2856 = vld [vmem:[%s2390 + $0xa9] sm:$0xff]
      %v2857 = vld [vmem:[%s2390 + $0xb1] sm:$0xff]
      %v2858 = vld [vmem:[%s2390 + $0xc1] sm:$0xff]
      %v2859 = vld [vmem:[%s2390 + $0xc9] sm:$0xff]
      %v2860 = vld [vmem:[%s2390 + $0xd9] sm:$0xff]
      %v2861 = vld [vmem:[%s2390 + $0xe1] sm:$0xff]
      %v2862 = vld [vmem:[%s2390 + $0xf1] sm:$0xff]
      %v2863 = vld [vmem:[%s2390 + $0xf9] sm:$0xff]
      %v2864 = vld [vmem:[%s2390 + $0x109] sm:$0xff]
      %v2865 = vld [vmem:[%s2390 + $0x111] sm:$0xff]
      %v2866 = vld [vmem:[%s2390 + $0x121] sm:$0xff]
      %v2867 = vld [vmem:[%s2390 + $0x129] sm:$0xff]
      %v2868 = vld [vmem:[%s2390 + $0x139] sm:$0xff]
      %v2869 = vld [vmem:[%s2390 + $0x141] sm:$0xff]
      %v2870 = vld [vmem:[%s2390 + $0x151] sm:$0xff]
      %v2871 = vld [vmem:[%s2390 + $0x159] sm:$0xff]
      %v2872 = vld [vmem:[%s2390 + $0x169] sm:$0xff]
      %v2873 = vld [vmem:[%s2390 + $0x171] sm:$0xff]
      %v2874 = vld [vmem:[%s2390 + $0x2] sm:$0xff]
      %v2875 = vld [vmem:[%s2390 + $0xa] sm:$0xff]
      %v2876 = vld [vmem:[%s2390 + $0x1a] sm:$0xff]
      %v2877 = vld [vmem:[%s2390 + $0x22] sm:$0xff]
      %v2878 = vld [vmem:[%s2390 + $0x32] sm:$0xff]
      %v2879 = vld [vmem:[%s2390 + $0x3a] sm:$0xff]
      %v2880 = vld [vmem:[%s2390 + $0x4a] sm:$0xff]
      %v2881 = vld [vmem:[%s2390 + $0x52] sm:$0xff]
      %v2882 = vld [vmem:[%s2390 + $0x62] sm:$0xff]
      %v2883 = vld [vmem:[%s2390 + $0x6a] sm:$0xff]
      %v2884 = vld [vmem:[%s2390 + $0x7a] sm:$0xff]
      %v2885 = vld [vmem:[%s2390 + $0x82] sm:$0xff]
      %v2886 = vld [vmem:[%s2390 + $0x92] sm:$0xff]
      %v2887 = vld [vmem:[%s2390 + $0x9a] sm:$0xff]
      %v2888 = vld [vmem:[%s2390 + $0xaa] sm:$0xff]
      %v2889 = vld [vmem:[%s2390 + $0xb2] sm:$0xff]
      %v2890 = vld [vmem:[%s2390 + $0xc2] sm:$0xff]
      %v2891 = vld [vmem:[%s2390 + $0xca] sm:$0xff]
      %v2892 = vld [vmem:[%s2390 + $0xda] sm:$0xff]
      %v2893 = vld [vmem:[%s2390 + $0xe2] sm:$0xff]
      %v2894 = vld [vmem:[%s2390 + $0xf2] sm:$0xff]
      %v2895 = vld [vmem:[%s2390 + $0xfa] sm:$0xff]
      %v2896 = vld [vmem:[%s2390 + $0x10a] sm:$0xff]
      %v2897 = vld [vmem:[%s2390 + $0x112] sm:$0xff]
      %v2898 = vld [vmem:[%s2390 + $0x122] sm:$0xff]
      %v2899 = vld [vmem:[%s2390 + $0x12a] sm:$0xff]
      %v2900 = vld [vmem:[%s2390 + $0x13a] sm:$0xff]
      %v2901 = vld [vmem:[%s2390 + $0x142] sm:$0xff]
      %v2902 = vld [vmem:[%s2390 + $0x152] sm:$0xff]
      %v2903 = vld [vmem:[%s2390 + $0x15a] sm:$0xff]
      %v2904 = vld [vmem:[%s2390 + $0x16a] sm:$0xff]
      %v2905 = vld [vmem:[%s2390 + $0x172] sm:$0xff]
      %s2906 = scalar_lea.vmem [#allocation2], 48
      %v2907 = vld [vmem:[%s2906 + $0x1] sm:$0xff]
      %v2908 = vld [vmem:[%s2906 + $0x9] sm:$0xff]
      %v2909 = vld [vmem:[%s2906 + $0x19] sm:$0xff]
      %v2910 = vld [vmem:[%s2906 + $0x21] sm:$0xff]
      %v2911 = vld [vmem:[%s2906 + $0x31] sm:$0xff]
      %v2912 = vld [vmem:[%s2906 + $0x39] sm:$0xff]
      %v2913 = vld [vmem:[%s2906 + $0x49] sm:$0xff]
      %v2914 = vld [vmem:[%s2906 + $0x51] sm:$0xff]
      %v2915 = vld [vmem:[%s2906 + $0x61] sm:$0xff]
      %v2916 = vld [vmem:[%s2906 + $0x69] sm:$0xff]
      %v2917 = vld [vmem:[%s2906 + $0x79] sm:$0xff]
      %v2918 = vld [vmem:[%s2906 + $0x81] sm:$0xff]
      %v2919 = vld [vmem:[%s2906 + $0x91] sm:$0xff]
      %v2920 = vld [vmem:[%s2906 + $0x99] sm:$0xff]
      %v2921 = vld [vmem:[%s2906 + $0xa9] sm:$0xff]
      %v2922 = vld [vmem:[%s2906 + $0xb1] sm:$0xff]
      %v2923 = vld [vmem:[%s2906 + $0xc1] sm:$0xff]
      %v2924 = vld [vmem:[%s2906 + $0xc9] sm:$0xff]
      %v2925 = vld [vmem:[%s2906 + $0xd9] sm:$0xff]
      %v2926 = vld [vmem:[%s2906 + $0xe1] sm:$0xff]
      %v2927 = vld [vmem:[%s2906 + $0xf1] sm:$0xff]
      %v2928 = vld [vmem:[%s2906 + $0xf9] sm:$0xff]
      %v2929 = vld [vmem:[%s2906 + $0x109] sm:$0xff]
      %v2930 = vld [vmem:[%s2906 + $0x111] sm:$0xff]
      %v2931 = vld [vmem:[%s2906 + $0x121] sm:$0xff]
      %v2932 = vld [vmem:[%s2906 + $0x129] sm:$0xff]
      %v2933 = vld [vmem:[%s2906 + $0x139] sm:$0xff]
      %v2934 = vld [vmem:[%s2906 + $0x141] sm:$0xff]
      %v2935 = vld [vmem:[%s2906 + $0x151] sm:$0xff]
      %v2936 = vld [vmem:[%s2906 + $0x159] sm:$0xff]
      %v2937 = vld [vmem:[%s2906 + $0x169] sm:$0xff]
      %v2938 = vld [vmem:[%s2906 + $0x171] sm:$0xff]
      %v2939 = vld [vmem:[%s2906 + $0x2] sm:$0xff]
      %v2940 = vld [vmem:[%s2906 + $0xa] sm:$0xff]
      %v2941 = vld [vmem:[%s2906 + $0x1a] sm:$0xff]
      %v2942 = vld [vmem:[%s2906 + $0x22] sm:$0xff]
      %v2943 = vld [vmem:[%s2906 + $0x32] sm:$0xff]
      %v2944 = vld [vmem:[%s2906 + $0x3a] sm:$0xff]
      %v2945 = vld [vmem:[%s2906 + $0x4a] sm:$0xff]
      %v2946 = vld [vmem:[%s2906 + $0x52] sm:$0xff]
      %v2947 = vld [vmem:[%s2906 + $0x62] sm:$0xff]
      %v2948 = vld [vmem:[%s2906 + $0x6a] sm:$0xff]
      %v2949 = vld [vmem:[%s2906 + $0x7a] sm:$0xff]
      %v2950 = vld [vmem:[%s2906 + $0x82] sm:$0xff]
      %v2951 = vld [vmem:[%s2906 + $0x92] sm:$0xff]
      %v2952 = vld [vmem:[%s2906 + $0x9a] sm:$0xff]
      %v2953 = vld [vmem:[%s2906 + $0xaa] sm:$0xff]
      %v2954 = vld [vmem:[%s2906 + $0xb2] sm:$0xff]
      %v2955 = vld [vmem:[%s2906 + $0xc2] sm:$0xff]
      %v2956 = vld [vmem:[%s2906 + $0xca] sm:$0xff]
      %v2957 = vld [vmem:[%s2906 + $0xda] sm:$0xff]
      %v2958 = vld [vmem:[%s2906 + $0xe2] sm:$0xff]
      %v2959 = vld [vmem:[%s2906 + $0xf2] sm:$0xff]
      %v2960 = vld [vmem:[%s2906 + $0xfa] sm:$0xff]
      %v2961 = vld [vmem:[%s2906 + $0x10a] sm:$0xff]
      %v2962 = vld [vmem:[%s2906 + $0x112] sm:$0xff]
      %v2963 = vld [vmem:[%s2906 + $0x122] sm:$0xff]
      %v2964 = vld [vmem:[%s2906 + $0x12a] sm:$0xff]
      %v2965 = vld [vmem:[%s2906 + $0x13a] sm:$0xff]
      %v2966 = vld [vmem:[%s2906 + $0x142] sm:$0xff]
      %v2967 = vld [vmem:[%s2906 + $0x152] sm:$0xff]
      %v2968 = vld [vmem:[%s2906 + $0x15a] sm:$0xff]
      %v2969 = vld [vmem:[%s2906 + $0x16a] sm:$0xff]
      %v2970 = vld [vmem:[%s2906 + $0x172] sm:$0xff]
      %v2971 = vld [vmem:[%s2551] sm:$0xff]
      %v2972 = vld [vmem:[%s2551 + $0x8] sm:$0xff]
      %v2973 = vld [vmem:[%s2551 + $0x18] sm:$0xff]
      %v2974 = vld [vmem:[%s2551 + $0x20] sm:$0xff]
      %v2975 = vld [vmem:[%s2551 + $0x30] sm:$0xff]
      %v2976 = vld [vmem:[%s2551 + $0x38] sm:$0xff]
      %v2977 = vld [vmem:[%s2551 + $0x48] sm:$0xff]
      %v2978 = vld [vmem:[%s2551 + $0x50] sm:$0xff]
      %v2979 = vld [vmem:[%s2551 + $0x60] sm:$0xff]
      %v2980 = vld [vmem:[%s2551 + $0x68] sm:$0xff]
      %v2981 = vld [vmem:[%s2551 + $0x78] sm:$0xff]
      %v2982 = vld [vmem:[%s2551 + $0x80] sm:$0xff]
      %v2983 = vld [vmem:[%s2551 + $0x90] sm:$0xff]
      %v2984 = vld [vmem:[%s2551 + $0x98] sm:$0xff]
      %v2985 = vld [vmem:[%s2551 + $0xa8] sm:$0xff]
      %v2986 = vld [vmem:[%s2551 + $0xb0] sm:$0xff]
      %v2987 = vld [vmem:[%s2551 + $0xc0] sm:$0xff]
      %v2988 = vld [vmem:[%s2551 + $0xc8] sm:$0xff]
      %v2989 = vld [vmem:[%s2551 + $0xd8] sm:$0xff]
      %v2990 = vld [vmem:[%s2551 + $0xe0] sm:$0xff]
      %v2991 = vld [vmem:[%s2551 + $0xf0] sm:$0xff]
      %v2992 = vld [vmem:[%s2551 + $0xf8] sm:$0xff]
      %v2993 = vld [vmem:[%s2551 + $0x108] sm:$0xff]
      %v2994 = vld [vmem:[%s2551 + $0x110] sm:$0xff]
      %v2995 = vld [vmem:[%s2551 + $0x120] sm:$0xff]
      %v2996 = vld [vmem:[%s2551 + $0x128] sm:$0xff]
      %v2997 = vld [vmem:[%s2551 + $0x138] sm:$0xff]
      %v2998 = vld [vmem:[%s2551 + $0x140] sm:$0xff]
      %v2999 = vld [vmem:[%s2551 + $0x150] sm:$0xff]
      %v3000 = vld [vmem:[%s2551 + $0x158] sm:$0xff]
      %v3001 = vld [vmem:[%s2551 + $0x168] sm:$0xff]
      %v3002 = vld [vmem:[%s2551 + $0x170] sm:$0xff]
      %v3003 = vld [vmem:[%s2551 + $0x1] sm:$0xff]
      %v3004 = vld [vmem:[%s2551 + $0x9] sm:$0xff]
      %v3005 = vld [vmem:[%s2551 + $0x19] sm:$0xff]
      %v3006 = vld [vmem:[%s2551 + $0x21] sm:$0xff]
      %v3007 = vld [vmem:[%s2551 + $0x31] sm:$0xff]
      %v3008 = vld [vmem:[%s2551 + $0x39] sm:$0xff]
      %v3009 = vld [vmem:[%s2551 + $0x49] sm:$0xff]
      %v3010 = vld [vmem:[%s2551 + $0x51] sm:$0xff]
      %v3011 = vld [vmem:[%s2551 + $0x61] sm:$0xff]
      %v3012 = vld [vmem:[%s2551 + $0x69] sm:$0xff]
      %v3013 = vld [vmem:[%s2551 + $0x79] sm:$0xff]
      %v3014 = vld [vmem:[%s2551 + $0x81] sm:$0xff]
      %v3015 = vld [vmem:[%s2551 + $0x91] sm:$0xff]
      %v3016 = vld [vmem:[%s2551 + $0x99] sm:$0xff]
      %v3017 = vld [vmem:[%s2551 + $0xa9] sm:$0xff]
      %v3018 = vld [vmem:[%s2551 + $0xb1] sm:$0xff]
      %v3019 = vld [vmem:[%s2551 + $0xc1] sm:$0xff]
      %v3020 = vld [vmem:[%s2551 + $0xc9] sm:$0xff]
      %v3021 = vld [vmem:[%s2551 + $0xd9] sm:$0xff]
      %v3022 = vld [vmem:[%s2551 + $0xe1] sm:$0xff]
      %v3023 = vld [vmem:[%s2551 + $0xf1] sm:$0xff]
      %v3024 = vld [vmem:[%s2551 + $0xf9] sm:$0xff]
      %v3025 = vld [vmem:[%s2551 + $0x109] sm:$0xff]
      %v3026 = vld [vmem:[%s2551 + $0x111] sm:$0xff]
      %v3027 = vld [vmem:[%s2551 + $0x121] sm:$0xff]
      %v3028 = vld [vmem:[%s2551 + $0x129] sm:$0xff]
      %v3029 = vld [vmem:[%s2551 + $0x139] sm:$0xff]
      %v3030 = vld [vmem:[%s2551 + $0x141] sm:$0xff]
      %v3031 = vld [vmem:[%s2551 + $0x151] sm:$0xff]
      %v3032 = vld [vmem:[%s2551 + $0x159] sm:$0xff]
      %v3033 = vld [vmem:[%s2551 + $0x169] sm:$0xff]
      %v3034 = vld [vmem:[%s2551 + $0x171] sm:$0xff]
      %s3035 = scalar_lea.vmem [#allocation2], 480
      %v3036 = vld [vmem:[%s3035] sm:$0xff]
      %v3037 = vld [vmem:[%s3035 + $0x8] sm:$0xff]
      %v3038 = vld [vmem:[%s3035 + $0x18] sm:$0xff]
      %v3039 = vld [vmem:[%s3035 + $0x20] sm:$0xff]
      %v3040 = vld [vmem:[%s3035 + $0x30] sm:$0xff]
      %v3041 = vld [vmem:[%s3035 + $0x38] sm:$0xff]
      %v3042 = vld [vmem:[%s3035 + $0x48] sm:$0xff]
      %v3043 = vld [vmem:[%s3035 + $0x50] sm:$0xff]
      %v3044 = vld [vmem:[%s3035 + $0x60] sm:$0xff]
      %v3045 = vld [vmem:[%s3035 + $0x68] sm:$0xff]
      %v3046 = vld [vmem:[%s3035 + $0x78] sm:$0xff]
      %v3047 = vld [vmem:[%s3035 + $0x80] sm:$0xff]
      %v3048 = vld [vmem:[%s3035 + $0x90] sm:$0xff]
      %v3049 = vld [vmem:[%s3035 + $0x98] sm:$0xff]
      %v3050 = vld [vmem:[%s3035 + $0xa8] sm:$0xff]
      %v3051 = vld [vmem:[%s3035 + $0xb0] sm:$0xff]
      %v3052 = vld [vmem:[%s3035 + $0xc0] sm:$0xff]
      %v3053 = vld [vmem:[%s3035 + $0xc8] sm:$0xff]
      %v3054 = vld [vmem:[%s3035 + $0xd8] sm:$0xff]
      %v3055 = vld [vmem:[%s3035 + $0xe0] sm:$0xff]
      %v3056 = vld [vmem:[%s3035 + $0xf0] sm:$0xff]
      %v3057 = vld [vmem:[%s3035 + $0xf8] sm:$0xff]
      %v3058 = vld [vmem:[%s3035 + $0x108] sm:$0xff]
      %v3059 = vld [vmem:[%s3035 + $0x110] sm:$0xff]
      %v3060 = vld [vmem:[%s3035 + $0x120] sm:$0xff]
      %v3061 = vld [vmem:[%s3035 + $0x128] sm:$0xff]
      %v3062 = vld [vmem:[%s3035 + $0x138] sm:$0xff]
      %v3063 = vld [vmem:[%s3035 + $0x140] sm:$0xff]
      %v3064 = vld [vmem:[%s3035 + $0x150] sm:$0xff]
      %v3065 = vld [vmem:[%s3035 + $0x158] sm:$0xff]
      %v3066 = vld [vmem:[%s3035 + $0x168] sm:$0xff]
      %v3067 = vld [vmem:[%s3035 + $0x170] sm:$0xff]
      %v3068 = vld [vmem:[%s3035 + $0x1] sm:$0xff]
      %v3069 = vld [vmem:[%s3035 + $0x9] sm:$0xff]
      %v3070 = vld [vmem:[%s3035 + $0x19] sm:$0xff]
      %v3071 = vld [vmem:[%s3035 + $0x21] sm:$0xff]
      %v3072 = vld [vmem:[%s3035 + $0x31] sm:$0xff]
      %v3073 = vld [vmem:[%s3035 + $0x39] sm:$0xff]
      %v3074 = vld [vmem:[%s3035 + $0x49] sm:$0xff]
      %v3075 = vld [vmem:[%s3035 + $0x51] sm:$0xff]
      %v3076 = vld [vmem:[%s3035 + $0x61] sm:$0xff]
      %v3077 = vld [vmem:[%s3035 + $0x69] sm:$0xff]
      %v3078 = vld [vmem:[%s3035 + $0x79] sm:$0xff]
      %v3079 = vld [vmem:[%s3035 + $0x81] sm:$0xff]
      %v3080 = vld [vmem:[%s3035 + $0x91] sm:$0xff]
      %v3081 = vld [vmem:[%s3035 + $0x99] sm:$0xff]
      %v3082 = vld [vmem:[%s3035 + $0xa9] sm:$0xff]
      %v3083 = vld [vmem:[%s3035 + $0xb1] sm:$0xff]
      %v3084 = vld [vmem:[%s3035 + $0xc1] sm:$0xff]
      %v3085 = vld [vmem:[%s3035 + $0xc9] sm:$0xff]
      %v3086 = vld [vmem:[%s3035 + $0xd9] sm:$0xff]
      %v3087 = vld [vmem:[%s3035 + $0xe1] sm:$0xff]
      %v3088 = vld [vmem:[%s3035 + $0xf1] sm:$0xff]
      %v3089 = vld [vmem:[%s3035 + $0xf9] sm:$0xff]
      %v3090 = vld [vmem:[%s3035 + $0x109] sm:$0xff]
      %v3091 = vld [vmem:[%s3035 + $0x111] sm:$0xff]
      %v3092 = vld [vmem:[%s3035 + $0x121] sm:$0xff]
      %v3093 = vld [vmem:[%s3035 + $0x129] sm:$0xff]
      %v3094 = vld [vmem:[%s3035 + $0x139] sm:$0xff]
      %v3095 = vld [vmem:[%s3035 + $0x141] sm:$0xff]
      %v3096 = vld [vmem:[%s3035 + $0x151] sm:$0xff]
      %v3097 = vld [vmem:[%s3035 + $0x159] sm:$0xff]
      %v3098 = vld [vmem:[%s3035 + $0x169] sm:$0xff]
      %v3099 = vld [vmem:[%s3035 + $0x171] sm:$0xff]
      %s3100 = scalar_lea.vmem [#allocation2], 864
      %v3101 = vld [vmem:[%s3100 + $0x1] sm:$0xff]
      %v3102 = vld [vmem:[%s3100 + $0x9] sm:$0xff]
      %v3103 = vld [vmem:[%s3100 + $0x19] sm:$0xff]
      %v3104 = vld [vmem:[%s3100 + $0x21] sm:$0xff]
      %v3105 = vld [vmem:[%s3100 + $0x31] sm:$0xff]
      %v3106 = vld [vmem:[%s3100 + $0x39] sm:$0xff]
      %v3107 = vld [vmem:[%s3100 + $0x49] sm:$0xff]
      %v3108 = vld [vmem:[%s3100 + $0x51] sm:$0xff]
      %v3109 = vld [vmem:[%s3100 + $0x61] sm:$0xff]
      %v3110 = vld [vmem:[%s3100 + $0x69] sm:$0xff]
      %v3111 = vld [vmem:[%s3100 + $0x79] sm:$0xff]
      %v3112 = vld [vmem:[%s3100 + $0x81] sm:$0xff]
      %v3113 = vld [vmem:[%s3100 + $0x91] sm:$0xff]
      %v3114 = vld [vmem:[%s3100 + $0x99] sm:$0xff]
      %v3115 = vld [vmem:[%s3100 + $0xa9] sm:$0xff]
      %v3116 = vld [vmem:[%s3100 + $0xb1] sm:$0xff]
      %v3117 = vld [vmem:[%s3100 + $0xc1] sm:$0xff]
      %v3118 = vld [vmem:[%s3100 + $0xc9] sm:$0xff]
      %v3119 = vld [vmem:[%s3100 + $0xd9] sm:$0xff]
      %v3120 = vld [vmem:[%s3100 + $0xe1] sm:$0xff]
      %v3121 = vld [vmem:[%s3100 + $0xf1] sm:$0xff]
      %v3122 = vld [vmem:[%s3100 + $0xf9] sm:$0xff]
      %v3123 = vld [vmem:[%s3100 + $0x109] sm:$0xff]
      %v3124 = vld [vmem:[%s3100 + $0x111] sm:$0xff]
      %v3125 = vld [vmem:[%s3100 + $0x121] sm:$0xff]
      %v3126 = vld [vmem:[%s3100 + $0x129] sm:$0xff]
      %v3127 = vld [vmem:[%s3100 + $0x139] sm:$0xff]
      %v3128 = vld [vmem:[%s3100 + $0x141] sm:$0xff]
      %v3129 = vld [vmem:[%s3100 + $0x151] sm:$0xff]
      %v3130 = vld [vmem:[%s3100 + $0x159] sm:$0xff]
      %v3131 = vld [vmem:[%s3100 + $0x169] sm:$0xff]
      %v3132 = vld [vmem:[%s3100 + $0x171] sm:$0xff]
      %v3133 = vld [vmem:[%s3100 + $0x2] sm:$0xff]
      %v3134 = vld [vmem:[%s3100 + $0xa] sm:$0xff]
      %v3135 = vld [vmem:[%s3100 + $0x1a] sm:$0xff]
      %v3136 = vld [vmem:[%s3100 + $0x22] sm:$0xff]
      %v3137 = vld [vmem:[%s3100 + $0x32] sm:$0xff]
      %v3138 = vld [vmem:[%s3100 + $0x3a] sm:$0xff]
      %v3139 = vld [vmem:[%s3100 + $0x4a] sm:$0xff]
      %v3140 = vld [vmem:[%s3100 + $0x52] sm:$0xff]
      %v3141 = vld [vmem:[%s3100 + $0x62] sm:$0xff]
      %v3142 = vld [vmem:[%s3100 + $0x6a] sm:$0xff]
      %v3143 = vld [vmem:[%s3100 + $0x7a] sm:$0xff]
      %v3144 = vld [vmem:[%s3100 + $0x82] sm:$0xff]
      %v3145 = vld [vmem:[%s3100 + $0x92] sm:$0xff]
      %v3146 = vld [vmem:[%s3100 + $0x9a] sm:$0xff]
      %v3147 = vld [vmem:[%s3100 + $0xaa] sm:$0xff]
      %v3148 = vld [vmem:[%s3100 + $0xb2] sm:$0xff]
      %v3149 = vld [vmem:[%s3100 + $0xc2] sm:$0xff]
      %v3150 = vld [vmem:[%s3100 + $0xca] sm:$0xff]
      %v3151 = vld [vmem:[%s3100 + $0xda] sm:$0xff]
      %v3152 = vld [vmem:[%s3100 + $0xe2] sm:$0xff]
      %v3153 = vld [vmem:[%s3100 + $0xf2] sm:$0xff]
      %v3154 = vld [vmem:[%s3100 + $0xfa] sm:$0xff]
      %v3155 = vld [vmem:[%s3100 + $0x10a] sm:$0xff]
      %v3156 = vld [vmem:[%s3100 + $0x112] sm:$0xff]
      %v3157 = vld [vmem:[%s3100 + $0x122] sm:$0xff]
      %v3158 = vld [vmem:[%s3100 + $0x12a] sm:$0xff]
      %v3159 = vld [vmem:[%s3100 + $0x13a] sm:$0xff]
      %v3160 = vld [vmem:[%s3100 + $0x142] sm:$0xff]
      %v3161 = vld [vmem:[%s3100 + $0x152] sm:$0xff]
      %v3162 = vld [vmem:[%s3100 + $0x15a] sm:$0xff]
      %v3163 = vld [vmem:[%s3100 + $0x16a] sm:$0xff]
      %v3164 = vld [vmem:[%s3100 + $0x172] sm:$0xff]
      %v3165 = vld [vmem:[%s2680 + $0x1] sm:$0xff]
      %v3166 = vld [vmem:[%s2680 + $0x9] sm:$0xff]
      %v3167 = vld [vmem:[%s2680 + $0x19] sm:$0xff]
      %v3168 = vld [vmem:[%s2680 + $0x21] sm:$0xff]
      %v3169 = vld [vmem:[%s2680 + $0x31] sm:$0xff]
      %v3170 = vld [vmem:[%s2680 + $0x39] sm:$0xff]
      %v3171 = vld [vmem:[%s2680 + $0x49] sm:$0xff]
      %v3172 = vld [vmem:[%s2680 + $0x51] sm:$0xff]
      %v3173 = vld [vmem:[%s2680 + $0x61] sm:$0xff]
      %v3174 = vld [vmem:[%s2680 + $0x69] sm:$0xff]
      %v3175 = vld [vmem:[%s2680 + $0x79] sm:$0xff]
      %v3176 = vld [vmem:[%s2680 + $0x81] sm:$0xff]
      %v3177 = vld [vmem:[%s2680 + $0x91] sm:$0xff]
      %v3178 = vld [vmem:[%s2680 + $0x99] sm:$0xff]
      %v3179 = vld [vmem:[%s2680 + $0xa9] sm:$0xff]
      %v3180 = vld [vmem:[%s2680 + $0xb1] sm:$0xff]
      %v3181 = vld [vmem:[%s2680 + $0xc1] sm:$0xff]
      %v3182 = vld [vmem:[%s2680 + $0xc9] sm:$0xff]
      %v3183 = vld [vmem:[%s2680 + $0xd9] sm:$0xff]
      %v3184 = vld [vmem:[%s2680 + $0xe1] sm:$0xff]
      %v3185 = vld [vmem:[%s2680 + $0xf1] sm:$0xff]
      %v3186 = vld [vmem:[%s2680 + $0xf9] sm:$0xff]
      %v3187 = vld [vmem:[%s2680 + $0x109] sm:$0xff]
      %v3188 = vld [vmem:[%s2680 + $0x111] sm:$0xff]
      %v3189 = vld [vmem:[%s2680 + $0x121] sm:$0xff]
      %v3190 = vld [vmem:[%s2680 + $0x129] sm:$0xff]
      %v3191 = vld [vmem:[%s2680 + $0x139] sm:$0xff]
      %v3192 = vld [vmem:[%s2680 + $0x141] sm:$0xff]
      %v3193 = vld [vmem:[%s2680 + $0x151] sm:$0xff]
      %v3194 = vld [vmem:[%s2680 + $0x159] sm:$0xff]
      %v3195 = vld [vmem:[%s2680 + $0x169] sm:$0xff]
      %v3196 = vld [vmem:[%s2680 + $0x171] sm:$0xff]
      %v3197 = vld [vmem:[%s2680 + $0x2] sm:$0xff]
      %v3198 = vld [vmem:[%s2680 + $0xa] sm:$0xff]
      %v3199 = vld [vmem:[%s2680 + $0x1a] sm:$0xff]
      %v3200 = vld [vmem:[%s2680 + $0x22] sm:$0xff]
      %v3201 = vld [vmem:[%s2680 + $0x32] sm:$0xff]
      %v3202 = vld [vmem:[%s2680 + $0x3a] sm:$0xff]
      %v3203 = vld [vmem:[%s2680 + $0x4a] sm:$0xff]
      %v3204 = vld [vmem:[%s2680 + $0x52] sm:$0xff]
      %v3205 = vld [vmem:[%s2680 + $0x62] sm:$0xff]
      %v3206 = vld [vmem:[%s2680 + $0x6a] sm:$0xff]
      %v3207 = vld [vmem:[%s2680 + $0x7a] sm:$0xff]
      %v3208 = vld [vmem:[%s2680 + $0x82] sm:$0xff]
      %v3209 = vld [vmem:[%s2680 + $0x92] sm:$0xff]
      %v3210 = vld [vmem:[%s2680 + $0x9a] sm:$0xff]
      %v3211 = vld [vmem:[%s2680 + $0xaa] sm:$0xff]
      %v3212 = vld [vmem:[%s2680 + $0xb2] sm:$0xff]
      %v3213 = vld [vmem:[%s2680 + $0xc2] sm:$0xff]
      %v3214 = vld [vmem:[%s2680 + $0xca] sm:$0xff]
      %v3215 = vld [vmem:[%s2680 + $0xda] sm:$0xff]
      %v3216 = vld [vmem:[%s2680 + $0xe2] sm:$0xff]
      %v3217 = vld [vmem:[%s2680 + $0xf2] sm:$0xff]
      %v3218 = vld [vmem:[%s2680 + $0xfa] sm:$0xff]
      %v3219 = vld [vmem:[%s2680 + $0x10a] sm:$0xff]
      %v3220 = vld [vmem:[%s2680 + $0x112] sm:$0xff]
      %v3221 = vld [vmem:[%s2680 + $0x122] sm:$0xff]
      %v3222 = vld [vmem:[%s2680 + $0x12a] sm:$0xff]
      %v3223 = vld [vmem:[%s2680 + $0x13a] sm:$0xff]
      %v3224 = vld [vmem:[%s2680 + $0x142] sm:$0xff]
      %v3225 = vld [vmem:[%s2680 + $0x152] sm:$0xff]
      %v3226 = vld [vmem:[%s2680 + $0x15a] sm:$0xff]
      %v3227 = vld [vmem:[%s2680 + $0x16a] sm:$0xff]
      %v3228 = vld [vmem:[%s2680 + $0x172] sm:$0xff]
      %s3229 = scalar_lea.vmem [#allocation2], 1296
      %v3230 = vld [vmem:[%s3229] sm:$0xff]
      %v3231 = vld [vmem:[%s3229 + $0x8] sm:$0xff]
      %v3232 = vld [vmem:[%s3229 + $0x18] sm:$0xff]
      %v3233 = vld [vmem:[%s3229 + $0x20] sm:$0xff]
      %v3234 = vld [vmem:[%s3229 + $0x30] sm:$0xff]
      %v3235 = vld [vmem:[%s3229 + $0x38] sm:$0xff]
      %v3236 = vld [vmem:[%s3229 + $0x48] sm:$0xff]
      %v3237 = vld [vmem:[%s3229 + $0x50] sm:$0xff]
      %v3238 = vld [vmem:[%s3229 + $0x60] sm:$0xff]
      %v3239 = vld [vmem:[%s3229 + $0x68] sm:$0xff]
      %v3240 = vld [vmem:[%s3229 + $0x78] sm:$0xff]
      %v3241 = vld [vmem:[%s3229 + $0x80] sm:$0xff]
      %v3242 = vld [vmem:[%s3229 + $0x90] sm:$0xff]
      %v3243 = vld [vmem:[%s3229 + $0x98] sm:$0xff]
      %v3244 = vld [vmem:[%s3229 + $0xa8] sm:$0xff]
      %v3245 = vld [vmem:[%s3229 + $0xb0] sm:$0xff]
      %v3246 = vld [vmem:[%s3229 + $0xc0] sm:$0xff]
      %v3247 = vld [vmem:[%s3229 + $0xc8] sm:$0xff]
      %v3248 = vld [vmem:[%s3229 + $0xd8] sm:$0xff]
      %v3249 = vld [vmem:[%s3229 + $0xe0] sm:$0xff]
      %v3250 = vld [vmem:[%s3229 + $0xf0] sm:$0xff]
      %v3251 = vld [vmem:[%s3229 + $0xf8] sm:$0xff]
      %v3252 = vld [vmem:[%s3229 + $0x108] sm:$0xff]
      %v3253 = vld [vmem:[%s3229 + $0x110] sm:$0xff]
      %v3254 = vld [vmem:[%s3229 + $0x120] sm:$0xff]
      %v3255 = vld [vmem:[%s3229 + $0x128] sm:$0xff]
      %v3256 = vld [vmem:[%s3229 + $0x138] sm:$0xff]
      %v3257 = vld [vmem:[%s3229 + $0x140] sm:$0xff]
      %v3258 = vld [vmem:[%s3229 + $0x150] sm:$0xff]
      %v3259 = vld [vmem:[%s3229 + $0x158] sm:$0xff]
      %v3260 = vld [vmem:[%s3229 + $0x168] sm:$0xff]
      %v3261 = vld [vmem:[%s3229 + $0x170] sm:$0xff]
      %v3262 = vld [vmem:[%s3229 + $0x1] sm:$0xff]
      %v3263 = vld [vmem:[%s3229 + $0x9] sm:$0xff]
      %v3264 = vld [vmem:[%s3229 + $0x19] sm:$0xff]
      %v3265 = vld [vmem:[%s3229 + $0x21] sm:$0xff]
      %v3266 = vld [vmem:[%s3229 + $0x31] sm:$0xff]
      %v3267 = vld [vmem:[%s3229 + $0x39] sm:$0xff]
      %v3268 = vld [vmem:[%s3229 + $0x49] sm:$0xff]
      %v3269 = vld [vmem:[%s3229 + $0x51] sm:$0xff]
      %v3270 = vld [vmem:[%s3229 + $0x61] sm:$0xff]
      %v3271 = vld [vmem:[%s3229 + $0x69] sm:$0xff]
      %v3272 = vld [vmem:[%s3229 + $0x79] sm:$0xff]
      %v3273 = vld [vmem:[%s3229 + $0x81] sm:$0xff]
      %v3274 = vld [vmem:[%s3229 + $0x91] sm:$0xff]
      %v3275 = vld [vmem:[%s3229 + $0x99] sm:$0xff]
      %v3276 = vld [vmem:[%s3229 + $0xa9] sm:$0xff]
      %v3277 = vld [vmem:[%s3229 + $0xb1] sm:$0xff]
      %v3278 = vld [vmem:[%s3229 + $0xc1] sm:$0xff]
      %v3279 = vld [vmem:[%s3229 + $0xc9] sm:$0xff]
      %v3280 = vld [vmem:[%s3229 + $0xd9] sm:$0xff]
      %v3281 = vld [vmem:[%s3229 + $0xe1] sm:$0xff]
      %v3282 = vld [vmem:[%s3229 + $0xf1] sm:$0xff]
      %v3283 = vld [vmem:[%s3229 + $0xf9] sm:$0xff]
      %v3284 = vld [vmem:[%s3229 + $0x109] sm:$0xff]
      %v3285 = vld [vmem:[%s3229 + $0x111] sm:$0xff]
      %v3286 = vld [vmem:[%s3229 + $0x121] sm:$0xff]
      %v3287 = vld [vmem:[%s3229 + $0x129] sm:$0xff]
      %v3288 = vld [vmem:[%s3229 + $0x139] sm:$0xff]
      %v3289 = vld [vmem:[%s3229 + $0x141] sm:$0xff]
      %v3290 = vld [vmem:[%s3229 + $0x151] sm:$0xff]
      %v3291 = vld [vmem:[%s3229 + $0x159] sm:$0xff]
      %v3292 = vld [vmem:[%s3229 + $0x169] sm:$0xff]
      %v3293 = vld [vmem:[%s3229 + $0x171] sm:$0xff]
      %v3294 = vld [vmem:[%s2809] sm:$0xff]
      %v3295 = vld [vmem:[%s2809 + $0x8] sm:$0xff]
      %v3296 = vld [vmem:[%s2809 + $0x18] sm:$0xff]
      %v3297 = vld [vmem:[%s2809 + $0x20] sm:$0xff]
      %v3298 = vld [vmem:[%s2809 + $0x30] sm:$0xff]
      %v3299 = vld [vmem:[%s2809 + $0x38] sm:$0xff]
      %v3300 = vld [vmem:[%s2809 + $0x48] sm:$0xff]
      %v3301 = vld [vmem:[%s2809 + $0x50] sm:$0xff]
      %v3302 = vld [vmem:[%s2809 + $0x60] sm:$0xff]
      %v3303 = vld [vmem:[%s2809 + $0x68] sm:$0xff]
      %v3304 = vld [vmem:[%s2809 + $0x78] sm:$0xff]
      %v3305 = vld [vmem:[%s2809 + $0x80] sm:$0xff]
      %v3306 = vld [vmem:[%s2809 + $0x90] sm:$0xff]
      %v3307 = vld [vmem:[%s2809 + $0x98] sm:$0xff]
      %v3308 = vld [vmem:[%s2809 + $0xa8] sm:$0xff]
      %v3309 = vld [vmem:[%s2809 + $0xb0] sm:$0xff]
      %v3310 = vld [vmem:[%s2809 + $0xc0] sm:$0xff]
      %v3311 = vld [vmem:[%s2809 + $0xc8] sm:$0xff]
      %v3312 = vld [vmem:[%s2809 + $0xd8] sm:$0xff]
      %v3313 = vld [vmem:[%s2809 + $0xe0] sm:$0xff]
      %v3314 = vld [vmem:[%s2809 + $0xf0] sm:$0xff]
      %v3315 = vld [vmem:[%s2809 + $0xf8] sm:$0xff]
      %v3316 = vld [vmem:[%s2809 + $0x108] sm:$0xff]
      %v3317 = vld [vmem:[%s2809 + $0x110] sm:$0xff]
      %v3318 = vld [vmem:[%s2809 + $0x120] sm:$0xff]
      %v3319 = vld [vmem:[%s2809 + $0x128] sm:$0xff]
      %v3320 = vld [vmem:[%s2809 + $0x138] sm:$0xff]
      %v3321 = vld [vmem:[%s2809 + $0x140] sm:$0xff]
      %v3322 = vld [vmem:[%s2809 + $0x150] sm:$0xff]
      %v3323 = vld [vmem:[%s2809 + $0x158] sm:$0xff]
      %v3324 = vld [vmem:[%s2809 + $0x168] sm:$0xff]
      %v3325 = vld [vmem:[%s2809 + $0x170] sm:$0xff]
      %v3326 = vld [vmem:[%s2809 + $0x1] sm:$0xff]
      %v3327 = vld [vmem:[%s2809 + $0x9] sm:$0xff]
      %v3328 = vld [vmem:[%s2809 + $0x19] sm:$0xff]
      %v3329 = vld [vmem:[%s2809 + $0x21] sm:$0xff]
      %v3330 = vld [vmem:[%s2809 + $0x31] sm:$0xff]
      %v3331 = vld [vmem:[%s2809 + $0x39] sm:$0xff]
      %v3332 = vld [vmem:[%s2809 + $0x49] sm:$0xff]
      %v3333 = vld [vmem:[%s2809 + $0x51] sm:$0xff]
      %v3334 = vld [vmem:[%s2809 + $0x61] sm:$0xff]
      %v3335 = vld [vmem:[%s2809 + $0x69] sm:$0xff]
      %v3336 = vld [vmem:[%s2809 + $0x79] sm:$0xff]
      %v3337 = vld [vmem:[%s2809 + $0x81] sm:$0xff]
      %v3338 = vld [vmem:[%s2809 + $0x91] sm:$0xff]
      %v3339 = vld [vmem:[%s2809 + $0x99] sm:$0xff]
      %v3340 = vld [vmem:[%s2809 + $0xa9] sm:$0xff]
      %v3341 = vld [vmem:[%s2809 + $0xb1] sm:$0xff]
      %v3342 = vld [vmem:[%s2809 + $0xc1] sm:$0xff]
      %v3343 = vld [vmem:[%s2809 + $0xc9] sm:$0xff]
      %v3344 = vld [vmem:[%s2809 + $0xd9] sm:$0xff]
      %v3345 = vld [vmem:[%s2809 + $0xe1] sm:$0xff]
      %v3346 = vld [vmem:[%s2809 + $0xf1] sm:$0xff]
      %v3347 = vld [vmem:[%s2809 + $0xf9] sm:$0xff]
      %v3348 = vld [vmem:[%s2809 + $0x109] sm:$0xff]
      %v3349 = vld [vmem:[%s2809 + $0x111] sm:$0xff]
      %v3350 = vld [vmem:[%s2809 + $0x121] sm:$0xff]
      %v3351 = vld [vmem:[%s2809 + $0x129] sm:$0xff]
      %v3352 = vld [vmem:[%s2809 + $0x139] sm:$0xff]
      %v3353 = vld [vmem:[%s2809 + $0x141] sm:$0xff]
      %v3354 = vld [vmem:[%s2809 + $0x151] sm:$0xff]
      %v3355 = vld [vmem:[%s2809 + $0x159] sm:$0xff]
      %v3356 = vld [vmem:[%s2809 + $0x169] sm:$0xff]
      %v3357 = vld [vmem:[%s2809 + $0x171] sm:$0xff]
      %3390 = vrot.lane.b32.xlu0 %v2874, 8
      %v3391 = vpop.permute.xlu0 %3390
      %3392 = vrot.lane.b32.xlu0 %v2875, 8
      %v3393 = vpop.permute.xlu0 %3392
      %3394 = vrot.lane.b32.xlu0 %v2876, 8
      %v3395 = vpop.permute.xlu0 %3394
      %3396 = vrot.lane.b32.xlu0 %v2877, 8
      %v3397 = vpop.permute.xlu0 %3396
      %3398 = vrot.lane.b32.xlu0 %v2878, 8
      %v3399 = vpop.permute.xlu0 %3398
      %3400 = vrot.lane.b32.xlu0 %v2879, 8
      %v3401 = vpop.permute.xlu0 %3400
      %3402 = vrot.lane.b32.xlu0 %v2880, 8
      %v3403 = vpop.permute.xlu0 %3402
      %3404 = vrot.lane.b32.xlu0 %v2881, 8
      %v3405 = vpop.permute.xlu0 %3404
      %3406 = vrot.lane.b32.xlu0 %v2882, 8
      %v3407 = vpop.permute.xlu0 %3406
      %3408 = vrot.lane.b32.xlu0 %v2883, 8
      %v3409 = vpop.permute.xlu0 %3408
      %3410 = vrot.lane.b32.xlu0 %v2884, 8
      %v3411 = vpop.permute.xlu0 %3410
      %3412 = vrot.lane.b32.xlu0 %v2885, 8
      %v3413 = vpop.permute.xlu0 %3412
      %3414 = vrot.lane.b32.xlu0 %v2886, 8
      %v3415 = vpop.permute.xlu0 %3414
      %3416 = vrot.lane.b32.xlu0 %v2887, 8
      %v3417 = vpop.permute.xlu0 %3416
      %3418 = vrot.lane.b32.xlu0 %v2888, 8
      %v3419 = vpop.permute.xlu0 %3418
      %3420 = vrot.lane.b32.xlu0 %v2889, 8
      %v3421 = vpop.permute.xlu0 %3420
      %3422 = vrot.lane.b32.xlu0 %v2890, 8
      %v3423 = vpop.permute.xlu0 %3422
      %3424 = vrot.lane.b32.xlu0 %v2891, 8
      %v3425 = vpop.permute.xlu0 %3424
      %3426 = vrot.lane.b32.xlu0 %v2892, 8
      %v3427 = vpop.permute.xlu0 %3426
      %3428 = vrot.lane.b32.xlu0 %v2893, 8
      %v3429 = vpop.permute.xlu0 %3428
      %3430 = vrot.lane.b32.xlu0 %v2894, 8
      %v3431 = vpop.permute.xlu0 %3430
      %3432 = vrot.lane.b32.xlu0 %v2895, 8
      %v3433 = vpop.permute.xlu0 %3432
      %3434 = vrot.lane.b32.xlu0 %v2896, 8
      %v3435 = vpop.permute.xlu0 %3434
      %3436 = vrot.lane.b32.xlu0 %v2897, 8
      %v3437 = vpop.permute.xlu0 %3436
      %3438 = vrot.lane.b32.xlu0 %v2898, 8
      %v3439 = vpop.permute.xlu0 %3438
      %3440 = vrot.lane.b32.xlu0 %v2899, 8
      %v3441 = vpop.permute.xlu0 %3440
      %3442 = vrot.lane.b32.xlu0 %v2900, 8
      %v3443 = vpop.permute.xlu0 %3442
      %3444 = vrot.lane.b32.xlu0 %v2901, 8
      %v3445 = vpop.permute.xlu0 %3444
      %3446 = vrot.lane.b32.xlu0 %v2902, 8
      %v3447 = vpop.permute.xlu0 %3446
      %3448 = vrot.lane.b32.xlu0 %v2903, 8
      %v3449 = vpop.permute.xlu0 %3448
      %3450 = vrot.lane.b32.xlu0 %v2904, 8
      %v3451 = vpop.permute.xlu0 %3450
      %3452 = vrot.lane.b32.xlu0 %v2905, 8
      %v3453 = vpop.permute.xlu0 %3452
      %3518 = vrot.lane.b32.xlu0 %v2907, 16
      %v3519 = vpop.permute.xlu0 %3518
      %3520 = vrot.lane.b32.xlu0 %v2908, 16
      %v3521 = vpop.permute.xlu0 %3520
      %3522 = vrot.lane.b32.xlu0 %v2909, 16
      %v3523 = vpop.permute.xlu0 %3522
      %3524 = vrot.lane.b32.xlu0 %v2910, 16
      %v3525 = vpop.permute.xlu0 %3524
      %3526 = vrot.lane.b32.xlu0 %v2911, 16
      %v3527 = vpop.permute.xlu0 %3526
      %3528 = vrot.lane.b32.xlu0 %v2912, 16
      %v3529 = vpop.permute.xlu0 %3528
      %3530 = vrot.lane.b32.xlu0 %v2913, 16
      %v3531 = vpop.permute.xlu0 %3530
      %3532 = vrot.lane.b32.xlu0 %v2914, 16
      %v3533 = vpop.permute.xlu0 %3532
      %3534 = vrot.lane.b32.xlu0 %v2915, 16
      %v3535 = vpop.permute.xlu0 %3534
      %3536 = vrot.lane.b32.xlu0 %v2916, 16
      %v3537 = vpop.permute.xlu0 %3536
      %3538 = vrot.lane.b32.xlu0 %v2917, 16
      %v3539 = vpop.permute.xlu0 %3538
      %3540 = vrot.lane.b32.xlu0 %v2918, 16
      %v3541 = vpop.permute.xlu0 %3540
      %3542 = vrot.lane.b32.xlu0 %v2919, 16
      %v3543 = vpop.permute.xlu0 %3542
      %3544 = vrot.lane.b32.xlu0 %v2920, 16
      %v3545 = vpop.permute.xlu0 %3544
      %3546 = vrot.lane.b32.xlu0 %v2921, 16
      %v3547 = vpop.permute.xlu0 %3546
      %3548 = vrot.lane.b32.xlu0 %v2922, 16
      %v3549 = vpop.permute.xlu0 %3548
      %3550 = vrot.lane.b32.xlu0 %v2923, 16
      %v3551 = vpop.permute.xlu0 %3550
      %3552 = vrot.lane.b32.xlu0 %v2924, 16
      %v3553 = vpop.permute.xlu0 %3552
      %3554 = vrot.lane.b32.xlu0 %v2925, 16
      %v3555 = vpop.permute.xlu0 %3554
      %3556 = vrot.lane.b32.xlu0 %v2926, 16
      %v3557 = vpop.permute.xlu0 %3556
      %3558 = vrot.lane.b32.xlu0 %v2927, 16
      %v3559 = vpop.permute.xlu0 %3558
      %3560 = vrot.lane.b32.xlu0 %v2928, 16
      %v3561 = vpop.permute.xlu0 %3560
      %3562 = vrot.lane.b32.xlu0 %v2929, 16
      %v3563 = vpop.permute.xlu0 %3562
      %3564 = vrot.lane.b32.xlu0 %v2930, 16
      %v3565 = vpop.permute.xlu0 %3564
      %3566 = vrot.lane.b32.xlu0 %v2931, 16
      %v3567 = vpop.permute.xlu0 %3566
      %3568 = vrot.lane.b32.xlu0 %v2932, 16
      %v3569 = vpop.permute.xlu0 %3568
      %3570 = vrot.lane.b32.xlu0 %v2933, 16
      %v3571 = vpop.permute.xlu0 %3570
      %3572 = vrot.lane.b32.xlu0 %v2934, 16
      %v3573 = vpop.permute.xlu0 %3572
      %3574 = vrot.lane.b32.xlu0 %v2935, 16
      %v3575 = vpop.permute.xlu0 %3574
      %3576 = vrot.lane.b32.xlu0 %v2936, 16
      %v3577 = vpop.permute.xlu0 %3576
      %3578 = vrot.lane.b32.xlu0 %v2937, 16
      %v3579 = vpop.permute.xlu0 %3578
      %3580 = vrot.lane.b32.xlu0 %v2938, 16
      %v3581 = vpop.permute.xlu0 %3580
      %3646 = vrot.lane.b32.xlu0 %v2939, 24
      %v3647 = vpop.permute.xlu0 %3646
      %3648 = vrot.lane.b32.xlu0 %v2940, 24
      %v3649 = vpop.permute.xlu0 %3648
      %3650 = vrot.lane.b32.xlu0 %v2941, 24
      %v3651 = vpop.permute.xlu0 %3650
      %3652 = vrot.lane.b32.xlu0 %v2942, 24
      %v3653 = vpop.permute.xlu0 %3652
      %3654 = vrot.lane.b32.xlu0 %v2943, 24
      %v3655 = vpop.permute.xlu0 %3654
      %3656 = vrot.lane.b32.xlu0 %v2944, 24
      %v3657 = vpop.permute.xlu0 %3656
      %3658 = vrot.lane.b32.xlu0 %v2945, 24
      %v3659 = vpop.permute.xlu0 %3658
      %3660 = vrot.lane.b32.xlu0 %v2946, 24
      %v3661 = vpop.permute.xlu0 %3660
      %3662 = vrot.lane.b32.xlu0 %v2947, 24
      %v3663 = vpop.permute.xlu0 %3662
      %3664 = vrot.lane.b32.xlu0 %v2948, 24
      %v3665 = vpop.permute.xlu0 %3664
      %3666 = vrot.lane.b32.xlu0 %v2949, 24
      %v3667 = vpop.permute.xlu0 %3666
      %3668 = vrot.lane.b32.xlu0 %v2950, 24
      %v3669 = vpop.permute.xlu0 %3668
      %3670 = vrot.lane.b32.xlu0 %v2951, 24
      %v3671 = vpop.permute.xlu0 %3670
      %3672 = vrot.lane.b32.xlu0 %v2952, 24
      %v3673 = vpop.permute.xlu0 %3672
      %3674 = vrot.lane.b32.xlu0 %v2953, 24
      %v3675 = vpop.permute.xlu0 %3674
      %3676 = vrot.lane.b32.xlu0 %v2954, 24
      %v3677 = vpop.permute.xlu0 %3676
      %3678 = vrot.lane.b32.xlu0 %v2955, 24
      %v3679 = vpop.permute.xlu0 %3678
      %3680 = vrot.lane.b32.xlu0 %v2956, 24
      %v3681 = vpop.permute.xlu0 %3680
      %3682 = vrot.lane.b32.xlu0 %v2957, 24
      %v3683 = vpop.permute.xlu0 %3682
      %3684 = vrot.lane.b32.xlu0 %v2958, 24
      %v3685 = vpop.permute.xlu0 %3684
      %3686 = vrot.lane.b32.xlu0 %v2959, 24
      %v3687 = vpop.permute.xlu0 %3686
      %3688 = vrot.lane.b32.xlu0 %v2960, 24
      %v3689 = vpop.permute.xlu0 %3688
      %3690 = vrot.lane.b32.xlu0 %v2961, 24
      %v3691 = vpop.permute.xlu0 %3690
      %3692 = vrot.lane.b32.xlu0 %v2962, 24
      %v3693 = vpop.permute.xlu0 %3692
      %3694 = vrot.lane.b32.xlu0 %v2963, 24
      %v3695 = vpop.permute.xlu0 %3694
      %3696 = vrot.lane.b32.xlu0 %v2964, 24
      %v3697 = vpop.permute.xlu0 %3696
      %3698 = vrot.lane.b32.xlu0 %v2965, 24
      %v3699 = vpop.permute.xlu0 %3698
      %3700 = vrot.lane.b32.xlu0 %v2966, 24
      %v3701 = vpop.permute.xlu0 %3700
      %3702 = vrot.lane.b32.xlu0 %v2967, 24
      %v3703 = vpop.permute.xlu0 %3702
      %3704 = vrot.lane.b32.xlu0 %v2968, 24
      %v3705 = vpop.permute.xlu0 %3704
      %3706 = vrot.lane.b32.xlu0 %v2969, 24
      %v3707 = vpop.permute.xlu0 %3706
      %3708 = vrot.lane.b32.xlu0 %v2970, 24
      %v3709 = vpop.permute.xlu0 %3708
      %3774 = vrot.lane.b32.xlu0 %v2971, 32
      %v3775 = vpop.permute.xlu0 %3774
      %3776 = vrot.lane.b32.xlu0 %v2972, 32
      %v3777 = vpop.permute.xlu0 %3776
      %3778 = vrot.lane.b32.xlu0 %v2973, 32
      %v3779 = vpop.permute.xlu0 %3778
      %3780 = vrot.lane.b32.xlu0 %v2974, 32
      %v3781 = vpop.permute.xlu0 %3780
      %3782 = vrot.lane.b32.xlu0 %v2975, 32
      %v3783 = vpop.permute.xlu0 %3782
      %3784 = vrot.lane.b32.xlu0 %v2976, 32
      %v3785 = vpop.permute.xlu0 %3784
      %3786 = vrot.lane.b32.xlu0 %v2977, 32
      %v3787 = vpop.permute.xlu0 %3786
      %3788 = vrot.lane.b32.xlu0 %v2978, 32
      %v3789 = vpop.permute.xlu0 %3788
      %3790 = vrot.lane.b32.xlu0 %v2979, 32
      %v3791 = vpop.permute.xlu0 %3790
      %3792 = vrot.lane.b32.xlu0 %v2980, 32
      %v3793 = vpop.permute.xlu0 %3792
      %3794 = vrot.lane.b32.xlu0 %v2981, 32
      %v3795 = vpop.permute.xlu0 %3794
      %3796 = vrot.lane.b32.xlu0 %v2982, 32
      %v3797 = vpop.permute.xlu0 %3796
      %3798 = vrot.lane.b32.xlu0 %v2983, 32
      %v3799 = vpop.permute.xlu0 %3798
      %3800 = vrot.lane.b32.xlu0 %v2984, 32
      %v3801 = vpop.permute.xlu0 %3800
      %3802 = vrot.lane.b32.xlu0 %v2985, 32
      %v3803 = vpop.permute.xlu0 %3802
      %3804 = vrot.lane.b32.xlu0 %v2986, 32
      %v3805 = vpop.permute.xlu0 %3804
      %3806 = vrot.lane.b32.xlu0 %v2987, 32
      %v3807 = vpop.permute.xlu0 %3806
      %3808 = vrot.lane.b32.xlu0 %v2988, 32
      %v3809 = vpop.permute.xlu0 %3808
      %3810 = vrot.lane.b32.xlu0 %v2989, 32
      %v3811 = vpop.permute.xlu0 %3810
      %3812 = vrot.lane.b32.xlu0 %v2990, 32
      %v3813 = vpop.permute.xlu0 %3812
      %3814 = vrot.lane.b32.xlu0 %v2991, 32
      %v3815 = vpop.permute.xlu0 %3814
      %3816 = vrot.lane.b32.xlu0 %v2992, 32
      %v3817 = vpop.permute.xlu0 %3816
      %3818 = vrot.lane.b32.xlu0 %v2993, 32
      %v3819 = vpop.permute.xlu0 %3818
      %3820 = vrot.lane.b32.xlu0 %v2994, 32
      %v3821 = vpop.permute.xlu0 %3820
      %3822 = vrot.lane.b32.xlu0 %v2995, 32
      %v3823 = vpop.permute.xlu0 %3822
      %3824 = vrot.lane.b32.xlu0 %v2996, 32
      %v3825 = vpop.permute.xlu0 %3824
      %3826 = vrot.lane.b32.xlu0 %v2997, 32
      %v3827 = vpop.permute.xlu0 %3826
      %3828 = vrot.lane.b32.xlu0 %v2998, 32
      %v3829 = vpop.permute.xlu0 %3828
      %3830 = vrot.lane.b32.xlu0 %v2999, 32
      %v3831 = vpop.permute.xlu0 %3830
      %3832 = vrot.lane.b32.xlu0 %v3000, 32
      %v3833 = vpop.permute.xlu0 %3832
      %3834 = vrot.lane.b32.xlu0 %v3001, 32
      %v3835 = vpop.permute.xlu0 %3834
      %3836 = vrot.lane.b32.xlu0 %v3002, 32
      %v3837 = vpop.permute.xlu0 %3836
      %3902 = vrot.lane.b32.xlu0 %v3003, 40
      %v3903 = vpop.permute.xlu0 %3902
      %3904 = vrot.lane.b32.xlu0 %v3004, 40
      %v3905 = vpop.permute.xlu0 %3904
      %3906 = vrot.lane.b32.xlu0 %v3005, 40
      %v3907 = vpop.permute.xlu0 %3906
      %3908 = vrot.lane.b32.xlu0 %v3006, 40
      %v3909 = vpop.permute.xlu0 %3908
      %3910 = vrot.lane.b32.xlu0 %v3007, 40
      %v3911 = vpop.permute.xlu0 %3910
      %3912 = vrot.lane.b32.xlu0 %v3008, 40
      %v3913 = vpop.permute.xlu0 %3912
      %3914 = vrot.lane.b32.xlu0 %v3009, 40
      %v3915 = vpop.permute.xlu0 %3914
      %3916 = vrot.lane.b32.xlu0 %v3010, 40
      %v3917 = vpop.permute.xlu0 %3916
      %3918 = vrot.lane.b32.xlu0 %v3011, 40
      %v3919 = vpop.permute.xlu0 %3918
      %3920 = vrot.lane.b32.xlu0 %v3012, 40
      %v3921 = vpop.permute.xlu0 %3920
      %3922 = vrot.lane.b32.xlu0 %v3013, 40
      %v3923 = vpop.permute.xlu0 %3922
      %3924 = vrot.lane.b32.xlu0 %v3014, 40
      %v3925 = vpop.permute.xlu0 %3924
      %3926 = vrot.lane.b32.xlu0 %v3015, 40
      %v3927 = vpop.permute.xlu0 %3926
      %3928 = vrot.lane.b32.xlu0 %v3016, 40
      %v3929 = vpop.permute.xlu0 %3928
      %3930 = vrot.lane.b32.xlu0 %v3017, 40
      %v3931 = vpop.permute.xlu0 %3930
      %3932 = vrot.lane.b32.xlu0 %v3018, 40
      %v3933 = vpop.permute.xlu0 %3932
      %3934 = vrot.lane.b32.xlu0 %v3019, 40
      %v3935 = vpop.permute.xlu0 %3934
      %3936 = vrot.lane.b32.xlu0 %v3020, 40
      %v3937 = vpop.permute.xlu0 %3936
      %3938 = vrot.lane.b32.xlu0 %v3021, 40
      %v3939 = vpop.permute.xlu0 %3938
      %3940 = vrot.lane.b32.xlu0 %v3022, 40
      %v3941 = vpop.permute.xlu0 %3940
      %3942 = vrot.lane.b32.xlu0 %v3023, 40
      %v3943 = vpop.permute.xlu0 %3942
      %3944 = vrot.lane.b32.xlu0 %v3024, 40
      %v3945 = vpop.permute.xlu0 %3944
      %3946 = vrot.lane.b32.xlu0 %v3025, 40
      %v3947 = vpop.permute.xlu0 %3946
      %3948 = vrot.lane.b32.xlu0 %v3026, 40
      %v3949 = vpop.permute.xlu0 %3948
      %3950 = vrot.lane.b32.xlu0 %v3027, 40
      %v3951 = vpop.permute.xlu0 %3950
      %3952 = vrot.lane.b32.xlu0 %v3028, 40
      %v3953 = vpop.permute.xlu0 %3952
      %3954 = vrot.lane.b32.xlu0 %v3029, 40
      %v3955 = vpop.permute.xlu0 %3954
      %3956 = vrot.lane.b32.xlu0 %v3030, 40
      %v3957 = vpop.permute.xlu0 %3956
      %3958 = vrot.lane.b32.xlu0 %v3031, 40
      %v3959 = vpop.permute.xlu0 %3958
      %3960 = vrot.lane.b32.xlu0 %v3032, 40
      %v3961 = vpop.permute.xlu0 %3960
      %3962 = vrot.lane.b32.xlu0 %v3033, 40
      %v3963 = vpop.permute.xlu0 %3962
      %3964 = vrot.lane.b32.xlu0 %v3034, 40
      %v3965 = vpop.permute.xlu0 %3964
      %4030 = vrot.lane.b32.xlu0 %v3036, 48
      %v4031 = vpop.permute.xlu0 %4030
      %4032 = vrot.lane.b32.xlu0 %v3037, 48
      %v4033 = vpop.permute.xlu0 %4032
      %4034 = vrot.lane.b32.xlu0 %v3038, 48
      %v4035 = vpop.permute.xlu0 %4034
      %4036 = vrot.lane.b32.xlu0 %v3039, 48
      %v4037 = vpop.permute.xlu0 %4036
      %4038 = vrot.lane.b32.xlu0 %v3040, 48
      %v4039 = vpop.permute.xlu0 %4038
      %4040 = vrot.lane.b32.xlu0 %v3041, 48
      %v4041 = vpop.permute.xlu0 %4040
      %4042 = vrot.lane.b32.xlu0 %v3042, 48
      %v4043 = vpop.permute.xlu0 %4042
      %4044 = vrot.lane.b32.xlu0 %v3043, 48
      %v4045 = vpop.permute.xlu0 %4044
      %4046 = vrot.lane.b32.xlu0 %v3044, 48
      %v4047 = vpop.permute.xlu0 %4046
      %4048 = vrot.lane.b32.xlu0 %v3045, 48
      %v4049 = vpop.permute.xlu0 %4048
      %4050 = vrot.lane.b32.xlu0 %v3046, 48
      %v4051 = vpop.permute.xlu0 %4050
      %4052 = vrot.lane.b32.xlu0 %v3047, 48
      %v4053 = vpop.permute.xlu0 %4052
      %4054 = vrot.lane.b32.xlu0 %v3048, 48
      %v4055 = vpop.permute.xlu0 %4054
      %4056 = vrot.lane.b32.xlu0 %v3049, 48
      %v4057 = vpop.permute.xlu0 %4056
      %4058 = vrot.lane.b32.xlu0 %v3050, 48
      %v4059 = vpop.permute.xlu0 %4058
      %4060 = vrot.lane.b32.xlu0 %v3051, 48
      %v4061 = vpop.permute.xlu0 %4060
      %4062 = vrot.lane.b32.xlu0 %v3052, 48
      %v4063 = vpop.permute.xlu0 %4062
      %4064 = vrot.lane.b32.xlu0 %v3053, 48
      %v4065 = vpop.permute.xlu0 %4064
      %4066 = vrot.lane.b32.xlu0 %v3054, 48
      %v4067 = vpop.permute.xlu0 %4066
      %4068 = vrot.lane.b32.xlu0 %v3055, 48
      %v4069 = vpop.permute.xlu0 %4068
      %4070 = vrot.lane.b32.xlu0 %v3056, 48
      %v4071 = vpop.permute.xlu0 %4070
      %4072 = vrot.lane.b32.xlu0 %v3057, 48
      %v4073 = vpop.permute.xlu0 %4072
      %4074 = vrot.lane.b32.xlu0 %v3058, 48
      %v4075 = vpop.permute.xlu0 %4074
      %4076 = vrot.lane.b32.xlu0 %v3059, 48
      %v4077 = vpop.permute.xlu0 %4076
      %4078 = vrot.lane.b32.xlu0 %v3060, 48
      %v4079 = vpop.permute.xlu0 %4078
      %4080 = vrot.lane.b32.xlu0 %v3061, 48
      %v4081 = vpop.permute.xlu0 %4080
      %4082 = vrot.lane.b32.xlu0 %v3062, 48
      %v4083 = vpop.permute.xlu0 %4082
      %4084 = vrot.lane.b32.xlu0 %v3063, 48
      %v4085 = vpop.permute.xlu0 %4084
      %4086 = vrot.lane.b32.xlu0 %v3064, 48
      %v4087 = vpop.permute.xlu0 %4086
      %4088 = vrot.lane.b32.xlu0 %v3065, 48
      %v4089 = vpop.permute.xlu0 %4088
      %4090 = vrot.lane.b32.xlu0 %v3066, 48
      %v4091 = vpop.permute.xlu0 %4090
      %4092 = vrot.lane.b32.xlu0 %v3067, 48
      %v4093 = vpop.permute.xlu0 %4092
      %4158 = vrot.lane.b32.xlu0 %v3068, 56
      %v4159 = vpop.permute.xlu0 %4158
      %4160 = vrot.lane.b32.xlu0 %v3069, 56
      %v4161 = vpop.permute.xlu0 %4160
      %4162 = vrot.lane.b32.xlu0 %v3070, 56
      %v4163 = vpop.permute.xlu0 %4162
      %4164 = vrot.lane.b32.xlu0 %v3071, 56
      %v4165 = vpop.permute.xlu0 %4164
      %4166 = vrot.lane.b32.xlu0 %v3072, 56
      %v4167 = vpop.permute.xlu0 %4166
      %4168 = vrot.lane.b32.xlu0 %v3073, 56
      %v4169 = vpop.permute.xlu0 %4168
      %4170 = vrot.lane.b32.xlu0 %v3074, 56
      %v4171 = vpop.permute.xlu0 %4170
      %4172 = vrot.lane.b32.xlu0 %v3075, 56
      %v4173 = vpop.permute.xlu0 %4172
      %4174 = vrot.lane.b32.xlu0 %v3076, 56
      %v4175 = vpop.permute.xlu0 %4174
      %4176 = vrot.lane.b32.xlu0 %v3077, 56
      %v4177 = vpop.permute.xlu0 %4176
      %4178 = vrot.lane.b32.xlu0 %v3078, 56
      %v4179 = vpop.permute.xlu0 %4178
      %4180 = vrot.lane.b32.xlu0 %v3079, 56
      %v4181 = vpop.permute.xlu0 %4180
      %4182 = vrot.lane.b32.xlu0 %v3080, 56
      %v4183 = vpop.permute.xlu0 %4182
      %4184 = vrot.lane.b32.xlu0 %v3081, 56
      %v4185 = vpop.permute.xlu0 %4184
      %4186 = vrot.lane.b32.xlu0 %v3082, 56
      %v4187 = vpop.permute.xlu0 %4186
      %4188 = vrot.lane.b32.xlu0 %v3083, 56
      %v4189 = vpop.permute.xlu0 %4188
      %4190 = vrot.lane.b32.xlu0 %v3084, 56
      %v4191 = vpop.permute.xlu0 %4190
      %4192 = vrot.lane.b32.xlu0 %v3085, 56
      %v4193 = vpop.permute.xlu0 %4192
      %4194 = vrot.lane.b32.xlu0 %v3086, 56
      %v4195 = vpop.permute.xlu0 %4194
      %4196 = vrot.lane.b32.xlu0 %v3087, 56
      %v4197 = vpop.permute.xlu0 %4196
      %4198 = vrot.lane.b32.xlu0 %v3088, 56
      %v4199 = vpop.permute.xlu0 %4198
      %4200 = vrot.lane.b32.xlu0 %v3089, 56
      %v4201 = vpop.permute.xlu0 %4200
      %4202 = vrot.lane.b32.xlu0 %v3090, 56
      %v4203 = vpop.permute.xlu0 %4202
      %4204 = vrot.lane.b32.xlu0 %v3091, 56
      %v4205 = vpop.permute.xlu0 %4204
      %4206 = vrot.lane.b32.xlu0 %v3092, 56
      %v4207 = vpop.permute.xlu0 %4206
      %4208 = vrot.lane.b32.xlu0 %v3093, 56
      %v4209 = vpop.permute.xlu0 %4208
      %4210 = vrot.lane.b32.xlu0 %v3094, 56
      %v4211 = vpop.permute.xlu0 %4210
      %4212 = vrot.lane.b32.xlu0 %v3095, 56
      %v4213 = vpop.permute.xlu0 %4212
      %4214 = vrot.lane.b32.xlu0 %v3096, 56
      %v4215 = vpop.permute.xlu0 %4214
      %4216 = vrot.lane.b32.xlu0 %v3097, 56
      %v4217 = vpop.permute.xlu0 %4216
      %4218 = vrot.lane.b32.xlu0 %v3098, 56
      %v4219 = vpop.permute.xlu0 %4218
      %4220 = vrot.lane.b32.xlu0 %v3099, 56
      %v4221 = vpop.permute.xlu0 %4220
      %4286 = vrot.lane.b32.xlu0 %v3101, 64
      %v4287 = vpop.permute.xlu0 %4286
      %4288 = vrot.lane.b32.xlu0 %v3102, 64
      %v4289 = vpop.permute.xlu0 %4288
      %4290 = vrot.lane.b32.xlu0 %v3103, 64
      %v4291 = vpop.permute.xlu0 %4290
      %4292 = vrot.lane.b32.xlu0 %v3104, 64
      %v4293 = vpop.permute.xlu0 %4292
      %4294 = vrot.lane.b32.xlu0 %v3105, 64
      %v4295 = vpop.permute.xlu0 %4294
      %4296 = vrot.lane.b32.xlu0 %v3106, 64
      %v4297 = vpop.permute.xlu0 %4296
      %4298 = vrot.lane.b32.xlu0 %v3107, 64
      %v4299 = vpop.permute.xlu0 %4298
      %4300 = vrot.lane.b32.xlu0 %v3108, 64
      %v4301 = vpop.permute.xlu0 %4300
      %4302 = vrot.lane.b32.xlu0 %v3109, 64
      %v4303 = vpop.permute.xlu0 %4302
      %4304 = vrot.lane.b32.xlu0 %v3110, 64
      %v4305 = vpop.permute.xlu0 %4304
      %4306 = vrot.lane.b32.xlu0 %v3111, 64
      %v4307 = vpop.permute.xlu0 %4306
      %4308 = vrot.lane.b32.xlu0 %v3112, 64
      %v4309 = vpop.permute.xlu0 %4308
      %4310 = vrot.lane.b32.xlu0 %v3113, 64
      %v4311 = vpop.permute.xlu0 %4310
      %4312 = vrot.lane.b32.xlu0 %v3114, 64
      %v4313 = vpop.permute.xlu0 %4312
      %4314 = vrot.lane.b32.xlu0 %v3115, 64
      %v4315 = vpop.permute.xlu0 %4314
      %4316 = vrot.lane.b32.xlu0 %v3116, 64
      %v4317 = vpop.permute.xlu0 %4316
      %4318 = vrot.lane.b32.xlu0 %v3117, 64
      %v4319 = vpop.permute.xlu0 %4318
      %4320 = vrot.lane.b32.xlu0 %v3118, 64
      %v4321 = vpop.permute.xlu0 %4320
      %4322 = vrot.lane.b32.xlu0 %v3119, 64
      %v4323 = vpop.permute.xlu0 %4322
      %4324 = vrot.lane.b32.xlu0 %v3120, 64
      %v4325 = vpop.permute.xlu0 %4324
      %4326 = vrot.lane.b32.xlu0 %v3121, 64
      %v4327 = vpop.permute.xlu0 %4326
      %4328 = vrot.lane.b32.xlu0 %v3122, 64
      %v4329 = vpop.permute.xlu0 %4328
      %4330 = vrot.lane.b32.xlu0 %v3123, 64
      %v4331 = vpop.permute.xlu0 %4330
      %4332 = vrot.lane.b32.xlu0 %v3124, 64
      %v4333 = vpop.permute.xlu0 %4332
      %4334 = vrot.lane.b32.xlu0 %v3125, 64
      %v4335 = vpop.permute.xlu0 %4334
      %4336 = vrot.lane.b32.xlu0 %v3126, 64
      %v4337 = vpop.permute.xlu0 %4336
      %4338 = vrot.lane.b32.xlu0 %v3127, 64
      %v4339 = vpop.permute.xlu0 %4338
      %4340 = vrot.lane.b32.xlu0 %v3128, 64
      %v4341 = vpop.permute.xlu0 %4340
      %4342 = vrot.lane.b32.xlu0 %v3129, 64
      %v4343 = vpop.permute.xlu0 %4342
      %4344 = vrot.lane.b32.xlu0 %v3130, 64
      %v4345 = vpop.permute.xlu0 %4344
      %4346 = vrot.lane.b32.xlu0 %v3131, 64
      %v4347 = vpop.permute.xlu0 %4346
      %4348 = vrot.lane.b32.xlu0 %v3132, 64
      %v4349 = vpop.permute.xlu0 %4348
      %4414 = vrot.lane.b32.xlu0 %v3133, 72
      %v4415 = vpop.permute.xlu0 %4414
      %4416 = vrot.lane.b32.xlu0 %v3134, 72
      %v4417 = vpop.permute.xlu0 %4416
      %4418 = vrot.lane.b32.xlu0 %v3135, 72
      %v4419 = vpop.permute.xlu0 %4418
      %4420 = vrot.lane.b32.xlu0 %v3136, 72
      %v4421 = vpop.permute.xlu0 %4420
      %4422 = vrot.lane.b32.xlu0 %v3137, 72
      %v4423 = vpop.permute.xlu0 %4422
      %4424 = vrot.lane.b32.xlu0 %v3138, 72
      %v4425 = vpop.permute.xlu0 %4424
      %4426 = vrot.lane.b32.xlu0 %v3139, 72
      %v4427 = vpop.permute.xlu0 %4426
      %4428 = vrot.lane.b32.xlu0 %v3140, 72
      %v4429 = vpop.permute.xlu0 %4428
      %4430 = vrot.lane.b32.xlu0 %v3141, 72
      %v4431 = vpop.permute.xlu0 %4430
      %4432 = vrot.lane.b32.xlu0 %v3142, 72
      %v4433 = vpop.permute.xlu0 %4432
      %4434 = vrot.lane.b32.xlu0 %v3143, 72
      %v4435 = vpop.permute.xlu0 %4434
      %4436 = vrot.lane.b32.xlu0 %v3144, 72
      %v4437 = vpop.permute.xlu0 %4436
      %4438 = vrot.lane.b32.xlu0 %v3145, 72
      %v4439 = vpop.permute.xlu0 %4438
      %4440 = vrot.lane.b32.xlu0 %v3146, 72
      %v4441 = vpop.permute.xlu0 %4440
      %4442 = vrot.lane.b32.xlu0 %v3147, 72
      %v4443 = vpop.permute.xlu0 %4442
      %4444 = vrot.lane.b32.xlu0 %v3148, 72
      %v4445 = vpop.permute.xlu0 %4444
      %4446 = vrot.lane.b32.xlu0 %v3149, 72
      %v4447 = vpop.permute.xlu0 %4446
      %4448 = vrot.lane.b32.xlu0 %v3150, 72
      %v4449 = vpop.permute.xlu0 %4448
      %4450 = vrot.lane.b32.xlu0 %v3151, 72
      %v4451 = vpop.permute.xlu0 %4450
      %4452 = vrot.lane.b32.xlu0 %v3152, 72
      %v4453 = vpop.permute.xlu0 %4452
      %4454 = vrot.lane.b32.xlu0 %v3153, 72
      %v4455 = vpop.permute.xlu0 %4454
      %4456 = vrot.lane.b32.xlu0 %v3154, 72
      %v4457 = vpop.permute.xlu0 %4456
      %4458 = vrot.lane.b32.xlu0 %v3155, 72
      %v4459 = vpop.permute.xlu0 %4458
      %4460 = vrot.lane.b32.xlu0 %v3156, 72
      %v4461 = vpop.permute.xlu0 %4460
      %4462 = vrot.lane.b32.xlu0 %v3157, 72
      %v4463 = vpop.permute.xlu0 %4462
      %4464 = vrot.lane.b32.xlu0 %v3158, 72
      %v4465 = vpop.permute.xlu0 %4464
      %4466 = vrot.lane.b32.xlu0 %v3159, 72
      %v4467 = vpop.permute.xlu0 %4466
      %4468 = vrot.lane.b32.xlu0 %v3160, 72
      %v4469 = vpop.permute.xlu0 %4468
      %4470 = vrot.lane.b32.xlu0 %v3161, 72
      %v4471 = vpop.permute.xlu0 %4470
      %4472 = vrot.lane.b32.xlu0 %v3162, 72
      %v4473 = vpop.permute.xlu0 %4472
      %4474 = vrot.lane.b32.xlu0 %v3163, 72
      %v4475 = vpop.permute.xlu0 %4474
      %4476 = vrot.lane.b32.xlu0 %v3164, 72
      %v4477 = vpop.permute.xlu0 %4476
      %4542 = vrot.lane.b32.xlu0 %v3165, 80
      %v4543 = vpop.permute.xlu0 %4542
      %4544 = vrot.lane.b32.xlu0 %v3166, 80
      %v4545 = vpop.permute.xlu0 %4544
      %4546 = vrot.lane.b32.xlu0 %v3167, 80
      %v4547 = vpop.permute.xlu0 %4546
      %4548 = vrot.lane.b32.xlu0 %v3168, 80
      %v4549 = vpop.permute.xlu0 %4548
      %4550 = vrot.lane.b32.xlu0 %v3169, 80
      %v4551 = vpop.permute.xlu0 %4550
      %4552 = vrot.lane.b32.xlu0 %v3170, 80
      %v4553 = vpop.permute.xlu0 %4552
      %4554 = vrot.lane.b32.xlu0 %v3171, 80
      %v4555 = vpop.permute.xlu0 %4554
      %4556 = vrot.lane.b32.xlu0 %v3172, 80
      %v4557 = vpop.permute.xlu0 %4556
      %4558 = vrot.lane.b32.xlu0 %v3173, 80
      %v4559 = vpop.permute.xlu0 %4558
      %4560 = vrot.lane.b32.xlu0 %v3174, 80
      %v4561 = vpop.permute.xlu0 %4560
      %4562 = vrot.lane.b32.xlu0 %v3175, 80
      %v4563 = vpop.permute.xlu0 %4562
      %4564 = vrot.lane.b32.xlu0 %v3176, 80
      %v4565 = vpop.permute.xlu0 %4564
      %4566 = vrot.lane.b32.xlu0 %v3177, 80
      %v4567 = vpop.permute.xlu0 %4566
      %4568 = vrot.lane.b32.xlu0 %v3178, 80
      %v4569 = vpop.permute.xlu0 %4568
      %4570 = vrot.lane.b32.xlu0 %v3179, 80
      %v4571 = vpop.permute.xlu0 %4570
      %4572 = vrot.lane.b32.xlu0 %v3180, 80
      %v4573 = vpop.permute.xlu0 %4572
      %4574 = vrot.lane.b32.xlu0 %v3181, 80
      %v4575 = vpop.permute.xlu0 %4574
      %4576 = vrot.lane.b32.xlu0 %v3182, 80
      %v4577 = vpop.permute.xlu0 %4576
      %4578 = vrot.lane.b32.xlu0 %v3183, 80
      %v4579 = vpop.permute.xlu0 %4578
      %4580 = vrot.lane.b32.xlu0 %v3184, 80
      %v4581 = vpop.permute.xlu0 %4580
      %4582 = vrot.lane.b32.xlu0 %v3185, 80
      %v4583 = vpop.permute.xlu0 %4582
      %4584 = vrot.lane.b32.xlu0 %v3186, 80
      %v4585 = vpop.permute.xlu0 %4584
      %4586 = vrot.lane.b32.xlu0 %v3187, 80
      %v4587 = vpop.permute.xlu0 %4586
      %4588 = vrot.lane.b32.xlu0 %v3188, 80
      %v4589 = vpop.permute.xlu0 %4588
      %4590 = vrot.lane.b32.xlu0 %v3189, 80
      %v4591 = vpop.permute.xlu0 %4590
      %4592 = vrot.lane.b32.xlu0 %v3190, 80
      %v4593 = vpop.permute.xlu0 %4592
      %4594 = vrot.lane.b32.xlu0 %v3191, 80
      %v4595 = vpop.permute.xlu0 %4594
      %4596 = vrot.lane.b32.xlu0 %v3192, 80
      %v4597 = vpop.permute.xlu0 %4596
      %4598 = vrot.lane.b32.xlu0 %v3193, 80
      %v4599 = vpop.permute.xlu0 %4598
      %4600 = vrot.lane.b32.xlu0 %v3194, 80
      %v4601 = vpop.permute.xlu0 %4600
      %4602 = vrot.lane.b32.xlu0 %v3195, 80
      %v4603 = vpop.permute.xlu0 %4602
      %4604 = vrot.lane.b32.xlu0 %v3196, 80
      %v4605 = vpop.permute.xlu0 %4604
      %4670 = vrot.lane.b32.xlu0 %v3197, 88
      %v4671 = vpop.permute.xlu0 %4670
      %4672 = vrot.lane.b32.xlu0 %v3198, 88
      %v4673 = vpop.permute.xlu0 %4672
      %4674 = vrot.lane.b32.xlu0 %v3199, 88
      %v4675 = vpop.permute.xlu0 %4674
      %4676 = vrot.lane.b32.xlu0 %v3200, 88
      %v4677 = vpop.permute.xlu0 %4676
      %4678 = vrot.lane.b32.xlu0 %v3201, 88
      %v4679 = vpop.permute.xlu0 %4678
      %4680 = vrot.lane.b32.xlu0 %v3202, 88
      %v4681 = vpop.permute.xlu0 %4680
      %4682 = vrot.lane.b32.xlu0 %v3203, 88
      %v4683 = vpop.permute.xlu0 %4682
      %4684 = vrot.lane.b32.xlu0 %v3204, 88
      %v4685 = vpop.permute.xlu0 %4684
      %4686 = vrot.lane.b32.xlu0 %v3205, 88
      %v4687 = vpop.permute.xlu0 %4686
      %4688 = vrot.lane.b32.xlu0 %v3206, 88
      %v4689 = vpop.permute.xlu0 %4688
      %4690 = vrot.lane.b32.xlu0 %v3207, 88
      %v4691 = vpop.permute.xlu0 %4690
      %4692 = vrot.lane.b32.xlu0 %v3208, 88
      %v4693 = vpop.permute.xlu0 %4692
      %4694 = vrot.lane.b32.xlu0 %v3209, 88
      %v4695 = vpop.permute.xlu0 %4694
      %4696 = vrot.lane.b32.xlu0 %v3210, 88
      %v4697 = vpop.permute.xlu0 %4696
      %4698 = vrot.lane.b32.xlu0 %v3211, 88
      %v4699 = vpop.permute.xlu0 %4698
      %4700 = vrot.lane.b32.xlu0 %v3212, 88
      %v4701 = vpop.permute.xlu0 %4700
      %4702 = vrot.lane.b32.xlu0 %v3213, 88
      %v4703 = vpop.permute.xlu0 %4702
      %4704 = vrot.lane.b32.xlu0 %v3214, 88
      %v4705 = vpop.permute.xlu0 %4704
      %4706 = vrot.lane.b32.xlu0 %v3215, 88
      %v4707 = vpop.permute.xlu0 %4706
      %4708 = vrot.lane.b32.xlu0 %v3216, 88
      %v4709 = vpop.permute.xlu0 %4708
      %4710 = vrot.lane.b32.xlu0 %v3217, 88
      %v4711 = vpop.permute.xlu0 %4710
      %4712 = vrot.lane.b32.xlu0 %v3218, 88
      %v4713 = vpop.permute.xlu0 %4712
      %4714 = vrot.lane.b32.xlu0 %v3219, 88
      %v4715 = vpop.permute.xlu0 %4714
      %4716 = vrot.lane.b32.xlu0 %v3220, 88
      %v4717 = vpop.permute.xlu0 %4716
      %4718 = vrot.lane.b32.xlu0 %v3221, 88
      %v4719 = vpop.permute.xlu0 %4718
      %4720 = vrot.lane.b32.xlu0 %v3222, 88
      %v4721 = vpop.permute.xlu0 %4720
      %4722 = vrot.lane.b32.xlu0 %v3223, 88
      %v4723 = vpop.permute.xlu0 %4722
      %4724 = vrot.lane.b32.xlu0 %v3224, 88
      %v4725 = vpop.permute.xlu0 %4724
      %4726 = vrot.lane.b32.xlu0 %v3225, 88
      %v4727 = vpop.permute.xlu0 %4726
      %4728 = vrot.lane.b32.xlu0 %v3226, 88
      %v4729 = vpop.permute.xlu0 %4728
      %4730 = vrot.lane.b32.xlu0 %v3227, 88
      %v4731 = vpop.permute.xlu0 %4730
      %4732 = vrot.lane.b32.xlu0 %v3228, 88
      %v4733 = vpop.permute.xlu0 %4732
      %4798 = vrot.lane.b32.xlu0 %v3230, 96
      %v4799 = vpop.permute.xlu0 %4798
      %4800 = vrot.lane.b32.xlu0 %v3231, 96
      %v4801 = vpop.permute.xlu0 %4800
      %4802 = vrot.lane.b32.xlu0 %v3232, 96
      %v4803 = vpop.permute.xlu0 %4802
      %4804 = vrot.lane.b32.xlu0 %v3233, 96
      %v4805 = vpop.permute.xlu0 %4804
      %4806 = vrot.lane.b32.xlu0 %v3234, 96
      %v4807 = vpop.permute.xlu0 %4806
      %4808 = vrot.lane.b32.xlu0 %v3235, 96
      %v4809 = vpop.permute.xlu0 %4808
      %4810 = vrot.lane.b32.xlu0 %v3236, 96
      %v4811 = vpop.permute.xlu0 %4810
      %4812 = vrot.lane.b32.xlu0 %v3237, 96
      %v4813 = vpop.permute.xlu0 %4812
      %4814 = vrot.lane.b32.xlu0 %v3238, 96
      %v4815 = vpop.permute.xlu0 %4814
      %4816 = vrot.lane.b32.xlu0 %v3239, 96
      %v4817 = vpop.permute.xlu0 %4816
      %4818 = vrot.lane.b32.xlu0 %v3240, 96
      %v4819 = vpop.permute.xlu0 %4818
      %4820 = vrot.lane.b32.xlu0 %v3241, 96
      %v4821 = vpop.permute.xlu0 %4820
      %4822 = vrot.lane.b32.xlu0 %v3242, 96
      %v4823 = vpop.permute.xlu0 %4822
      %4824 = vrot.lane.b32.xlu0 %v3243, 96
      %v4825 = vpop.permute.xlu0 %4824
      %4826 = vrot.lane.b32.xlu0 %v3244, 96
      %v4827 = vpop.permute.xlu0 %4826
      %4828 = vrot.lane.b32.xlu0 %v3245, 96
      %v4829 = vpop.permute.xlu0 %4828
      %4830 = vrot.lane.b32.xlu0 %v3246, 96
      %v4831 = vpop.permute.xlu0 %4830
      %4832 = vrot.lane.b32.xlu0 %v3247, 96
      %v4833 = vpop.permute.xlu0 %4832
      %4834 = vrot.lane.b32.xlu0 %v3248, 96
      %v4835 = vpop.permute.xlu0 %4834
      %4836 = vrot.lane.b32.xlu0 %v3249, 96
      %v4837 = vpop.permute.xlu0 %4836
      %4838 = vrot.lane.b32.xlu0 %v3250, 96
      %v4839 = vpop.permute.xlu0 %4838
      %4840 = vrot.lane.b32.xlu0 %v3251, 96
      %v4841 = vpop.permute.xlu0 %4840
      %4842 = vrot.lane.b32.xlu0 %v3252, 96
      %v4843 = vpop.permute.xlu0 %4842
      %4844 = vrot.lane.b32.xlu0 %v3253, 96
      %v4845 = vpop.permute.xlu0 %4844
      %4846 = vrot.lane.b32.xlu0 %v3254, 96
      %v4847 = vpop.permute.xlu0 %4846
      %4848 = vrot.lane.b32.xlu0 %v3255, 96
      %v4849 = vpop.permute.xlu0 %4848
      %4850 = vrot.lane.b32.xlu0 %v3256, 96
      %v4851 = vpop.permute.xlu0 %4850
      %4852 = vrot.lane.b32.xlu0 %v3257, 96
      %v4853 = vpop.permute.xlu0 %4852
      %4854 = vrot.lane.b32.xlu0 %v3258, 96
      %v4855 = vpop.permute.xlu0 %4854
      %4856 = vrot.lane.b32.xlu0 %v3259, 96
      %v4857 = vpop.permute.xlu0 %4856
      %4858 = vrot.lane.b32.xlu0 %v3260, 96
      %v4859 = vpop.permute.xlu0 %4858
      %4860 = vrot.lane.b32.xlu0 %v3261, 96
      %v4861 = vpop.permute.xlu0 %4860
      %4926 = vrot.lane.b32.xlu0 %v3262, 104
      %v4927 = vpop.permute.xlu0 %4926
      %4928 = vrot.lane.b32.xlu0 %v3263, 104
      %v4929 = vpop.permute.xlu0 %4928
      %4930 = vrot.lane.b32.xlu0 %v3264, 104
      %v4931 = vpop.permute.xlu0 %4930
      %4932 = vrot.lane.b32.xlu0 %v3265, 104
      %v4933 = vpop.permute.xlu0 %4932
      %4934 = vrot.lane.b32.xlu0 %v3266, 104
      %v4935 = vpop.permute.xlu0 %4934
      %4936 = vrot.lane.b32.xlu0 %v3267, 104
      %v4937 = vpop.permute.xlu0 %4936
      %4938 = vrot.lane.b32.xlu0 %v3268, 104
      %v4939 = vpop.permute.xlu0 %4938
      %4940 = vrot.lane.b32.xlu0 %v3269, 104
      %v4941 = vpop.permute.xlu0 %4940
      %4942 = vrot.lane.b32.xlu0 %v3270, 104
      %v4943 = vpop.permute.xlu0 %4942
      %4944 = vrot.lane.b32.xlu0 %v3271, 104
      %v4945 = vpop.permute.xlu0 %4944
      %4946 = vrot.lane.b32.xlu0 %v3272, 104
      %v4947 = vpop.permute.xlu0 %4946
      %4948 = vrot.lane.b32.xlu0 %v3273, 104
      %v4949 = vpop.permute.xlu0 %4948
      %4950 = vrot.lane.b32.xlu0 %v3274, 104
      %v4951 = vpop.permute.xlu0 %4950
      %4952 = vrot.lane.b32.xlu0 %v3275, 104
      %v4953 = vpop.permute.xlu0 %4952
      %4954 = vrot.lane.b32.xlu0 %v3276, 104
      %v4955 = vpop.permute.xlu0 %4954
      %4956 = vrot.lane.b32.xlu0 %v3277, 104
      %v4957 = vpop.permute.xlu0 %4956
      %4958 = vrot.lane.b32.xlu0 %v3278, 104
      %v4959 = vpop.permute.xlu0 %4958
      %4960 = vrot.lane.b32.xlu0 %v3279, 104
      %v4961 = vpop.permute.xlu0 %4960
      %4962 = vrot.lane.b32.xlu0 %v3280, 104
      %v4963 = vpop.permute.xlu0 %4962
      %4964 = vrot.lane.b32.xlu0 %v3281, 104
      %v4965 = vpop.permute.xlu0 %4964
      %4966 = vrot.lane.b32.xlu0 %v3282, 104
      %v4967 = vpop.permute.xlu0 %4966
      %4968 = vrot.lane.b32.xlu0 %v3283, 104
      %v4969 = vpop.permute.xlu0 %4968
      %4970 = vrot.lane.b32.xlu0 %v3284, 104
      %v4971 = vpop.permute.xlu0 %4970
      %4972 = vrot.lane.b32.xlu0 %v3285, 104
      %v4973 = vpop.permute.xlu0 %4972
      %4974 = vrot.lane.b32.xlu0 %v3286, 104
      %v4975 = vpop.permute.xlu0 %4974
      %4976 = vrot.lane.b32.xlu0 %v3287, 104
      %v4977 = vpop.permute.xlu0 %4976
      %4978 = vrot.lane.b32.xlu0 %v3288, 104
      %v4979 = vpop.permute.xlu0 %4978
      %4980 = vrot.lane.b32.xlu0 %v3289, 104
      %v4981 = vpop.permute.xlu0 %4980
      %4982 = vrot.lane.b32.xlu0 %v3290, 104
      %v4983 = vpop.permute.xlu0 %4982
      %4984 = vrot.lane.b32.xlu0 %v3291, 104
      %v4985 = vpop.permute.xlu0 %4984
      %4986 = vrot.lane.b32.xlu0 %v3292, 104
      %v4987 = vpop.permute.xlu0 %4986
      %4988 = vrot.lane.b32.xlu0 %v3293, 104
      %v4989 = vpop.permute.xlu0 %4988
      %5054 = vrot.lane.b32.xlu0 %v3294, 112
      %v5055 = vpop.permute.xlu0 %5054
      %5056 = vrot.lane.b32.xlu0 %v3295, 112
      %v5057 = vpop.permute.xlu0 %5056
      %5058 = vrot.lane.b32.xlu0 %v3296, 112
      %v5059 = vpop.permute.xlu0 %5058
      %5060 = vrot.lane.b32.xlu0 %v3297, 112
      %v5061 = vpop.permute.xlu0 %5060
      %5062 = vrot.lane.b32.xlu0 %v3298, 112
      %v5063 = vpop.permute.xlu0 %5062
      %5064 = vrot.lane.b32.xlu0 %v3299, 112
      %v5065 = vpop.permute.xlu0 %5064
      %5066 = vrot.lane.b32.xlu0 %v3300, 112
      %v5067 = vpop.permute.xlu0 %5066
      %5068 = vrot.lane.b32.xlu0 %v3301, 112
      %v5069 = vpop.permute.xlu0 %5068
      %5070 = vrot.lane.b32.xlu0 %v3302, 112
      %v5071 = vpop.permute.xlu0 %5070
      %5072 = vrot.lane.b32.xlu0 %v3303, 112
      %v5073 = vpop.permute.xlu0 %5072
      %5074 = vrot.lane.b32.xlu0 %v3304, 112
      %v5075 = vpop.permute.xlu0 %5074
      %5076 = vrot.lane.b32.xlu0 %v3305, 112
      %v5077 = vpop.permute.xlu0 %5076
      %5078 = vrot.lane.b32.xlu0 %v3306, 112
      %v5079 = vpop.permute.xlu0 %5078
      %5080 = vrot.lane.b32.xlu0 %v3307, 112
      %v5081 = vpop.permute.xlu0 %5080
      %5082 = vrot.lane.b32.xlu0 %v3308, 112
      %v5083 = vpop.permute.xlu0 %5082
      %5084 = vrot.lane.b32.xlu0 %v3309, 112
      %v5085 = vpop.permute.xlu0 %5084
      %5086 = vrot.lane.b32.xlu0 %v3310, 112
      %v5087 = vpop.permute.xlu0 %5086
      %5088 = vrot.lane.b32.xlu0 %v3311, 112
      %v5089 = vpop.permute.xlu0 %5088
      %5090 = vrot.lane.b32.xlu0 %v3312, 112
      %v5091 = vpop.permute.xlu0 %5090
      %5092 = vrot.lane.b32.xlu0 %v3313, 112
      %v5093 = vpop.permute.xlu0 %5092
      %5094 = vrot.lane.b32.xlu0 %v3314, 112
      %v5095 = vpop.permute.xlu0 %5094
      %5096 = vrot.lane.b32.xlu0 %v3315, 112
      %v5097 = vpop.permute.xlu0 %5096
      %5098 = vrot.lane.b32.xlu0 %v3316, 112
      %v5099 = vpop.permute.xlu0 %5098
      %5100 = vrot.lane.b32.xlu0 %v3317, 112
      %v5101 = vpop.permute.xlu0 %5100
      %5102 = vrot.lane.b32.xlu0 %v3318, 112
      %v5103 = vpop.permute.xlu0 %5102
      %5104 = vrot.lane.b32.xlu0 %v3319, 112
      %v5105 = vpop.permute.xlu0 %5104
      %5106 = vrot.lane.b32.xlu0 %v3320, 112
      %v5107 = vpop.permute.xlu0 %5106
      %5108 = vrot.lane.b32.xlu0 %v3321, 112
      %v5109 = vpop.permute.xlu0 %5108
      %5110 = vrot.lane.b32.xlu0 %v3322, 112
      %v5111 = vpop.permute.xlu0 %5110
      %5112 = vrot.lane.b32.xlu0 %v3323, 112
      %v5113 = vpop.permute.xlu0 %5112
      %5114 = vrot.lane.b32.xlu0 %v3324, 112
      %v5115 = vpop.permute.xlu0 %5114
      %5116 = vrot.lane.b32.xlu0 %v3325, 112
      %v5117 = vpop.permute.xlu0 %5116
      %5182 = vrot.lane.b32.xlu0 %v3326, 120
      %v5183 = vpop.permute.xlu0 %5182
      %5184 = vrot.lane.b32.xlu0 %v3327, 120
      %v5185 = vpop.permute.xlu0 %5184
      %5186 = vrot.lane.b32.xlu0 %v3328, 120
      %v5187 = vpop.permute.xlu0 %5186
      %5188 = vrot.lane.b32.xlu0 %v3329, 120
      %v5189 = vpop.permute.xlu0 %5188
      %5190 = vrot.lane.b32.xlu0 %v3330, 120
      %v5191 = vpop.permute.xlu0 %5190
      %5192 = vrot.lane.b32.xlu0 %v3331, 120
      %v5193 = vpop.permute.xlu0 %5192
      %5194 = vrot.lane.b32.xlu0 %v3332, 120
      %v5195 = vpop.permute.xlu0 %5194
      %5196 = vrot.lane.b32.xlu0 %v3333, 120
      %v5197 = vpop.permute.xlu0 %5196
      %5198 = vrot.lane.b32.xlu0 %v3334, 120
      %v5199 = vpop.permute.xlu0 %5198
      %5200 = vrot.lane.b32.xlu0 %v3335, 120
      %v5201 = vpop.permute.xlu0 %5200
      %5202 = vrot.lane.b32.xlu0 %v3336, 120
      %v5203 = vpop.permute.xlu0 %5202
      %5204 = vrot.lane.b32.xlu0 %v3337, 120
      %v5205 = vpop.permute.xlu0 %5204
      %5206 = vrot.lane.b32.xlu0 %v3338, 120
      %v5207 = vpop.permute.xlu0 %5206
      %5208 = vrot.lane.b32.xlu0 %v3339, 120
      %v5209 = vpop.permute.xlu0 %5208
      %5210 = vrot.lane.b32.xlu0 %v3340, 120
      %v5211 = vpop.permute.xlu0 %5210
      %5212 = vrot.lane.b32.xlu0 %v3341, 120
      %v5213 = vpop.permute.xlu0 %5212
      %5214 = vrot.lane.b32.xlu0 %v3342, 120
      %v5215 = vpop.permute.xlu0 %5214
      %5216 = vrot.lane.b32.xlu0 %v3343, 120
      %v5217 = vpop.permute.xlu0 %5216
      %5218 = vrot.lane.b32.xlu0 %v3344, 120
      %v5219 = vpop.permute.xlu0 %5218
      %5220 = vrot.lane.b32.xlu0 %v3345, 120
      %v5221 = vpop.permute.xlu0 %5220
      %5222 = vrot.lane.b32.xlu0 %v3346, 120
      %v5223 = vpop.permute.xlu0 %5222
      %5224 = vrot.lane.b32.xlu0 %v3347, 120
      %v5225 = vpop.permute.xlu0 %5224
      %5226 = vrot.lane.b32.xlu0 %v3348, 120
      %v5227 = vpop.permute.xlu0 %5226
      %5228 = vrot.lane.b32.xlu0 %v3349, 120
      %v5229 = vpop.permute.xlu0 %5228
      %5230 = vrot.lane.b32.xlu0 %v3350, 120
      %v5231 = vpop.permute.xlu0 %5230
      %5232 = vrot.lane.b32.xlu0 %v3351, 120
      %v5233 = vpop.permute.xlu0 %5232
      %5234 = vrot.lane.b32.xlu0 %v3352, 120
      %v5235 = vpop.permute.xlu0 %5234
      %5236 = vrot.lane.b32.xlu0 %v3353, 120
      %v5237 = vpop.permute.xlu0 %5236
      %5238 = vrot.lane.b32.xlu0 %v3354, 120
      %v5239 = vpop.permute.xlu0 %5238
      %5240 = vrot.lane.b32.xlu0 %v3355, 120
      %v5241 = vpop.permute.xlu0 %5240
      %5242 = vrot.lane.b32.xlu0 %v3356, 120
      %v5243 = vpop.permute.xlu0 %5242
      %5244 = vrot.lane.b32.xlu0 %v3357, 120
      %v5245 = vpop.permute.xlu0 %5244
      %v5278 = vsel %vm1572, %v2842, %v3391
      %v5279 = vsel %vm1572, %v2843, %v3393
      %v5280 = vsel %vm1572, %v2844, %v3395
      %v5281 = vsel %vm1572, %v2845, %v3397
      %v5282 = vsel %vm1572, %v2846, %v3399
      %v5283 = vsel %vm1572, %v2847, %v3401
      %v5284 = vsel %vm1572, %v2848, %v3403
      %v5285 = vsel %vm1572, %v2849, %v3405
      %v5286 = vsel %vm1572, %v2850, %v3407
      %v5287 = vsel %vm1572, %v2851, %v3409
      %v5288 = vsel %vm1572, %v2852, %v3411
      %v5289 = vsel %vm1572, %v2853, %v3413
      %v5290 = vsel %vm1572, %v2854, %v3415
      %v5291 = vsel %vm1572, %v2855, %v3417
      %v5292 = vsel %vm1572, %v2856, %v3419
      %v5293 = vsel %vm1572, %v2857, %v3421
      %v5294 = vsel %vm1572, %v2858, %v3423
      %v5295 = vsel %vm1572, %v2859, %v3425
      %v5296 = vsel %vm1572, %v2860, %v3427
      %v5297 = vsel %vm1572, %v2861, %v3429
      %v5298 = vsel %vm1572, %v2862, %v3431
      %v5299 = vsel %vm1572, %v2863, %v3433
      %v5300 = vsel %vm1572, %v2864, %v3435
      %v5301 = vsel %vm1572, %v2865, %v3437
      %v5302 = vsel %vm1572, %v2866, %v3439
      %v5303 = vsel %vm1572, %v2867, %v3441
      %v5304 = vsel %vm1572, %v2868, %v3443
      %v5305 = vsel %vm1572, %v2869, %v3445
      %v5306 = vsel %vm1572, %v2870, %v3447
      %v5307 = vsel %vm1572, %v2871, %v3449
      %v5308 = vsel %vm1572, %v2872, %v3451
      %v5309 = vsel %vm1572, %v2873, %v3453
      %v5310 = vsel %vm1638, %v5278, %v3519
      %v5311 = vsel %vm1638, %v5279, %v3521
      %v5312 = vsel %vm1638, %v5280, %v3523
      %v5313 = vsel %vm1638, %v5281, %v3525
      %v5314 = vsel %vm1638, %v5282, %v3527
      %v5315 = vsel %vm1638, %v5283, %v3529
      %v5316 = vsel %vm1638, %v5284, %v3531
      %v5317 = vsel %vm1638, %v5285, %v3533
      %v5318 = vsel %vm1638, %v5286, %v3535
      %v5319 = vsel %vm1638, %v5287, %v3537
      %v5320 = vsel %vm1638, %v5288, %v3539
      %v5321 = vsel %vm1638, %v5289, %v3541
      %v5322 = vsel %vm1638, %v5290, %v3543
      %v5323 = vsel %vm1638, %v5291, %v3545
      %v5324 = vsel %vm1638, %v5292, %v3547
      %v5325 = vsel %vm1638, %v5293, %v3549
      %v5326 = vsel %vm1638, %v5294, %v3551
      %v5327 = vsel %vm1638, %v5295, %v3553
      %v5328 = vsel %vm1638, %v5296, %v3555
      %v5329 = vsel %vm1638, %v5297, %v3557
      %v5330 = vsel %vm1638, %v5298, %v3559
      %v5331 = vsel %vm1638, %v5299, %v3561
      %v5332 = vsel %vm1638, %v5300, %v3563
      %v5333 = vsel %vm1638, %v5301, %v3565
      %v5334 = vsel %vm1638, %v5302, %v3567
      %v5335 = vsel %vm1638, %v5303, %v3569
      %v5336 = vsel %vm1638, %v5304, %v3571
      %v5337 = vsel %vm1638, %v5305, %v3573
      %v5338 = vsel %vm1638, %v5306, %v3575
      %v5339 = vsel %vm1638, %v5307, %v3577
      %v5340 = vsel %vm1638, %v5308, %v3579
      %v5341 = vsel %vm1638, %v5309, %v3581
      %v5342 = vsel %vm1704, %v5310, %v3647
      %v5343 = vsel %vm1704, %v5311, %v3649
      %v5344 = vsel %vm1704, %v5312, %v3651
      %v5345 = vsel %vm1704, %v5313, %v3653
      %v5346 = vsel %vm1704, %v5314, %v3655
      %v5347 = vsel %vm1704, %v5315, %v3657
      %v5348 = vsel %vm1704, %v5316, %v3659
      %v5349 = vsel %vm1704, %v5317, %v3661
      %v5350 = vsel %vm1704, %v5318, %v3663
      %v5351 = vsel %vm1704, %v5319, %v3665
      %v5352 = vsel %vm1704, %v5320, %v3667
      %v5353 = vsel %vm1704, %v5321, %v3669
      %v5354 = vsel %vm1704, %v5322, %v3671
      %v5355 = vsel %vm1704, %v5323, %v3673
      %v5356 = vsel %vm1704, %v5324, %v3675
      %v5357 = vsel %vm1704, %v5325, %v3677
      %v5358 = vsel %vm1704, %v5326, %v3679
      %v5359 = vsel %vm1704, %v5327, %v3681
      %v5360 = vsel %vm1704, %v5328, %v3683
      %v5361 = vsel %vm1704, %v5329, %v3685
      %v5362 = vsel %vm1704, %v5330, %v3687
      %v5363 = vsel %vm1704, %v5331, %v3689
      %v5364 = vsel %vm1704, %v5332, %v3691
      %v5365 = vsel %vm1704, %v5333, %v3693
      %v5366 = vsel %vm1704, %v5334, %v3695
      %v5367 = vsel %vm1704, %v5335, %v3697
      %v5368 = vsel %vm1704, %v5336, %v3699
      %v5369 = vsel %vm1704, %v5337, %v3701
      %v5370 = vsel %vm1704, %v5338, %v3703
      %v5371 = vsel %vm1704, %v5339, %v3705
      %v5372 = vsel %vm1704, %v5340, %v3707
      %v5373 = vsel %vm1704, %v5341, %v3709
      %v5374 = vsel %vm1770, %v5342, %v3775
      %v5375 = vsel %vm1770, %v5343, %v3777
      %v5376 = vsel %vm1770, %v5344, %v3779
      %v5377 = vsel %vm1770, %v5345, %v3781
      %v5378 = vsel %vm1770, %v5346, %v3783
      %v5379 = vsel %vm1770, %v5347, %v3785
      %v5380 = vsel %vm1770, %v5348, %v3787
      %v5381 = vsel %vm1770, %v5349, %v3789
      %v5382 = vsel %vm1770, %v5350, %v3791
      %v5383 = vsel %vm1770, %v5351, %v3793
      %v5384 = vsel %vm1770, %v5352, %v3795
      %v5385 = vsel %vm1770, %v5353, %v3797
      %v5386 = vsel %vm1770, %v5354, %v3799
      %v5387 = vsel %vm1770, %v5355, %v3801
      %v5388 = vsel %vm1770, %v5356, %v3803
      %v5389 = vsel %vm1770, %v5357, %v3805
      %v5390 = vsel %vm1770, %v5358, %v3807
      %v5391 = vsel %vm1770, %v5359, %v3809
      %v5392 = vsel %vm1770, %v5360, %v3811
      %v5393 = vsel %vm1770, %v5361, %v3813
      %v5394 = vsel %vm1770, %v5362, %v3815
      %v5395 = vsel %vm1770, %v5363, %v3817
      %v5396 = vsel %vm1770, %v5364, %v3819
      %v5397 = vsel %vm1770, %v5365, %v3821
      %v5398 = vsel %vm1770, %v5366, %v3823
      %v5399 = vsel %vm1770, %v5367, %v3825
      %v5400 = vsel %vm1770, %v5368, %v3827
      %v5401 = vsel %vm1770, %v5369, %v3829
      %v5402 = vsel %vm1770, %v5370, %v3831
      %v5403 = vsel %vm1770, %v5371, %v3833
      %v5404 = vsel %vm1770, %v5372, %v3835
      %v5405 = vsel %vm1770, %v5373, %v3837
      %vm5406 = vcmask 326656
      %v5407 = vsel %vm5406, %v5374, %v3903
      %v5408 = vsel %vm5406, %v5375, %v3905
      %v5409 = vsel %vm5406, %v5376, %v3907
      %v5410 = vsel %vm5406, %v5377, %v3909
      %v5411 = vsel %vm5406, %v5378, %v3911
      %v5412 = vsel %vm5406, %v5379, %v3913
      %v5413 = vsel %vm5406, %v5380, %v3915
      %v5414 = vsel %vm5406, %v5381, %v3917
      %v5415 = vsel %vm5406, %v5382, %v3919
      %v5416 = vsel %vm5406, %v5383, %v3921
      %v5417 = vsel %vm5406, %v5384, %v3923
      %v5418 = vsel %vm5406, %v5385, %v3925
      %v5419 = vsel %vm5406, %v5386, %v3927
      %v5420 = vsel %vm5406, %v5387, %v3929
      %v5421 = vsel %vm5406, %v5388, %v3931
      %v5422 = vsel %vm5406, %v5389, %v3933
      %v5423 = vsel %vm5406, %v5390, %v3935
      %v5424 = vsel %vm5406, %v5391, %v3937
      %v5425 = vsel %vm5406, %v5392, %v3939
      %v5426 = vsel %vm5406, %v5393, %v3941
      %v5427 = vsel %vm5406, %v5394, %v3943
      %v5428 = vsel %vm5406, %v5395, %v3945
      %v5429 = vsel %vm5406, %v5396, %v3947
      %v5430 = vsel %vm5406, %v5397, %v3949
      %v5431 = vsel %vm5406, %v5398, %v3951
      %v5432 = vsel %vm5406, %v5399, %v3953
      %v5433 = vsel %vm5406, %v5400, %v3955
      %v5434 = vsel %vm5406, %v5401, %v3957
      %v5435 = vsel %vm5406, %v5402, %v3959
      %v5436 = vsel %vm5406, %v5403, %v3961
      %v5437 = vsel %vm5406, %v5404, %v3963
      %v5438 = vsel %vm5406, %v5405, %v3965
      %vm5439 = vcmask 392192
      %v5440 = vsel %vm5439, %v5407, %v4031
      %v5441 = vsel %vm5439, %v5408, %v4033
      %v5442 = vsel %vm5439, %v5409, %v4035
      %v5443 = vsel %vm5439, %v5410, %v4037
      %v5444 = vsel %vm5439, %v5411, %v4039
      %v5445 = vsel %vm5439, %v5412, %v4041
      %v5446 = vsel %vm5439, %v5413, %v4043
      %v5447 = vsel %vm5439, %v5414, %v4045
      %v5448 = vsel %vm5439, %v5415, %v4047
      %v5449 = vsel %vm5439, %v5416, %v4049
      %v5450 = vsel %vm5439, %v5417, %v4051
      %v5451 = vsel %vm5439, %v5418, %v4053
      %v5452 = vsel %vm5439, %v5419, %v4055
      %v5453 = vsel %vm5439, %v5420, %v4057
      %v5454 = vsel %vm5439, %v5421, %v4059
      %v5455 = vsel %vm5439, %v5422, %v4061
      %v5456 = vsel %vm5439, %v5423, %v4063
      %v5457 = vsel %vm5439, %v5424, %v4065
      %v5458 = vsel %vm5439, %v5425, %v4067
      %v5459 = vsel %vm5439, %v5426, %v4069
      %v5460 = vsel %vm5439, %v5427, %v4071
      %v5461 = vsel %vm5439, %v5428, %v4073
      %v5462 = vsel %vm5439, %v5429, %v4075
      %v5463 = vsel %vm5439, %v5430, %v4077
      %v5464 = vsel %vm5439, %v5431, %v4079
      %v5465 = vsel %vm5439, %v5432, %v4081
      %v5466 = vsel %vm5439, %v5433, %v4083
      %v5467 = vsel %vm5439, %v5434, %v4085
      %v5468 = vsel %vm5439, %v5435, %v4087
      %v5469 = vsel %vm5439, %v5436, %v4089
      %v5470 = vsel %vm5439, %v5437, %v4091
      %v5471 = vsel %vm5439, %v5438, %v4093
      %vm5472 = vcmask 457728
      %v5473 = vsel %vm5472, %v5440, %v4159
      %v5474 = vsel %vm5472, %v5441, %v4161
      %v5475 = vsel %vm5472, %v5442, %v4163
      %v5476 = vsel %vm5472, %v5443, %v4165
      %v5477 = vsel %vm5472, %v5444, %v4167
      %v5478 = vsel %vm5472, %v5445, %v4169
      %v5479 = vsel %vm5472, %v5446, %v4171
      %v5480 = vsel %vm5472, %v5447, %v4173
      %v5481 = vsel %vm5472, %v5448, %v4175
      %v5482 = vsel %vm5472, %v5449, %v4177
      %v5483 = vsel %vm5472, %v5450, %v4179
      %v5484 = vsel %vm5472, %v5451, %v4181
      %v5485 = vsel %vm5472, %v5452, %v4183
      %v5486 = vsel %vm5472, %v5453, %v4185
      %v5487 = vsel %vm5472, %v5454, %v4187
      %v5488 = vsel %vm5472, %v5455, %v4189
      %v5489 = vsel %vm5472, %v5456, %v4191
      %v5490 = vsel %vm5472, %v5457, %v4193
      %v5491 = vsel %vm5472, %v5458, %v4195
      %v5492 = vsel %vm5472, %v5459, %v4197
      %v5493 = vsel %vm5472, %v5460, %v4199
      %v5494 = vsel %vm5472, %v5461, %v4201
      %v5495 = vsel %vm5472, %v5462, %v4203
      %v5496 = vsel %vm5472, %v5463, %v4205
      %v5497 = vsel %vm5472, %v5464, %v4207
      %v5498 = vsel %vm5472, %v5465, %v4209
      %v5499 = vsel %vm5472, %v5466, %v4211
      %v5500 = vsel %vm5472, %v5467, %v4213
      %v5501 = vsel %vm5472, %v5468, %v4215
      %v5502 = vsel %vm5472, %v5469, %v4217
      %v5503 = vsel %vm5472, %v5470, %v4219
      %v5504 = vsel %vm5472, %v5471, %v4221
      %vm5505 = vcmask 523264
      %v5506 = vsel %vm5505, %v5473, %v4287
      %v5507 = vsel %vm5505, %v5474, %v4289
      %v5508 = vsel %vm5505, %v5475, %v4291
      %v5509 = vsel %vm5505, %v5476, %v4293
      %v5510 = vsel %vm5505, %v5477, %v4295
      %v5511 = vsel %vm5505, %v5478, %v4297
      %v5512 = vsel %vm5505, %v5479, %v4299
      %v5513 = vsel %vm5505, %v5480, %v4301
      %v5514 = vsel %vm5505, %v5481, %v4303
      %v5515 = vsel %vm5505, %v5482, %v4305
      %v5516 = vsel %vm5505, %v5483, %v4307
      %v5517 = vsel %vm5505, %v5484, %v4309
      %v5518 = vsel %vm5505, %v5485, %v4311
      %v5519 = vsel %vm5505, %v5486, %v4313
      %v5520 = vsel %vm5505, %v5487, %v4315
      %v5521 = vsel %vm5505, %v5488, %v4317
      %v5522 = vsel %vm5505, %v5489, %v4319
      %v5523 = vsel %vm5505, %v5490, %v4321
      %v5524 = vsel %vm5505, %v5491, %v4323
      %v5525 = vsel %vm5505, %v5492, %v4325
      %v5526 = vsel %vm5505, %v5493, %v4327
      %v5527 = vsel %vm5505, %v5494, %v4329
      %v5528 = vsel %vm5505, %v5495, %v4331
      %v5529 = vsel %vm5505, %v5496, %v4333
      %v5530 = vsel %vm5505, %v5497, %v4335
      %v5531 = vsel %vm5505, %v5498, %v4337
      %v5532 = vsel %vm5505, %v5499, %v4339
      %v5533 = vsel %vm5505, %v5500, %v4341
      %v5534 = vsel %vm5505, %v5501, %v4343
      %v5535 = vsel %vm5505, %v5502, %v4345
      %v5536 = vsel %vm5505, %v5503, %v4347
      %v5537 = vsel %vm5505, %v5504, %v4349
      %vm5538 = vcmask 588800
      %v5539 = vsel %vm5538, %v5506, %v4415
      %v5540 = vsel %vm5538, %v5507, %v4417
      %v5541 = vsel %vm5538, %v5508, %v4419
      %v5542 = vsel %vm5538, %v5509, %v4421
      %v5543 = vsel %vm5538, %v5510, %v4423
      %v5544 = vsel %vm5538, %v5511, %v4425
      %v5545 = vsel %vm5538, %v5512, %v4427
      %v5546 = vsel %vm5538, %v5513, %v4429
      %v5547 = vsel %vm5538, %v5514, %v4431
      %v5548 = vsel %vm5538, %v5515, %v4433
      %v5549 = vsel %vm5538, %v5516, %v4435
      %v5550 = vsel %vm5538, %v5517, %v4437
      %v5551 = vsel %vm5538, %v5518, %v4439
      %v5552 = vsel %vm5538, %v5519, %v4441
      %v5553 = vsel %vm5538, %v5520, %v4443
      %v5554 = vsel %vm5538, %v5521, %v4445
      %v5555 = vsel %vm5538, %v5522, %v4447
      %v5556 = vsel %vm5538, %v5523, %v4449
      %v5557 = vsel %vm5538, %v5524, %v4451
      %v5558 = vsel %vm5538, %v5525, %v4453
      %v5559 = vsel %vm5538, %v5526, %v4455
      %v5560 = vsel %vm5538, %v5527, %v4457
      %v5561 = vsel %vm5538, %v5528, %v4459
      %v5562 = vsel %vm5538, %v5529, %v4461
      %v5563 = vsel %vm5538, %v5530, %v4463
      %v5564 = vsel %vm5538, %v5531, %v4465
      %v5565 = vsel %vm5538, %v5532, %v4467
      %v5566 = vsel %vm5538, %v5533, %v4469
      %v5567 = vsel %vm5538, %v5534, %v4471
      %v5568 = vsel %vm5538, %v5535, %v4473
      %v5569 = vsel %vm5538, %v5536, %v4475
      %v5570 = vsel %vm5538, %v5537, %v4477
      %vm5571 = vcmask 654336
      %v5572 = vsel %vm5571, %v5539, %v4543
      %v5573 = vsel %vm5571, %v5540, %v4545
      %v5574 = vsel %vm5571, %v5541, %v4547
      %v5575 = vsel %vm5571, %v5542, %v4549
      %v5576 = vsel %vm5571, %v5543, %v4551
      %v5577 = vsel %vm5571, %v5544, %v4553
      %v5578 = vsel %vm5571, %v5545, %v4555
      %v5579 = vsel %vm5571, %v5546, %v4557
      %v5580 = vsel %vm5571, %v5547, %v4559
      %v5581 = vsel %vm5571, %v5548, %v4561
      %v5582 = vsel %vm5571, %v5549, %v4563
      %v5583 = vsel %vm5571, %v5550, %v4565
      %v5584 = vsel %vm5571, %v5551, %v4567
      %v5585 = vsel %vm5571, %v5552, %v4569
      %v5586 = vsel %vm5571, %v5553, %v4571
      %v5587 = vsel %vm5571, %v5554, %v4573
      %v5588 = vsel %vm5571, %v5555, %v4575
      %v5589 = vsel %vm5571, %v5556, %v4577
      %v5590 = vsel %vm5571, %v5557, %v4579
      %v5591 = vsel %vm5571, %v5558, %v4581
      %v5592 = vsel %vm5571, %v5559, %v4583
      %v5593 = vsel %vm5571, %v5560, %v4585
      %v5594 = vsel %vm5571, %v5561, %v4587
      %v5595 = vsel %vm5571, %v5562, %v4589
      %v5596 = vsel %vm5571, %v5563, %v4591
      %v5597 = vsel %vm5571, %v5564, %v4593
      %v5598 = vsel %vm5571, %v5565, %v4595
      %v5599 = vsel %vm5571, %v5566, %v4597
      %v5600 = vsel %vm5571, %v5567, %v4599
      %v5601 = vsel %vm5571, %v5568, %v4601
      %v5602 = vsel %vm5571, %v5569, %v4603
      %v5603 = vsel %vm5571, %v5570, %v4605
      %vm5604 = vcmask 719872
      %v5605 = vsel %vm5604, %v5572, %v4671
      %v5606 = vsel %vm5604, %v5573, %v4673
      %v5607 = vsel %vm5604, %v5574, %v4675
      %v5608 = vsel %vm5604, %v5575, %v4677
      %v5609 = vsel %vm5604, %v5576, %v4679
      %v5610 = vsel %vm5604, %v5577, %v4681
      %v5611 = vsel %vm5604, %v5578, %v4683
      %v5612 = vsel %vm5604, %v5579, %v4685
      %v5613 = vsel %vm5604, %v5580, %v4687
      %v5614 = vsel %vm5604, %v5581, %v4689
      %v5615 = vsel %vm5604, %v5582, %v4691
      %v5616 = vsel %vm5604, %v5583, %v4693
      %v5617 = vsel %vm5604, %v5584, %v4695
      %v5618 = vsel %vm5604, %v5585, %v4697
      %v5619 = vsel %vm5604, %v5586, %v4699
      %v5620 = vsel %vm5604, %v5587, %v4701
      %v5621 = vsel %vm5604, %v5588, %v4703
      %v5622 = vsel %vm5604, %v5589, %v4705
      %v5623 = vsel %vm5604, %v5590, %v4707
      %v5624 = vsel %vm5604, %v5591, %v4709
      %v5625 = vsel %vm5604, %v5592, %v4711
      %v5626 = vsel %vm5604, %v5593, %v4713
      %v5627 = vsel %vm5604, %v5594, %v4715
      %v5628 = vsel %vm5604, %v5595, %v4717
      %v5629 = vsel %vm5604, %v5596, %v4719
      %v5630 = vsel %vm5604, %v5597, %v4721
      %v5631 = vsel %vm5604, %v5598, %v4723
      %v5632 = vsel %vm5604, %v5599, %v4725
      %v5633 = vsel %vm5604, %v5600, %v4727
      %v5634 = vsel %vm5604, %v5601, %v4729
      %v5635 = vsel %vm5604, %v5602, %v4731
      %v5636 = vsel %vm5604, %v5603, %v4733
      %vm5637 = vcmask 785408
      %v5638 = vsel %vm5637, %v5605, %v4799
      %v5639 = vsel %vm5637, %v5606, %v4801
      %v5640 = vsel %vm5637, %v5607, %v4803
      %v5641 = vsel %vm5637, %v5608, %v4805
      %v5642 = vsel %vm5637, %v5609, %v4807
      %v5643 = vsel %vm5637, %v5610, %v4809
      %v5644 = vsel %vm5637, %v5611, %v4811
      %v5645 = vsel %vm5637, %v5612, %v4813
      %v5646 = vsel %vm5637, %v5613, %v4815
      %v5647 = vsel %vm5637, %v5614, %v4817
      %v5648 = vsel %vm5637, %v5615, %v4819
      %v5649 = vsel %vm5637, %v5616, %v4821
      %v5650 = vsel %vm5637, %v5617, %v4823
      %v5651 = vsel %vm5637, %v5618, %v4825
      %v5652 = vsel %vm5637, %v5619, %v4827
      %v5653 = vsel %vm5637, %v5620, %v4829
      %v5654 = vsel %vm5637, %v5621, %v4831
      %v5655 = vsel %vm5637, %v5622, %v4833
      %v5656 = vsel %vm5637, %v5623, %v4835
      %v5657 = vsel %vm5637, %v5624, %v4837
      %v5658 = vsel %vm5637, %v5625, %v4839
      %v5659 = vsel %vm5637, %v5626, %v4841
      %v5660 = vsel %vm5637, %v5627, %v4843
      %v5661 = vsel %vm5637, %v5628, %v4845
      %v5662 = vsel %vm5637, %v5629, %v4847
      %v5663 = vsel %vm5637, %v5630, %v4849
      %v5664 = vsel %vm5637, %v5631, %v4851
      %v5665 = vsel %vm5637, %v5632, %v4853
      %v5666 = vsel %vm5637, %v5633, %v4855
      %v5667 = vsel %vm5637, %v5634, %v4857
      %v5668 = vsel %vm5637, %v5635, %v4859
      %v5669 = vsel %vm5637, %v5636, %v4861
      %vm5670 = vcmask 850944
      %v5671 = vsel %vm5670, %v5638, %v4927
      %v5672 = vsel %vm5670, %v5639, %v4929
      %v5673 = vsel %vm5670, %v5640, %v4931
      %v5674 = vsel %vm5670, %v5641, %v4933
      %v5675 = vsel %vm5670, %v5642, %v4935
      %v5676 = vsel %vm5670, %v5643, %v4937
      %v5677 = vsel %vm5670, %v5644, %v4939
      %v5678 = vsel %vm5670, %v5645, %v4941
      %v5679 = vsel %vm5670, %v5646, %v4943
      %v5680 = vsel %vm5670, %v5647, %v4945
      %v5681 = vsel %vm5670, %v5648, %v4947
      %v5682 = vsel %vm5670, %v5649, %v4949
      %v5683 = vsel %vm5670, %v5650, %v4951
      %v5684 = vsel %vm5670, %v5651, %v4953
      %v5685 = vsel %vm5670, %v5652, %v4955
      %v5686 = vsel %vm5670, %v5653, %v4957
      %v5687 = vsel %vm5670, %v5654, %v4959
      %v5688 = vsel %vm5670, %v5655, %v4961
      %v5689 = vsel %vm5670, %v5656, %v4963
      %v5690 = vsel %vm5670, %v5657, %v4965
      %v5691 = vsel %vm5670, %v5658, %v4967
      %v5692 = vsel %vm5670, %v5659, %v4969
      %v5693 = vsel %vm5670, %v5660, %v4971
      %v5694 = vsel %vm5670, %v5661, %v4973
      %v5695 = vsel %vm5670, %v5662, %v4975
      %v5696 = vsel %vm5670, %v5663, %v4977
      %v5697 = vsel %vm5670, %v5664, %v4979
      %v5698 = vsel %vm5670, %v5665, %v4981
      %v5699 = vsel %vm5670, %v5666, %v4983
      %v5700 = vsel %vm5670, %v5667, %v4985
      %v5701 = vsel %vm5670, %v5668, %v4987
      %v5702 = vsel %vm5670, %v5669, %v4989
      %vm5703 = vcmask 916480
      %v5704 = vsel %vm5703, %v5671, %v5055
      %v5705 = vsel %vm5703, %v5672, %v5057
      %v5706 = vsel %vm5703, %v5673, %v5059
      %v5707 = vsel %vm5703, %v5674, %v5061
      %v5708 = vsel %vm5703, %v5675, %v5063
      %v5709 = vsel %vm5703, %v5676, %v5065
      %v5710 = vsel %vm5703, %v5677, %v5067
      %v5711 = vsel %vm5703, %v5678, %v5069
      %v5712 = vsel %vm5703, %v5679, %v5071
      %v5713 = vsel %vm5703, %v5680, %v5073
      %v5714 = vsel %vm5703, %v5681, %v5075
      %v5715 = vsel %vm5703, %v5682, %v5077
      %v5716 = vsel %vm5703, %v5683, %v5079
      %v5717 = vsel %vm5703, %v5684, %v5081
      %v5718 = vsel %vm5703, %v5685, %v5083
      %v5719 = vsel %vm5703, %v5686, %v5085
      %v5720 = vsel %vm5703, %v5687, %v5087
      %v5721 = vsel %vm5703, %v5688, %v5089
      %v5722 = vsel %vm5703, %v5689, %v5091
      %v5723 = vsel %vm5703, %v5690, %v5093
      %v5724 = vsel %vm5703, %v5691, %v5095
      %v5725 = vsel %vm5703, %v5692, %v5097
      %v5726 = vsel %vm5703, %v5693, %v5099
      %v5727 = vsel %vm5703, %v5694, %v5101
      %v5728 = vsel %vm5703, %v5695, %v5103
      %v5729 = vsel %vm5703, %v5696, %v5105
      %v5730 = vsel %vm5703, %v5697, %v5107
      %v5731 = vsel %vm5703, %v5698, %v5109
      %v5732 = vsel %vm5703, %v5699, %v5111
      %v5733 = vsel %vm5703, %v5700, %v5113
      %v5734 = vsel %vm5703, %v5701, %v5115
      %v5735 = vsel %vm5703, %v5702, %v5117
      %vm5736 = vcmask 982016
      %v5737 = vsel %vm5736, %v5704, %v5183
      %v5738 = vsel %vm5736, %v5705, %v5185
      %v5739 = vsel %vm5736, %v5706, %v5187
      %v5740 = vsel %vm5736, %v5707, %v5189
      %v5741 = vsel %vm5736, %v5708, %v5191
      %v5742 = vsel %vm5736, %v5709, %v5193
      %v5743 = vsel %vm5736, %v5710, %v5195
      %v5744 = vsel %vm5736, %v5711, %v5197
      %v5745 = vsel %vm5736, %v5712, %v5199
      %v5746 = vsel %vm5736, %v5713, %v5201
      %v5747 = vsel %vm5736, %v5714, %v5203
      %v5748 = vsel %vm5736, %v5715, %v5205
      %v5749 = vsel %vm5736, %v5716, %v5207
      %v5750 = vsel %vm5736, %v5717, %v5209
      %v5751 = vsel %vm5736, %v5718, %v5211
      %v5752 = vsel %vm5736, %v5719, %v5213
      %v5753 = vsel %vm5736, %v5720, %v5215
      %v5754 = vsel %vm5736, %v5721, %v5217
      %v5755 = vsel %vm5736, %v5722, %v5219
      %v5756 = vsel %vm5736, %v5723, %v5221
      %v5757 = vsel %vm5736, %v5724, %v5223
      %v5758 = vsel %vm5736, %v5725, %v5225
      %v5759 = vsel %vm5736, %v5726, %v5227
      %v5760 = vsel %vm5736, %v5727, %v5229
      %v5761 = vsel %vm5736, %v5728, %v5231
      %v5762 = vsel %vm5736, %v5729, %v5233
      %v5763 = vsel %vm5736, %v5730, %v5235
      %v5764 = vsel %vm5736, %v5731, %v5237
      %v5765 = vsel %vm5736, %v5732, %v5239
      %v5766 = vsel %vm5736, %v5733, %v5241
      %v5767 = vsel %vm5736, %v5734, %v5243
      %v5768 = vsel %vm5736, %v5735, %v5245
      %v5769 = vld [vmem:[%s3] sm:$0xff]
      %v5770 = vld [vmem:[%s3 + $0x8] sm:$0xff]
      %v5771 = vld [vmem:[%s3 + $0x10] sm:$0xff]
      %v5772 = vld [vmem:[%s3 + $0x18] sm:$0xff]
      %v5773 = vld [vmem:[%s3 + $0x20] sm:$0xff]
      %v5774 = vld [vmem:[%s3 + $0x28] sm:$0xff]
      %v5775 = vld [vmem:[%s3 + $0x30] sm:$0xff]
      %v5776 = vld [vmem:[%s3 + $0x38] sm:$0xff]
      %v5777 = vld [vmem:[%s3 + $0x40] sm:$0xff]
      %v5778 = vld [vmem:[%s3 + $0x48] sm:$0xff]
      %v5779 = vld [vmem:[%s3 + $0x50] sm:$0xff]
      %v5780 = vld [vmem:[%s3 + $0x58] sm:$0xff]
      %v5781 = vld [vmem:[%s3 + $0x60] sm:$0xff]
      %v5782 = vld [vmem:[%s3 + $0x68] sm:$0xff]
      %v5783 = vld [vmem:[%s3 + $0x70] sm:$0xff]
      %v5784 = vld [vmem:[%s3 + $0x78] sm:$0xff]
      %v5785 = vld [vmem:[%s4] sm:$0x1]
      %v5787 = vlaneseq
      %v5788 = vshrl.u32 %v5787, 7
      %v5789 = vsub.s32 0, %v5788
      %v5790 = vrot.slane %v5785, %v5789
      %5792 = vmatprep.subr.mxu0 0.0
      %5793 = vmatpush1.msra.mxu0 %v5769
      %5794 = vmatprep.subr.mxu0 0.0
      %5795 = vmatpush1.msra.mxu0 %v5770
      %5796 = vmatprep.subr.mxu0 0.0
      %5797 = vmatpush1.msra.mxu0 %v5771
      %5798 = vmatprep.subr.mxu0 0.0
      %5799 = vmatpush1.msra.mxu0 %v5772
      %5800 = vmatprep.subr.mxu0 0.0
      %5801 = vmatpush1.msra.mxu0 %v5773
      %5802 = vmatprep.subr.mxu0 0.0
      %5803 = vmatpush1.msra.mxu0 %v5774
      %5804 = vmatprep.subr.mxu0 0.0
      %5805 = vmatpush1.msra.mxu0 %v5775
      %5806 = vmatprep.subr.mxu0 0.0
      %5807 = vmatpush1.msra.mxu0 %v5776
      %5808 = vmatprep.subr.mxu0 0.0
      %5809 = vmatpush1.msra.mxu0 %v5777
      %5810 = vmatprep.subr.mxu0 0.0
      %5811 = vmatpush1.msra.mxu0 %v5778
      %5812 = vmatprep.subr.mxu0 0.0
      %5813 = vmatpush1.msra.mxu0 %v5779
      %5814 = vmatprep.subr.mxu0 0.0
      %5815 = vmatpush1.msra.mxu0 %v5780
      %5816 = vmatprep.subr.mxu0 0.0
      %5817 = vmatpush1.msra.mxu0 %v5781
      %5818 = vmatprep.subr.mxu0 0.0
      %5819 = vmatpush1.msra.mxu0 %v5782
      %5820 = vmatprep.subr.mxu0 0.0
      %5821 = vmatpush1.msra.mxu0 %v5783
      %5822 = vmatprep.subr.mxu0 0.0
      %5823 = vmatpush1.msra.mxu0 %v5784
      %5824 = vmatprep.subr.mxu0 0.0
      %5825 = vmatpush1.msra.mxu0 0.0
      %5826 = vmatprep.subr.mxu0 0.0
      %5827 = vmatpush1.msra.mxu0 0.0
      %5828 = vmatprep.subr.mxu0 0.0
      %5829 = vmatpush1.msra.mxu0 0.0
      %5830 = vmatprep.subr.mxu0 0.0
      %5831 = vmatpush1.msra.mxu0 0.0
      %5832 = vmatprep.subr.mxu0 0.0
      %5833 = vmatpush1.msra.mxu0 0.0
      %5834 = vmatprep.subr.mxu0 0.0
      %5835 = vmatpush1.msra.mxu0 0.0
      %5836 = vmatprep.subr.mxu0 0.0
      %5837 = vmatpush1.msra.mxu0 0.0
      %5838 = vmatprep.subr.mxu0 0.0
      %5839 = vmatpush1.msra.mxu0 0.0
      %5840 = vmatprep.subr.mxu0 0.0
      %5841 = vmatpush1.msra.mxu0 0.0
      %5842 = vmatprep.subr.mxu0 0.0
      %5843 = vmatpush1.msra.mxu0 0.0
      %5844 = vmatprep.subr.mxu0 0.0
      %5845 = vmatpush1.msra.mxu0 0.0
      %5846 = vmatprep.subr.mxu0 0.0
      %5847 = vmatpush1.msra.mxu0 0.0
      %5848 = vmatprep.subr.mxu0 0.0
      %5849 = vmatpush1.msra.mxu0 0.0
      %5850 = vmatprep.subr.mxu0 0.0
      %5851 = vmatpush1.msra.mxu0 0.0
      %5852 = vmatprep.subr.mxu0 0.0
      %5853 = vmatpush1.msra.mxu0 0.0
      %5854 = vmatprep.subr.mxu0 0.0
      %5855 = vmatpush1.msra.mxu0 0.0
      %5856 = vmatprep.mubr.f32.mxu0 0.0
      %5857 = vmatmul.mubr.f32.gmra.mrb[0].mxu0 %v5737
      %v5858 = vpop.f32.mrb[0].mxu0
      %v5859 = vadd.f32 %v5790, %v5858
      %v5860 = vpop.f32.mrb[0].mxu0
      %5861 = vmatprep.mubr.f32.mxu0 0.0
      %5862 = vmatmul.mubr.f32.gmra.mrb[0].mxu0 %v5738
      %v5863 = vpop.f32.mrb[0].mxu0
      %v5864 = vadd.f32 %v5790, %v5863
      %v5865 = vpop.f32.mrb[0].mxu0
      %5866 = vmatprep.mubr.f32.mxu0 0.0
      %5867 = vmatmul.mubr.f32.gmra.mrb[0].mxu0 %v5739
      %v5868 = vpop.f32.mrb[0].mxu0
      %v5869 = vadd.f32 %v5790, %v5868
      %v5870 = vpop.f32.mrb[0].mxu0
      %5871 = vmatprep.mubr.f32.mxu0 0.0
      %5872 = vmatmul.mubr.f32.gmra.mrb[0].mxu0 %v5740
      %v5873 = vpop.f32.mrb[0].mxu0
      %v5874 = vadd.f32 %v5790, %v5873
      %v5875 = vpop.f32.mrb[0].mxu0
      %5876 = vmatprep.mubr.f32.mxu0 0.0
      %5877 = vmatmul.mubr.f32.gmra.mrb[0].mxu0 %v5741
      %v5878 = vpop.f32.mrb[0].mxu0
      %v5879 = vadd.f32 %v5790, %v5878
      %v5880 = vpop.f32.mrb[0].mxu0
      %5881 = vmatprep.mubr.f32.mxu0 0.0
      %5882 = vmatmul.mubr.f32.gmra.mrb[0].mxu0 %v5742
      %v5883 = vpop.f32.mrb[0].mxu0
      %v5884 = vadd.f32 %v5790, %v5883
      %v5885 = vpop.f32.mrb[0].mxu0
      %5886 = vmatprep.mubr.f32.mxu0 0.0
      %5887 = vmatmul.mubr.f32.gmra.mrb[0].mxu0 %v5743
      %v5888 = vpop.f32.mrb[0].mxu0
      %v5889 = vadd.f32 %v5790, %v5888
      %v5890 = vpop.f32.mrb[0].mxu0
      %5891 = vmatprep.mubr.f32.mxu0 0.0
      %5892 = vmatmul.mubr.f32.gmra.mrb[0].mxu0 %v5744
      %v5893 = vpop.f32.mrb[0].mxu0
      %v5894 = vadd.f32 %v5790, %v5893
      %v5895 = vpop.f32.mrb[0].mxu0
      %5896 = vmatprep.mubr.f32.mxu0 0.0
      %5897 = vmatmul.mubr.f32.gmra.mrb[0].mxu0 %v5745
      %v5898 = vpop.f32.mrb[0].mxu0
      %v5899 = vadd.f32 %v5790, %v5898
      %v5900 = vpop.f32.mrb[0].mxu0
      %5901 = vmatprep.mubr.f32.mxu0 0.0
      %5902 = vmatmul.mubr.f32.gmra.mrb[0].mxu0 %v5746
      %v5903 = vpop.f32.mrb[0].mxu0
      %v5904 = vadd.f32 %v5790, %v5903
      %v5905 = vpop.f32.mrb[0].mxu0
      %5906 = vmatprep.mubr.f32.mxu0 0.0
      %5907 = vmatmul.mubr.f32.gmra.mrb[0].mxu0 %v5747
      %v5908 = vpop.f32.mrb[0].mxu0
      %v5909 = vadd.f32 %v5790, %v5908
      %v5910 = vpop.f32.mrb[0].mxu0
      %5911 = vmatprep.mubr.f32.mxu0 0.0
      %5912 = vmatmul.mubr.f32.gmra.mrb[0].mxu0 %v5748
      %v5913 = vpop.f32.mrb[0].mxu0
      %v5914 = vadd.f32 %v5790, %v5913
      %v5915 = vpop.f32.mrb[0].mxu0
      %5916 = vmatprep.mubr.f32.mxu0 0.0
      %5917 = vmatmul.mubr.f32.gmra.mrb[0].mxu0 %v5749
      %v5918 = vpop.f32.mrb[0].mxu0
      %v5919 = vadd.f32 %v5790, %v5918
      %v5920 = vpop.f32.mrb[0].mxu0
      %5921 = vmatprep.mubr.f32.mxu0 0.0
      %5922 = vmatmul.mubr.f32.gmra.mrb[0].mxu0 %v5750
      %v5923 = vpop.f32.mrb[0].mxu0
      %v5924 = vadd.f32 %v5790, %v5923
      %v5925 = vpop.f32.mrb[0].mxu0
      %5926 = vmatprep.mubr.f32.mxu0 0.0
      %5927 = vmatmul.mubr.f32.gmra.mrb[0].mxu0 %v5751
      %v5928 = vpop.f32.mrb[0].mxu0
      %v5929 = vadd.f32 %v5790, %v5928
      %v5930 = vpop.f32.mrb[0].mxu0
      %5931 = vmatprep.mubr.f32.mxu0 0.0
      %5932 = vmatmul.mubr.f32.gmra.mrb[0].mxu0 %v5752
      %v5933 = vpop.f32.mrb[0].mxu0
      %v5934 = vadd.f32 %v5790, %v5933
      %v5935 = vpop.f32.mrb[0].mxu0
      %5936 = vmatprep.mubr.f32.mxu0 0.0
      %5937 = vmatmul.mubr.f32.gmra.mrb[0].mxu0 %v5753
      %v5938 = vpop.f32.mrb[0].mxu0
      %v5939 = vadd.f32 %v5790, %v5938
      %v5940 = vpop.f32.mrb[0].mxu0
      %5941 = vmatprep.mubr.f32.mxu0 0.0
      %5942 = vmatmul.mubr.f32.gmra.mrb[0].mxu0 %v5754
      %v5943 = vpop.f32.mrb[0].mxu0
      %v5944 = vadd.f32 %v5790, %v5943
      %v5945 = vpop.f32.mrb[0].mxu0
      %5946 = vmatprep.mubr.f32.mxu0 0.0
      %5947 = vmatmul.mubr.f32.gmra.mrb[0].mxu0 %v5755
      %v5948 = vpop.f32.mrb[0].mxu0
      %v5949 = vadd.f32 %v5790, %v5948
      %v5950 = vpop.f32.mrb[0].mxu0
      %5951 = vmatprep.mubr.f32.mxu0 0.0
      %5952 = vmatmul.mubr.f32.gmra.mrb[0].mxu0 %v5756
      %v5953 = vpop.f32.mrb[0].mxu0
      %v5954 = vadd.f32 %v5790, %v5953
      %v5955 = vpop.f32.mrb[0].mxu0
      %5956 = vmatprep.mubr.f32.mxu0 0.0
      %5957 = vmatmul.mubr.f32.gmra.mrb[0].mxu0 %v5757
      %v5958 = vpop.f32.mrb[0].mxu0
      %v5959 = vadd.f32 %v5790, %v5958
      %v5960 = vpop.f32.mrb[0].mxu0
      %5961 = vmatprep.mubr.f32.mxu0 0.0
      %5962 = vmatmul.mubr.f32.gmra.mrb[0].mxu0 %v5758
      %v5963 = vpop.f32.mrb[0].mxu0
      %v5964 = vadd.f32 %v5790, %v5963
      %v5965 = vpop.f32.mrb[0].mxu0
      %5966 = vmatprep.mubr.f32.mxu0 0.0
      %5967 = vmatmul.mubr.f32.gmra.mrb[0].mxu0 %v5759
      %v5968 = vpop.f32.mrb[0].mxu0
      %v5969 = vadd.f32 %v5790, %v5968
      %v5970 = vpop.f32.mrb[0].mxu0
      %5971 = vmatprep.mubr.f32.mxu0 0.0
      %5972 = vmatmul.mubr.f32.gmra.mrb[0].mxu0 %v5760
      %v5973 = vpop.f32.mrb[0].mxu0
      %v5974 = vadd.f32 %v5790, %v5973
      %v5975 = vpop.f32.mrb[0].mxu0
      %5976 = vmatprep.mubr.f32.mxu0 0.0
      %5977 = vmatmul.mubr.f32.gmra.mrb[0].mxu0 %v5761
      %v5978 = vpop.f32.mrb[0].mxu0
      %v5979 = vadd.f32 %v5790, %v5978
      %v5980 = vpop.f32.mrb[0].mxu0
      %5981 = vmatprep.mubr.f32.mxu0 0.0
      %5982 = vmatmul.mubr.f32.gmra.mrb[0].mxu0 %v5762
      %v5983 = vpop.f32.mrb[0].mxu0
      %v5984 = vadd.f32 %v5790, %v5983
      %v5985 = vpop.f32.mrb[0].mxu0
      %5986 = vmatprep.mubr.f32.mxu0 0.0
      %5987 = vmatmul.mubr.f32.gmra.mrb[0].mxu0 %v5763
      %v5988 = vpop.f32.mrb[0].mxu0
      %v5989 = vadd.f32 %v5790, %v5988
      %v5990 = vpop.f32.mrb[0].mxu0
      %5991 = vmatprep.mubr.f32.mxu0 0.0
      %5992 = vmatmul.mubr.f32.gmra.mrb[0].mxu0 %v5764
      %v5993 = vpop.f32.mrb[0].mxu0
      %v5994 = vadd.f32 %v5790, %v5993
      %v5995 = vpop.f32.mrb[0].mxu0
      %5996 = vmatprep.mubr.f32.mxu0 0.0
      %5997 = vmatmul.mubr.f32.gmra.mrb[0].mxu0 %v5765
      %v5998 = vpop.f32.mrb[0].mxu0
      %v5999 = vadd.f32 %v5790, %v5998
      %v6000 = vpop.f32.mrb[0].mxu0
      %6001 = vmatprep.mubr.f32.mxu0 0.0
      %6002 = vmatmul.mubr.f32.gmra.mrb[0].mxu0 %v5766
      %v6003 = vpop.f32.mrb[0].mxu0
      %v6004 = vadd.f32 %v5790, %v6003
      %v6005 = vpop.f32.mrb[0].mxu0
      %6006 = vmatprep.mubr.f32.mxu0 0.0
      %6007 = vmatmul.mubr.f32.gmra.mrb[0].mxu0 %v5767
      %v6008 = vpop.f32.mrb[0].mxu0
      %v6009 = vadd.f32 %v5790, %v6008
      %v6010 = vpop.f32.mrb[0].mxu0
      %6011 = vmatprep.mubr.f32.mxu0 0.0
      %6012 = vmatmul.mubr.f32.gmra.mrb[0].mxu0 %v5768
      %v6013 = vpop.f32.mrb[0].mxu0
      %v6014 = vadd.f32 %v5790, %v6013
      %v6015 = vpop.f32.mrb[0].mxu0
      %6016 = vdwg.mxu0
      %6049 = vrot.lane.b32.xlu0 %v1983, 96
      %v6050 = vpop.permute.xlu0 %6049
      %6051 = vrot.lane.b32.xlu0 %v1988, 96
      %v6052 = vpop.permute.xlu0 %6051
      %6053 = vrot.lane.b32.xlu0 %v1993, 96
      %v6054 = vpop.permute.xlu0 %6053
      %6055 = vrot.lane.b32.xlu0 %v1998, 96
      %v6056 = vpop.permute.xlu0 %6055
      %6057 = vrot.lane.b32.xlu0 %v2003, 96
      %v6058 = vpop.permute.xlu0 %6057
      %6059 = vrot.lane.b32.xlu0 %v2008, 96
      %v6060 = vpop.permute.xlu0 %6059
      %6061 = vrot.lane.b32.xlu0 %v2013, 96
      %v6062 = vpop.permute.xlu0 %6061
      %6063 = vrot.lane.b32.xlu0 %v2018, 96
      %v6064 = vpop.permute.xlu0 %6063
      %6065 = vrot.lane.b32.xlu0 %v2023, 96
      %v6066 = vpop.permute.xlu0 %6065
      %6067 = vrot.lane.b32.xlu0 %v2028, 96
      %v6068 = vpop.permute.xlu0 %6067
      %6069 = vrot.lane.b32.xlu0 %v2033, 96
      %v6070 = vpop.permute.xlu0 %6069
      %6071 = vrot.lane.b32.xlu0 %v2038, 96
      %v6072 = vpop.permute.xlu0 %6071
      %6073 = vrot.lane.b32.xlu0 %v2043, 96
      %v6074 = vpop.permute.xlu0 %6073
      %6075 = vrot.lane.b32.xlu0 %v2048, 96
      %v6076 = vpop.permute.xlu0 %6075
      %6077 = vrot.lane.b32.xlu0 %v2053, 96
      %v6078 = vpop.permute.xlu0 %6077
      %6079 = vrot.lane.b32.xlu0 %v2058, 96
      %v6080 = vpop.permute.xlu0 %6079
      %6081 = vrot.lane.b32.xlu0 %v2063, 96
      %v6082 = vpop.permute.xlu0 %6081
      %6083 = vrot.lane.b32.xlu0 %v2068, 96
      %v6084 = vpop.permute.xlu0 %6083
      %6085 = vrot.lane.b32.xlu0 %v2073, 96
      %v6086 = vpop.permute.xlu0 %6085
      %6087 = vrot.lane.b32.xlu0 %v2078, 96
      %v6088 = vpop.permute.xlu0 %6087
      %6089 = vrot.lane.b32.xlu0 %v2083, 96
      %v6090 = vpop.permute.xlu0 %6089
      %6091 = vrot.lane.b32.xlu0 %v2088, 96
      %v6092 = vpop.permute.xlu0 %6091
      %6093 = vrot.lane.b32.xlu0 %v2093, 96
      %v6094 = vpop.permute.xlu0 %6093
      %6095 = vrot.lane.b32.xlu0 %v2098, 96
      %v6096 = vpop.permute.xlu0 %6095
      %6097 = vrot.lane.b32.xlu0 %v2103, 96
      %v6098 = vpop.permute.xlu0 %6097
      %6099 = vrot.lane.b32.xlu0 %v2108, 96
      %v6100 = vpop.permute.xlu0 %6099
      %6101 = vrot.lane.b32.xlu0 %v2113, 96
      %v6102 = vpop.permute.xlu0 %6101
      %6103 = vrot.lane.b32.xlu0 %v2118, 96
      %v6104 = vpop.permute.xlu0 %6103
      %6105 = vrot.lane.b32.xlu0 %v2123, 96
      %v6106 = vpop.permute.xlu0 %6105
      %6107 = vrot.lane.b32.xlu0 %v2128, 96
      %v6108 = vpop.permute.xlu0 %6107
      %6109 = vrot.lane.b32.xlu0 %v2133, 96
      %v6110 = vpop.permute.xlu0 %6109
      %6111 = vrot.lane.b32.xlu0 %v2138, 96
      %v6112 = vpop.permute.xlu0 %6111
      %v6145 = vadd.f32 %v5859, %v6050
      %v6146 = vadd.f32 %v5864, %v6052
      %v6147 = vadd.f32 %v5869, %v6054
      %v6148 = vadd.f32 %v5874, %v6056
      %v6149 = vadd.f32 %v5879, %v6058
      %v6150 = vadd.f32 %v5884, %v6060
      %v6151 = vadd.f32 %v5889, %v6062
      %v6152 = vadd.f32 %v5894, %v6064
      %v6153 = vadd.f32 %v5899, %v6066
      %v6154 = vadd.f32 %v5904, %v6068
      %v6155 = vadd.f32 %v5909, %v6070
      %v6156 = vadd.f32 %v5914, %v6072
      %v6157 = vadd.f32 %v5919, %v6074
      %v6158 = vadd.f32 %v5924, %v6076
      %v6159 = vadd.f32 %v5929, %v6078
      %v6160 = vadd.f32 %v5934, %v6080
      %v6161 = vadd.f32 %v5939, %v6082
      %v6162 = vadd.f32 %v5944, %v6084
      %v6163 = vadd.f32 %v5949, %v6086
      %v6164 = vadd.f32 %v5954, %v6088
      %v6165 = vadd.f32 %v5959, %v6090
      %v6166 = vadd.f32 %v5964, %v6092
      %v6167 = vadd.f32 %v5969, %v6094
      %v6168 = vadd.f32 %v5974, %v6096
      %v6169 = vadd.f32 %v5979, %v6098
      %v6170 = vadd.f32 %v5984, %v6100
      %v6171 = vadd.f32 %v5989, %v6102
      %v6172 = vadd.f32 %v5994, %v6104
      %v6173 = vadd.f32 %v5999, %v6106
      %v6174 = vadd.f32 %v6004, %v6108
      %v6175 = vadd.f32 %v6009, %v6110
      %v6176 = vadd.f32 %v6014, %v6112
      %v6177 = vmax.f32 %v6145, 0.0
      %v6178 = vmax.f32 %v6146, 0.0
      %v6179 = vmax.f32 %v6147, 0.0
      %v6180 = vmax.f32 %v6148, 0.0
      %v6181 = vmax.f32 %v6149, 0.0
      %v6182 = vmax.f32 %v6150, 0.0
      %v6183 = vmax.f32 %v6151, 0.0
      %v6184 = vmax.f32 %v6152, 0.0
      %v6185 = vmax.f32 %v6153, 0.0
      %v6186 = vmax.f32 %v6154, 0.0
      %v6187 = vmax.f32 %v6155, 0.0
      %v6188 = vmax.f32 %v6156, 0.0
      %v6189 = vmax.f32 %v6157, 0.0
      %v6190 = vmax.f32 %v6158, 0.0
      %v6191 = vmax.f32 %v6159, 0.0
      %v6192 = vmax.f32 %v6160, 0.0
      %v6193 = vmax.f32 %v6161, 0.0
      %v6194 = vmax.f32 %v6162, 0.0
      %v6195 = vmax.f32 %v6163, 0.0
      %v6196 = vmax.f32 %v6164, 0.0
      %v6197 = vmax.f32 %v6165, 0.0
      %v6198 = vmax.f32 %v6166, 0.0
      %v6199 = vmax.f32 %v6167, 0.0
      %v6200 = vmax.f32 %v6168, 0.0
      %v6201 = vmax.f32 %v6169, 0.0
      %v6202 = vmax.f32 %v6170, 0.0
      %v6203 = vmax.f32 %v6171, 0.0
      %v6204 = vmax.f32 %v6172, 0.0
      %v6205 = vmax.f32 %v6173, 0.0
      %v6206 = vmax.f32 %v6174, 0.0
      %v6207 = vmax.f32 %v6175, 0.0
      %v6208 = vmax.f32 %v6176, 0.0
      %6209 = vst.msk [vmem:[%s224] sm:$0xff] %vm1770, %v6177
      %6210 = vst.msk [vmem:[%s224 + $0x8] sm:$0xff] %vm1770, %v6178
      %6211 = vst.msk [vmem:[%s224 + $0x10] sm:$0xff] %vm1770, %v6179
      %6212 = vst.msk [vmem:[%s224 + $0x18] sm:$0xff] %vm1770, %v6180
      %6213 = vst.msk [vmem:[%s224 + $0x20] sm:$0xff] %vm1770, %v6181
      %6214 = vst.msk [vmem:[%s224 + $0x28] sm:$0xff] %vm1770, %v6182
      %6215 = vst.msk [vmem:[%s224 + $0x30] sm:$0xff] %vm1770, %v6183
      %6216 = vst.msk [vmem:[%s224 + $0x38] sm:$0xff] %vm1770, %v6184
      %6217 = vst.msk [vmem:[%s224 + $0x40] sm:$0xff] %vm1770, %v6185
      %6218 = vst.msk [vmem:[%s224 + $0x48] sm:$0xff] %vm1770, %v6186
      %6219 = vst.msk [vmem:[%s224 + $0x50] sm:$0xff] %vm1770, %v6187
      %6220 = vst.msk [vmem:[%s224 + $0x58] sm:$0xff] %vm1770, %v6188
      %6221 = vst.msk [vmem:[%s224 + $0x60] sm:$0xff] %vm1770, %v6189
      %6222 = vst.msk [vmem:[%s224 + $0x68] sm:$0xff] %vm1770, %v6190
      %6223 = vst.msk [vmem:[%s224 + $0x70] sm:$0xff] %vm1770, %v6191
      %6224 = vst.msk [vmem:[%s224 + $0x78] sm:$0xff] %vm1770, %v6192
      %6225 = vst.msk [vmem:[%s224 + $0x80] sm:$0xff] %vm1770, %v6193
      %6226 = vst.msk [vmem:[%s224 + $0x88] sm:$0xff] %vm1770, %v6194
      %6227 = vst.msk [vmem:[%s224 + $0x90] sm:$0xff] %vm1770, %v6195
      %6228 = vst.msk [vmem:[%s224 + $0x98] sm:$0xff] %vm1770, %v6196
      %6229 = vst.msk [vmem:[%s224 + $0xa0] sm:$0xff] %vm1770, %v6197
      %6230 = vst.msk [vmem:[%s224 + $0xa8] sm:$0xff] %vm1770, %v6198
      %6231 = vst.msk [vmem:[%s224 + $0xb0] sm:$0xff] %vm1770, %v6199
      %6232 = vst.msk [vmem:[%s224 + $0xb8] sm:$0xff] %vm1770, %v6200
      %6233 = vst.msk [vmem:[%s224 + $0xc0] sm:$0xff] %vm1770, %v6201
      %6234 = vst.msk [vmem:[%s224 + $0xc8] sm:$0xff] %vm1770, %v6202
      %6235 = vst.msk [vmem:[%s224 + $0xd0] sm:$0xff] %vm1770, %v6203
      %6236 = vst.msk [vmem:[%s224 + $0xd8] sm:$0xff] %vm1770, %v6204
      %6237 = vst.msk [vmem:[%s224 + $0xe0] sm:$0xff] %vm1770, %v6205
      %6238 = vst.msk [vmem:[%s224 + $0xe8] sm:$0xff] %vm1770, %v6206
      %6239 = vst.msk [vmem:[%s224 + $0xf0] sm:$0xff] %vm1770, %v6207
      %6240 = vst.msk [vmem:[%s224 + $0xf8] sm:$0xff] %vm1770, %v6208
      %p6241 = scmp.lt.s32.totalorder %s16, 1
      %s6242 = scalar_select %p6241, %s16, 1
      %s6243 = smul.addr %s6242, 32
      %s6244 = smul.addr %s6243, 8
      %s6245 = scalar_lea.vmem %s5, %s6244
      // Predicated region
      $region41: #{upproj_block_forward.1} parent=39 // pred_check
        %p6246 = pneg %p144
      $region42: #{upproj_block_forward.1} parent=39 // pred_check_branch
        %6248 = sbr.rel (%p6246) target = $region44
      $region43: #{upproj_block_forward.1} parent=39 // pred_region
        _
      $region44: #{upproj_block_forward.1} parent=39 // pred_fallthru
        _
    $region40: #{upproj_block_forward.1} parent=5 // pred_fallthru
      _
    %p6249 = scmp.le.s32.totalorder 2, %s11
    // Predicated region
    $region45: #{upproj_block_forward.1} parent=5 // pred_check
      %p6250 = pneg %p6249
    $region46: #{upproj_block_forward.1} parent=5 // pred_check_branch
      %6252 = sbr.rel (%p6250) target = $region48
    $region47: #{upproj_block_forward.1} parent=5 // pred_region
      %s6253 = ssub.s32 %s11, 2
      // Predicated region
      $region49: #{upproj_block_forward.1} parent=47 // pred_check
        %p6254 = pneg %p150
      $region50: #{upproj_block_forward.1} parent=47 // pred_check_branch
        %6256 = sbr.rel (%p6254) target = $region52
      $region51: #{upproj_block_forward.1} parent=47 // pred_region
        %p6257 = scmp.lt.s32.totalorder %s17, 1
        %s6258 = scalar_select %p6257, %s17, 1
        %s6259 = smul.addr %s6258, 32
        %s6260 = smul.addr %s6259, 8
        %s6261 = scalar_lea.vmem %s5, %s6260
      $region52: #{upproj_block_forward.1} parent=47 // pred_fallthru
        _
    $region48: #{upproj_block_forward.1} parent=5 // pred_fallthru
      _
  $region6: #{upproj_block_forward.1} parent=0 // loop_footer
    %s15 = sadd.s32 1, %s11
  $region7: #{upproj_block_forward.1} parent=0 // loop_footer_branch
    %10 = sbr.rel target = $region3
  $region8: #{upproj_block_forward.1} parent=0 // loop_exit
    _

</llo_original>
